<compile_context>
chip_gen: v7x
topology: tpu7x:2x2x1
jax: 0.10.0
libtpu: 0.0.40
codegen_flags: <defaults>
</compile_context>

<pallas_src>
import functools

import numpy as np
import jax
import jax.numpy as jnp
from jax import lax
from jax.experimental import pallas as pl
from jax.experimental.pallas import tpu as pltpu


_ACT_DTYPE = jnp.bfloat16


# ----------------------------------------------------------------------------
# Generation-aware VMEM budgets
# ----------------------------------------------------------------------------
def _tpu_vmem_capacity_bytes():
    try:
        return int(pltpu.get_tpu_info().vmem_capacity_bytes)
    except Exception:
        return 128 * 1024 * 1024          # v5e/v6e default


_VMEM_CAP = _tpu_vmem_capacity_bytes()
if _VMEM_CAP >= 100 * 1024 * 1024:        # 128 MiB parts: v5e / v6e
    _VMEM_LIMIT = 96 * 1024 * 1024
    _TILE_BUDGET = 40 * 1024 * 1024
else:                                     # 64 MiB per-TC parts: v7x
    _VMEM_LIMIT = 48 * 1024 * 1024
    _TILE_BUDGET = 14 * 1024 * 1024


def _round_up(v, m):
    return ((v + m - 1) // m) * m


def _conv_vmem_bytes(th, W, cin, cout):
    """Per-call VMEM footprint estimate, including 128-lane padding."""
    bf = 2
    cin_p = _round_up(cin, 128)
    cout_p = _round_up(cout, 128)
    k_p = _round_up(9 * cin, 128)
    m = th * W
    io_in = 2 * 2 * (m + 2 * W) * cin_p * bf      # 2 branches, double-buffered
    io_out = 2 * 2 * m * cout_p * bf              # 2 branches, double-buffered
    wgt = 2 * (9 * cin) * cout_p * bf + 2 * 128 * 4
    scr = 2 * (th + 2) * (W + 2) * cin_p * bf + 2 * m * k_p * bf
    live = 4 * 2 * m * cout_p * 4                 # f32 GEMM result + temporaries
    return io_in + io_out + wgt + scr + live


def _choose_tile_rows(H, W, cin, cout, B):
    # Largest row tile that divides H and fits the budget.  When B >= 2 the
    # batch grid axis already provides pipeline overlap, so TH may equal H.
    cap = H if (B >= 2 or H < 8) else max(H // 2, 1)
    for th in range(cap, 0, -1):
        if H % th:
            continue
        if _conv_vmem_bytes(th, W, cin, cout) <= _TILE_BUDGET:
            return th
    return 1


# ----------------------------------------------------------------------------
# Pallas kernel: fused 3x3 conv (pad=1) + bias (+ReLU) for BOTH branches with
# ONE shared GEMM; optional per-step L1 partial on the pre-ReLU outputs.
# ----------------------------------------------------------------------------
def _conv_pair_kernel(xm, xt, xb, ym, yt, yb, w_ref, b_ref, *rest,
                      TH, W, Cin, Cout, HT, apply_relu, with_l1):
    if with_l1:
        xo_ref, yo_ref, l1_ref, pad_x, pad_y, slab = rest
    else:
        xo_ref, yo_ref, pad_x, pad_y, slab = rest
        l1_ref = None

    h = pl.program_id(1)
    M = TH * W
    zero_col = jnp.zeros((TH + 2, 1, Cin), pad_x.dtype)
    zero_row = jnp.zeros((1, W, Cin), pad_x.dtype)

    # --- borders: zero only the 1-element frame (no full zero-fill) ---------
    pad_x[:, 0:1, :] = zero_col
    pad_x[:, W + 1:W + 2, :] = zero_col
    pad_y[:, 0:1, :] = zero_col
    pad_y[:, W + 1:W + 2, :] = zero_col

    # --- interior rows -------------------------------------------------------
    pad_x[1:TH + 1, 1:W + 1, :] = xm[0]
    pad_y[1:TH + 1, 1:W + 1, :] = ym[0]

    # --- top border / halo row ----------------------------------------------
    @pl.when(h == 0)
    def _():
        pad_x[0:1, 1:W + 1, :] = zero_row
        pad_y[0:1, 1:W + 1, :] = zero_row

    @pl.when(h > 0)
    def _():
        pad_x[0:1, 1:W + 1, :] = xt[0]
        pad_y[0:1, 1:W + 1, :] = yt[0]

    # --- bottom border / halo row -------------------------------------------
    @pl.when(h == HT - 1)
    def _():
        pad_x[TH + 1:TH + 2, 1:W + 1, :] = zero_row
        pad_y[TH + 1:TH + 2, 1:W + 1, :] = zero_row

    @pl.when(h < HT - 1)
    def _():
        pad_x[TH + 1:TH + 2, 1:W + 1, :] = xb[0]
        pad_y[TH + 1:TH + 2, 1:W + 1, :] = yb[0]

    # --- im2col slab for BOTH branches -> one MXU GEMM (K = 9*Cin) -----------
    for k in range(9):
        dy, dx = divmod(k, 3)
        slab[0:M, k * Cin:(k + 1) * Cin] = (
            pad_x[dy:dy + TH, dx:dx + W, :].reshape(M, Cin))
        slab[M:2 * M, k * Cin:(k + 1) * Cin] = (
            pad_y[dy:dy + TH, dx:dx + W, :].reshape(M, Cin))

    acc = jnp.dot(slab[...], w_ref[...], preferred_element_type=jnp.float32)
    acc = acc + b_ref[0]                        # (2*M, Cout) f32
    x_conv = acc[0:M]
    y_conv = acc[M:2 * M]

    if with_l1:
        # L1 on pre-ReLU conv output == torch feature-layer tap.  Per-step
        # partial (unique block per (b, h)) -> safe with "parallel" semantics.
        part = jnp.sum(jnp.abs(x_conv - y_conv))
        l1_ref[...] = jnp.full((1, 1, 1, 128), part, dtype=jnp.float32)

    if apply_relu:
        x_conv = jnp.maximum(x_conv, 0.0)
        y_conv = jnp.maximum(y_conv, 0.0)

    xo_ref[...] = x_conv.reshape(1, TH, W, Cout).astype(xo_ref.dtype)
    yo_ref[...] = y_conv.reshape(1, TH, W, Cout).astype(yo_ref.dtype)


def conv3x3_pair(x, y, w2, bias, *, apply_relu, with_l1, tile_rows=None):
    """x, y: (B, H, W, Cin) activations.  w2: (9*Cin, Cout) bf16 tap-major
    weights.  bias: (1, Cout) f32.  Returns (x_out, y_out[, l1_sum])."""
    B, H, W, Cin = x.shape
    Cout = w2.shape[-1]
    x = x.astype(_ACT_DTYPE)
    y = y.astype(_ACT_DTYPE)

    if tile_rows is None:
        TH = _choose_tile_rows(H, W, Cin, Cout, B)
    else:
        assert H % tile_rows == 0
        TH = tile_rows
    HT = H // TH
    grid = (B, HT)

    main_spec = pl.BlockSpec((1, TH, W, Cin), lambda b, h: (b, h, 0, 0))
    top_spec = pl.BlockSpec(
        (1, 1, W, Cin), lambda b, h: (b, jnp.maximum(h * TH - 1, 0), 0, 0))
    bot_spec = pl.BlockSpec(
        (1, 1, W, Cin), lambda b, h: (b, jnp.minimum((h + 1) * TH, H - 1), 0, 0))
    out_spec = pl.BlockSpec((1, TH, W, Cout), lambda b, h: (b, h, 0, 0))

    in_specs = [main_spec, top_spec, bot_spec,
                main_spec, top_spec, bot_spec,
                pl.BlockSpec((9 * Cin, Cout), lambda b, h: (0, 0)),
                pl.BlockSpec((1, Cout), lambda b, h: (0, 0))]

    out_shape = [jax.ShapeDtypeStruct((B, H, W, Cout), _ACT_DTYPE),
                 jax.ShapeDtypeStruct((B, H, W, Cout), _ACT_DTYPE)]
    out_specs = [out_spec, out_spec]
    if with_l1:
        out_shape.append(jax.ShapeDtypeStruct((B, HT, 1, 128), jnp.float32))
        out_specs.append(pl.BlockSpec((1, 1, 1, 128),
                                      lambda b, h: (b, h, 0, 0)))

    kernel = functools.partial(_conv_pair_kernel, TH=TH, W=W, Cin=Cin,
                               Cout=Cout, HT=HT, apply_relu=apply_relu,
                               with_l1=with_l1)

    outs = pl.pallas_call(
        kernel,
        grid=grid,
        in_specs=in_specs,
        out_specs=out_specs,
        out_shape=out_shape,
        scratch_shapes=[pltpu.VMEM((TH + 2, W + 2, Cin), _ACT_DTYPE),
                        pltpu.VMEM((TH + 2, W + 2, Cin), _ACT_DTYPE),
                        pltpu.VMEM((2 * TH * W, 9 * Cin), _ACT_DTYPE)],
        compiler_params=pltpu.CompilerParams(
            dimension_semantics=("parallel", "parallel"),
            vmem_limit_bytes=_VMEM_LIMIT),
    )(x, x, x, y, y, y, w2, bias)

    if with_l1:
        xo, yo, l1p = outs
        return xo, yo, jnp.sum(l1p[:, :, 0, 0])
    xo, yo = outs
    return xo, yo


# ----------------------------------------------------------------------------
# XLA path for the lane-sparse Cin=3 first conv (layer 0, a feature layer)
# ----------------------------------------------------------------------------
def _conv_pair_xla(x, y, w2, bias, cin, cout, apply_relu):
    w = w2.astype(jnp.float32).reshape(3, 3, cin, cout)
    b = bias.reshape(1, 1, 1, cout)

    def conv(a):
        return lax.conv_general_dilated(
            a.astype(jnp.float32), w, (1, 1), 'SAME',
            dimension_numbers=('NHWC', 'HWIO', 'NHWC')) + b

    cx, cy = conv(x), conv(y)
    l1_mean = jnp.mean(jnp.abs(cx - cy))          # pre-ReLU tap, mean = l1_loss
    if apply_relu:
        cx = jnp.maximum(cx, 0.0)
        cy = jnp.maximum(cy, 0.0)
    return cx, cy, l1_mean


# ----------------------------------------------------------------------------
# Plain-JAX glue: Lab -> sRGB, 2x2 max-pool
# ----------------------------------------------------------------------------
_XYZ_FROM_RGB = np.array([[0.412453, 0.357580, 0.180423],
                          [0.212671, 0.715160, 0.072169],
                          [0.019334, 0.119193, 0.950227]], dtype=np.float64)
_RGB_FROM_XYZ = np.linalg.inv(_XYZ_FROM_RGB)
_REF_WHITE = np.array([0.95047, 1.0, 1.08883], dtype=np.float64)


def _lab2rgb(lab):
    """CIE-Lab (D65) -> sRGB, clipped to [0, 1]. lab: (..., 3)."""
    L, a, b = lab[..., 0], lab[..., 1], lab[..., 2]
    fy = (L + 16.0) / 116.0
    fx = a / 500.0 + fy
    fz = jnp.maximum(fy - b / 200.0, 0.0)
    f = jnp.stack([fx, fy, fz], axis=-1)
    xyz = jnp.where(f > 0.2068966, f ** 3, (f - 16.0 / 116.0) / 7.787)
    xyz = xyz * jnp.asarray(_REF_WHITE, jnp.float32)
    rgb = xyz @ jnp.asarray(_RGB_FROM_XYZ.T, jnp.float32)
    rgb = jnp.where(rgb > 0.0031308,
                    1.055 * jnp.maximum(rgb, 1e-12) ** (1.0 / 2.4) - 0.055,
                    rgb * 12.92)
    return jnp.clip(rgb, 0.0, 1.0)


def lab_to_rgb(L, ab):
    # Matches Unit-GAN's lab_to_rgb: L in [-1,1] -> [0,100], ab -> *110.
    # TODO(synk): the original code round-trips through skimage.color.lab2rgb
    # on CPU/numpy; the analytic formula here may differ for out-of-gamut
    # inputs.
    L_ = (L + 1.0) * 50.0
    ab_ = ab * 110.0
    lab = jnp.concatenate([L_, ab_], axis=1)          # (B, 3, H, W)
    lab = jnp.transpose(lab, (0, 2, 3, 1))            # (B, H, W, 3)
    return _lab2rgb(lab)


def maxpool2x2(x):
    # TODO(synk): fuse into the preceding conv kernel's epilogue to save one
    # HBM round trip per pool boundary; kept in XLA for lowering robustness.
    B, H, W, C = x.shape
    return jnp.max(x.reshape(B, H // 2, 2, W // 2, 2, C), axis=(2, 4))


# ----------------------------------------------------------------------------
# VGG16 features[:29] plan + deterministic parameter init
# ----------------------------------------------------------------------------
_VGG_CFG = [64, 64, 'M', 128, 128, 'M', 256, 256, 256, 'M',
            512, 512, 512, 'M', 512, 512, 512, 'M']
FEATURE_LAYERS = [0, 5, 10, 19, 28]
FEATURE_WEIGHTS = [1.0] * 5
_LAST = max(FEATURE_LAYERS)


def build_plan():
    plan = []
    cin, idx = 3, 0
    for v in _VGG_CFG:
        if idx > _LAST:
            break
        if v == 'M':
            plan.append(('pool',))
            idx += 1
        else:
            is_feat = idx in FEATURE_LAYERS
            wgt = FEATURE_WEIGHTS[FEATURE_LAYERS.index(idx)] if is_feat else 0.0
            apply_relu = (idx + 1) <= _LAST   # is the ReLU inside features[:29]?
            plan.append(('conv', cin, v, is_feat, wgt, apply_relu))
            cin = v
            idx += 2                          # conv + relu
    return plan


PLAN = build_plan()


def init_vgg_params(key):
    # Synthetic deterministic He-normal weights standing in for pretrained
    # torchvision VGG16 (identical shapes).  To load real weights: permute
    # torch's (Cout, Cin, 3, 3) to (3, 3, Cin, Cout), reshape to (9*Cin, Cout),
    # cast to bf16.
    params = []
    for entry in PLAN:
        if entry[0] != 'conv':
            continue
        cin, cout = entry[1], entry[2]
        key, kw, kb = jax.random.split(key, 3)
        w = jax.random.normal(kw, (3, 3, cin, cout), jnp.float32)
        w = w * np.sqrt(2.0 / (9.0 * cin))
        b = 0.01 * jax.random.normal(kb, (cout,), jnp.float32)
        params.append((w.reshape(9 * cin, cout).astype(_ACT_DTYPE),
                       b.reshape(1, cout)))
    return params


# ----------------------------------------------------------------------------
# PerceptualLoss.forward
# ----------------------------------------------------------------------------
def perceptual_loss(params, pred, target):
    """pred, target: (B, 2, H, W) NCHW 'ab' chroma channels (float32)."""
    L = jnp.zeros_like(pred[:, :1, :, :])
    # (pred_lab / target_lab in the torch forward are computed but unused.)
    x = lab_to_rgb(L, pred) / 0.5 - 1.0          # (B, H, W, 3) f32
    y = lab_to_rgb(L, target) / 0.5 - 1.0

    loss = jnp.zeros((), jnp.float32)
    conv_idx = 0
    for entry in PLAN:
        if entry[0] == 'pool':
            x = maxpool2x2(x)
            y = maxpool2x2(y)
            continue
        _, cin, cout, is_feat, feat_w, apply_relu = entry
        w2, bias = params[conv_idx]
        conv_idx += 1
        if cin < 64:
            # Layer 0 (3->64): lane-sparse in Pallas -> keep it in XLA.
            x, y, l1_mean = _conv_pair_xla(x, y, w2, bias, cin, cout, apply_relu)
            if is_feat:
                loss = loss + feat_w * l1_mean
        elif is_feat:
            x, y, l1_sum = conv3x3_pair(x, y, w2, bias,
                                        apply_relu=apply_relu, with_l1=True)
            loss = loss + feat_w * (l1_sum / x.size)
        else:
            x, y = conv3x3_pair(x, y, w2, bias,
                                apply_relu=apply_relu, with_l1=False)
    return loss


# ----------------------------------------------------------------------------
# Reference (XLA) conv for the in-script sanity check
# ----------------------------------------------------------------------------
def _reference_conv_pair(x, y, w2, bias, cin, cout, apply_relu):
    w = w2.astype(jnp.float32).reshape(3, 3, cin, cout)

    def conv(a):
        out = lax.conv_general_dilated(
            a.astype(jnp.float32), w, (1, 1), 'SAME',
            dimension_numbers=('NHWC', 'HWIO', 'NHWC'))
        return out + bias.reshape(1, 1, 1, cout)

    cx, cy = conv(x), conv(y)
    l1 = jnp.sum(jnp.abs(cx - cy))
    if apply_relu:
        cx = jnp.maximum(cx, 0.0)
        cy = jnp.maximum(cy, 0.0)
    return cx, cy, l1


if __name__ == "__main__":
    # ---- sanity check: fused conv+ReLU+L1 kernel vs XLA reference ----------
    # Forced tile_rows=4 exercises the halo paths and the per-step L1 partials.
    kc = jax.random.PRNGKey(1)
    kx, ky_, kw, kb = jax.random.split(kc, 4)
    cin, cout, Hc, Wc = 64, 64, 16, 16
    xs = jax.random.normal(kx, (2, Hc, Wc, cin), jnp.float32).astype(_ACT_DTYPE)
    ys = jax.random.normal(ky_, (2, Hc, Wc, cin), jnp.float32).astype(_ACT_DTYPE)
    wt = jax.random.normal(kw, (3, 3, cin, cout), jnp.float32) * 0.05
    w2 = wt.reshape(9 * cin, cout).astype(_ACT_DTYPE)
    bs = 0.01 * jax.random.normal(kb, (1, cout), jnp.float32)

    pallas_conv = jax.jit(functools.partial(conv3x3_pair, apply_relu=True,
                                            with_l1=True, tile_rows=4))
    px, py, l1p = pallas_conv(xs, ys, w2, bs)
    rx, ry, rl1 = _reference_conv_pair(xs, ys, w2, bs, cin, cout, True)
    np.testing.assert_allclose(np.asarray(px.astype(jnp.float32)),
                               np.asarray(rx), rtol=5e-2, atol=5e-2)
    np.testing.assert_allclose(np.asarray(py.astype(jnp.float32)),
                               np.asarray(ry), rtol=5e-2, atol=5e-2)
    np.testing.assert_allclose(float(l1p), float(rl1), rtol=5e-2)

    # ---- full PerceptualLoss forward ----------------------------------------
    key = jax.random.PRNGKey(0)
    kp, k1, k2 = jax.random.split(key, 3)
    params = init_vgg_params(kp)

    B, H, W = 2, 16, 16
    pred = jax.random.uniform(k1, (B, 2, H, W), jnp.float32, -1.0, 1.0)
    target = jax.random.uniform(k2, (B, 2, H, W), jnp.float32, -1.0, 1.0)

    loss_fn = jax.jit(perceptual_loss)
    loss = jax.block_until_ready(loss_fn(params, pred, target))
    assert loss.shape == () and bool(jnp.isfinite(loss))
    print("KERNEL_OK")
</pallas_src>

<mosaic_0001>
module attributes {stable_mosaic.version = 11 : i64} {
  func.func @_conv_pair_kernel(%arg0: i32, %arg1: i32, %arg2: memref<1x4x16x64xbf16, #tpu.memory_space<vmem>>, %arg3: memref<1x1x16x64xbf16, #tpu.memory_space<vmem>>, %arg4: memref<1x1x16x64xbf16, #tpu.memory_space<vmem>>, %arg5: memref<1x4x16x64xbf16, #tpu.memory_space<vmem>>, %arg6: memref<1x1x16x64xbf16, #tpu.memory_space<vmem>>, %arg7: memref<1x1x16x64xbf16, #tpu.memory_space<vmem>>, %arg8: memref<576x64xbf16, #tpu.memory_space<vmem>>, %arg9: memref<1x64xf32, #tpu.memory_space<vmem>>, %arg10: memref<1x4x16x64xbf16, #tpu.memory_space<vmem>>, %arg11: memref<1x4x16x64xbf16, #tpu.memory_space<vmem>>, %arg12: memref<1x1x1x128xf32, #tpu.memory_space<vmem>>, %arg13: memref<6x18x64xbf16, #tpu.memory_space<vmem>>, %arg14: memref<6x18x64xbf16, #tpu.memory_space<vmem>>, %arg15: memref<128x576xbf16, #tpu.memory_space<vmem>>) attributes {dimension_semantics = [#tpu.dimension_semantics<parallel>, #tpu.dimension_semantics<parallel>], iteration_bounds = array<i64: 2, 4>, scalar_prefetch = 0 : i64, scratch_operands = 3 : i64, tpu.core_type = #tpu.core_type<tc>, window_params = [{transform_indices = @transform_0, window_bounds = array<i64: 1, 4, 16, 64>}, {transform_indices = @transform_1, window_bounds = array<i64: 1, 1, 16, 64>}, {transform_indices = @transform_2, window_bounds = array<i64: 1, 1, 16, 64>}, {transform_indices = @transform_3, window_bounds = array<i64: 1, 4, 16, 64>}, {transform_indices = @transform_4, window_bounds = array<i64: 1, 1, 16, 64>}, {transform_indices = @transform_5, window_bounds = array<i64: 1, 1, 16, 64>}, {pipeline_mode = #tpu.pipeline_mode<synchronous>, transform_indices = @transform_6, window_bounds = array<i64: 576, 64>}, {pipeline_mode = #tpu.pipeline_mode<synchronous>, transform_indices = @transform_7, window_bounds = array<i64: 1, 64>}, {transform_indices = @transform_8, window_bounds = array<i64: 1, 4, 16, 64>}, {transform_indices = @transform_9, window_bounds = array<i64: 1, 4, 16, 64>}, {transform_indices = @transform_10, window_bounds = array<i64: 1, 1, 1, 128>}]} {
    %cst = arith.constant 0.000000e+00 : bf16
    %0 = vector.broadcast %cst : bf16 to vector<6x1x64xbf16>
    %cst_0 = arith.constant 0.000000e+00 : bf16
    %1 = vector.broadcast %cst_0 : bf16 to vector<1x16x64xbf16>
    %c0 = arith.constant 0 : index
    %c0_1 = arith.constant 0 : index
    %c0_2 = arith.constant 0 : index
    %2 = vector.load %arg13[%c0, %c0_1, %c0_2] : memref<6x18x64xbf16, #tpu.memory_space<vmem>>, vector<6x1x64xbf16>
    tpu.vector_store %arg13[%c0, %c0_1, %c0_2], %0 {strides = array<i32>} : memref<6x18x64xbf16, #tpu.memory_space<vmem>>, vector<6x1x64xbf16>,
    %c0_3 = arith.constant 0 : index
    %c17 = arith.constant 17 : index
    %c0_4 = arith.constant 0 : index
    %3 = vector.load %arg13[%c0_3, %c17, %c0_4] : memref<6x18x64xbf16, #tpu.memory_space<vmem>>, vector<6x1x64xbf16>
    tpu.vector_store %arg13[%c0_3, %c17, %c0_4], %0 {strides = array<i32>} : memref<6x18x64xbf16, #tpu.memory_space<vmem>>, vector<6x1x64xbf16>,
    %c0_5 = arith.constant 0 : index
    %c0_6 = arith.constant 0 : index
    %c0_7 = arith.constant 0 : index
    %4 = vector.load %arg14[%c0_5, %c0_6, %c0_7] : memref<6x18x64xbf16, #tpu.memory_space<vmem>>, vector<6x1x64xbf16>
    tpu.vector_store %arg14[%c0_5, %c0_6, %c0_7], %0 {strides = array<i32>} : memref<6x18x64xbf16, #tpu.memory_space<vmem>>, vector<6x1x64xbf16>,
    %c0_8 = arith.constant 0 : index
    %c17_9 = arith.constant 17 : index
    %c0_10 = arith.constant 0 : index
    %5 = vector.load %arg14[%c0_8, %c17_9, %c0_10] : memref<6x18x64xbf16, #tpu.memory_space<vmem>>, vector<6x1x64xbf16>
    tpu.vector_store %arg14[%c0_8, %c17_9, %c0_10], %0 {strides = array<i32>} : memref<6x18x64xbf16, #tpu.memory_space<vmem>>, vector<6x1x64xbf16>,
    %c0_11 = arith.constant 0 : index
    %c0_12 = arith.constant 0 : index
    %c0_13 = arith.constant 0 : index
    %c0_14 = arith.constant 0 : index
    %6 = vector.load %arg2[%c0_11, %c0_12, %c0_13, %c0_14] : memref<1x4x16x64xbf16, #tpu.memory_space<vmem>>, vector<1x4x16x64xbf16>
    %7 = vector.shape_cast %6 : vector<1x4x16x64xbf16> to vector<4x16x64xbf16>
    %c1 = arith.constant 1 : index
    %c1_15 = arith.constant 1 : index
    %c0_16 = arith.constant 0 : index
    %8 = vector.load %arg13[%c1, %c1_15, %c0_16] : memref<6x18x64xbf16, #tpu.memory_space<vmem>>, vector<4x16x64xbf16>
    tpu.vector_store %arg13[%c1, %c1_15, %c0_16], %7 {strides = array<i32>} : memref<6x18x64xbf16, #tpu.memory_space<vmem>>, vector<4x16x64xbf16>,
    %c0_17 = arith.constant 0 : index
    %c0_18 = arith.constant 0 : index
    %c0_19 = arith.constant 0 : index
    %c0_20 = arith.constant 0 : index
    %9 = vector.load %arg5[%c0_17, %c0_18, %c0_19, %c0_20] : memref<1x4x16x64xbf16, #tpu.memory_space<vmem>>, vector<1x4x16x64xbf16>
    %10 = vector.shape_cast %9 : vector<1x4x16x64xbf16> to vector<4x16x64xbf16>
    %c1_21 = arith.constant 1 : index
    %c1_22 = arith.constant 1 : index
    %c0_23 = arith.constant 0 : index
    %11 = vector.load %arg14[%c1_21, %c1_22, %c0_23] : memref<6x18x64xbf16, #tpu.memory_space<vmem>>, vector<4x16x64xbf16>
    tpu.vector_store %arg14[%c1_21, %c1_22, %c0_23], %10 {strides = array<i32>} : memref<6x18x64xbf16, #tpu.memory_space<vmem>>, vector<4x16x64xbf16>,
    %c0_i32 = arith.constant 0 : i32
    %12 = arith.cmpi eq, %arg1, %c0_i32 : i32
    %13 = arith.extui %12 : i1 to i32
    %c0_i32_24 = arith.constant 0 : i32
    %14 = arith.cmpi ne, %13, %c0_i32_24 : i32
    scf.if %14 {
      %c0_133 = arith.constant 0 : index
      %c1_134 = arith.constant 1 : index
      %c0_135 = arith.constant 0 : index
      %106 = vector.load %arg13[%c0_133, %c1_134, %c0_135] : memref<6x18x64xbf16, #tpu.memory_space<vmem>>, vector<1x16x64xbf16>
      tpu.vector_store %arg13[%c0_133, %c1_134, %c0_135], %1 {strides = array<i32>} : memref<6x18x64xbf16, #tpu.memory_space<vmem>>, vector<1x16x64xbf16>,
      %c0_136 = arith.constant 0 : index
      %c1_137 = arith.constant 1 : index
      %c0_138 = arith.constant 0 : index
      %107 = vector.load %arg14[%c0_136, %c1_137, %c0_138] : memref<6x18x64xbf16, #tpu.memory_space<vmem>>, vector<1x16x64xbf16>
      tpu.vector_store %arg14[%c0_136, %c1_137, %c0_138], %1 {strides = array<i32>} : memref<6x18x64xbf16, #tpu.memory_space<vmem>>, vector<1x16x64xbf16>,
    } else {
    }
    %c0_i32_25 = arith.constant 0 : i32
    %15 = arith.cmpi sgt, %arg1, %c0_i32_25 : i32
    %16 = arith.extui %15 : i1 to i32
    %c0_i32_26 = arith.constant 0 : i32
    %17 = arith.cmpi ne, %16, %c0_i32_26 : i32
    scf.if %17 {
      %c0_133 = arith.constant 0 : index
      %c0_134 = arith.constant 0 : index
      %c0_135 = arith.constant 0 : index
      %c0_136 = arith.constant 0 : index
      %106 = vector.load %arg3[%c0_133, %c0_134, %c0_135, %c0_136] : memref<1x1x16x64xbf16, #tpu.memory_space<vmem>>, vector<1x1x16x64xbf16>
      %107 = vector.shape_cast %106 : vector<1x1x16x64xbf16> to vector<1x16x64xbf16>
      %c0_137 = arith.constant 0 : index
      %c1_138 = arith.constant 1 : index
      %c0_139 = arith.constant 0 : index
      %108 = vector.load %arg13[%c0_137, %c1_138, %c0_139] : memref<6x18x64xbf16, #tpu.memory_space<vmem>>, vector<1x16x64xbf16>
      tpu.vector_store %arg13[%c0_137, %c1_138, %c0_139], %107 {strides = array<i32>} : memref<6x18x64xbf16, #tpu.memory_space<vmem>>, vector<1x16x64xbf16>,
      %c0_140 = arith.constant 0 : index
      %c0_141 = arith.constant 0 : index
      %c0_142 = arith.constant 0 : index
      %c0_143 = arith.constant 0 : index
      %109 = vector.load %arg6[%c0_140, %c0_141, %c0_142, %c0_143] : memref<1x1x16x64xbf16, #tpu.memory_space<vmem>>, vector<1x1x16x64xbf16>
      %110 = vector.shape_cast %109 : vector<1x1x16x64xbf16> to vector<1x16x64xbf16>
      %c0_144 = arith.constant 0 : index
      %c1_145 = arith.constant 1 : index
      %c0_146 = arith.constant 0 : index
      %111 = vector.load %arg14[%c0_144, %c1_145, %c0_146] : memref<6x18x64xbf16, #tpu.memory_space<vmem>>, vector<1x16x64xbf16>
      tpu.vector_store %arg14[%c0_144, %c1_145, %c0_146], %110 {strides = array<i32>} : memref<6x18x64xbf16, #tpu.memory_space<vmem>>, vector<1x16x64xbf16>,
    } else {
    }
    %c3_i32 = arith.constant 3 : i32
    %18 = arith.cmpi eq, %arg1, %c3_i32 : i32
    %19 = arith.extui %18 : i1 to i32
    %c0_i32_27 = arith.constant 0 : i32
    %20 = arith.cmpi ne, %19, %c0_i32_27 : i32
    scf.if %20 {
      %c5 = arith.constant 5 : index
      %c1_133 = arith.constant 1 : index
      %c0_134 = arith.constant 0 : index
      %106 = vector.load %arg13[%c5, %c1_133, %c0_134] : memref<6x18x64xbf16, #tpu.memory_space<vmem>>, vector<1x16x64xbf16>
      tpu.vector_store %arg13[%c5, %c1_133, %c0_134], %1 {strides = array<i32>} : memref<6x18x64xbf16, #tpu.memory_space<vmem>>, vector<1x16x64xbf16>,
      %c5_135 = arith.constant 5 : index
      %c1_136 = arith.constant 1 : index
      %c0_137 = arith.constant 0 : index
      %107 = vector.load %arg14[%c5_135, %c1_136, %c0_137] : memref<6x18x64xbf16, #tpu.memory_space<vmem>>, vector<1x16x64xbf16>
      tpu.vector_store %arg14[%c5_135, %c1_136, %c0_137], %1 {strides = array<i32>} : memref<6x18x64xbf16, #tpu.memory_space<vmem>>, vector<1x16x64xbf16>,
    } else {
    }
    %c3_i32_28 = arith.constant 3 : i32
    %21 = arith.cmpi slt, %arg1, %c3_i32_28 : i32
    %22 = arith.extui %21 : i1 to i32
    %c0_i32_29 = arith.constant 0 : i32
    %23 = arith.cmpi ne, %22, %c0_i32_29 : i32
    scf.if %23 {
      %c0_133 = arith.constant 0 : index
      %c0_134 = arith.constant 0 : index
      %c0_135 = arith.constant 0 : index
      %c0_136 = arith.constant 0 : index
      %106 = vector.load %arg4[%c0_133, %c0_134, %c0_135, %c0_136] : memref<1x1x16x64xbf16, #tpu.memory_space<vmem>>, vector<1x1x16x64xbf16>
      %107 = vector.shape_cast %106 : vector<1x1x16x64xbf16> to vector<1x16x64xbf16>
      %c5 = arith.constant 5 : index
      %c1_137 = arith.constant 1 : index
      %c0_138 = arith.constant 0 : index
      %108 = vector.load %arg13[%c5, %c1_137, %c0_138] : memref<6x18x64xbf16, #tpu.memory_space<vmem>>, vector<1x16x64xbf16>
      tpu.vector_store %arg13[%c5, %c1_137, %c0_138], %107 {strides = array<i32>} : memref<6x18x64xbf16, #tpu.memory_space<vmem>>, vector<1x16x64xbf16>,
      %c0_139 = arith.constant 0 : index
      %c0_140 = arith.constant 0 : index
      %c0_141 = arith.constant 0 : index
      %c0_142 = arith.constant 0 : index
      %109 = vector.load %arg7[%c0_139, %c0_140, %c0_141, %c0_142] : memref<1x1x16x64xbf16, #tpu.memory_space<vmem>>, vector<1x1x16x64xbf16>
      %110 = vector.shape_cast %109 : vector<1x1x16x64xbf16> to vector<1x16x64xbf16>
      %c5_143 = arith.constant 5 : index
      %c1_144 = arith.constant 1 : index
      %c0_145 = arith.constant 0 : index
      %111 = vector.load %arg14[%c5_143, %c1_144, %c0_145] : memref<6x18x64xbf16, #tpu.memory_space<vmem>>, vector<1x16x64xbf16>
      tpu.vector_store %arg14[%c5_143, %c1_144, %c0_145], %110 {strides = array<i32>} : memref<6x18x64xbf16, #tpu.memory_space<vmem>>, vector<1x16x64xbf16>,
    } else {
    }
    %c0_30 = arith.constant 0 : index
    %c0_31 = arith.constant 0 : index
    %c0_32 = arith.constant 0 : index
    %24 = vector.load %arg13[%c0_30, %c0_31, %c0_32] : memref<6x18x64xbf16, #tpu.memory_space<vmem>>, vector<4x16x64xbf16>
    %25 = vector.shape_cast %24 : vector<4x16x64xbf16> to vector<64x64xbf16>
    %c0_33 = arith.constant 0 : index
    %c0_34 = arith.constant 0 : index
    %26 = vector.load %arg15[%c0_33, %c0_34] : memref<128x576xbf16, #tpu.memory_space<vmem>>, vector<64x64xbf16>
    tpu.vector_store %arg15[%c0_33, %c0_34], %25 {strides = array<i32>} : memref<128x576xbf16, #tpu.memory_space<vmem>>, vector<64x64xbf16>,
    %c0_35 = arith.constant 0 : index
    %c0_36 = arith.constant 0 : index
    %c0_37 = arith.constant 0 : index
    %27 = vector.load %arg14[%c0_35, %c0_36, %c0_37] : memref<6x18x64xbf16, #tpu.memory_space<vmem>>, vector<4x16x64xbf16>
    %28 = vector.shape_cast %27 : vector<4x16x64xbf16> to vector<64x64xbf16>
    %c64 = arith.constant 64 : index
    %c0_38 = arith.constant 0 : index
    %29 = vector.load %arg15[%c64, %c0_38] : memref<128x576xbf16, #tpu.memory_space<vmem>>, vector<64x64xbf16>
    tpu.vector_store %arg15[%c64, %c0_38], %28 {strides = array<i32>} : memref<128x576xbf16, #tpu.memory_space<vmem>>, vector<64x64xbf16>,
    %c0_39 = arith.constant 0 : index
    %c1_40 = arith.constant 1 : index
    %c0_41 = arith.constant 0 : index
    %30 = vector.load %arg13[%c0_39, %c1_40, %c0_41] : memref<6x18x64xbf16, #tpu.memory_space<vmem>>, vector<4x16x64xbf16>
    %31 = vector.shape_cast %30 : vector<4x16x64xbf16> to vector<64x64xbf16>
    %c0_42 = arith.constant 0 : index
    %c64_43 = arith.constant 64 : index
    %32 = vector.load %arg15[%c0_42, %c64_43] : memref<128x576xbf16, #tpu.memory_space<vmem>>, vector<64x64xbf16>
    tpu.vector_store %arg15[%c0_42, %c64_43], %31 {strides = array<i32>} : memref<128x576xbf16, #tpu.memory_space<vmem>>, vector<64x64xbf16>,
    %c0_44 = arith.constant 0 : index
    %c1_45 = arith.constant 1 : index
    %c0_46 = arith.constant 0 : index
    %33 = vector.load %arg14[%c0_44, %c1_45, %c0_46] : memref<6x18x64xbf16, #tpu.memory_space<vmem>>, vector<4x16x64xbf16>
    %34 = vector.shape_cast %33 : vector<4x16x64xbf16> to vector<64x64xbf16>
    %c64_47 = arith.constant 64 : index
    %c64_48 = arith.constant 64 : index
    %35 = vector.load %arg15[%c64_47, %c64_48] : memref<128x576xbf16, #tpu.memory_space<vmem>>, vector<64x64xbf16>
    tpu.vector_store %arg15[%c64_47, %c64_48], %34 {strides = array<i32>} : memref<128x576xbf16, #tpu.memory_space<vmem>>, vector<64x64xbf16>,
    %c0_49 = arith.constant 0 : index
    %c2 = arith.constant 2 : index
    %c0_50 = arith.constant 0 : index
    %36 = vector.load %arg13[%c0_49, %c2, %c0_50] : memref<6x18x64xbf16, #tpu.memory_space<vmem>>, vector<4x16x64xbf16>
    %37 = vector.shape_cast %36 : vector<4x16x64xbf16> to vector<64x64xbf16>
    %c0_51 = arith.constant 0 : index
    %c128 = arith.constant 128 : index
    %38 = vector.load %arg15[%c0_51, %c128] : memref<128x576xbf16, #tpu.memory_space<vmem>>, vector<64x64xbf16>
    tpu.vector_store %arg15[%c0_51, %c128], %37 {strides = array<i32>} : memref<128x576xbf16, #tpu.memory_space<vmem>>, vector<64x64xbf16>,
    %c0_52 = arith.constant 0 : index
    %c2_53 = arith.constant 2 : index
    %c0_54 = arith.constant 0 : index
    %39 = vector.load %arg14[%c0_52, %c2_53, %c0_54] : memref<6x18x64xbf16, #tpu.memory_space<vmem>>, vector<4x16x64xbf16>
    %40 = vector.shape_cast %39 : vector<4x16x64xbf16> to vector<64x64xbf16>
    %c64_55 = arith.constant 64 : index
    %c128_56 = arith.constant 128 : index
    %41 = vector.load %arg15[%c64_55, %c128_56] : memref<128x576xbf16, #tpu.memory_space<vmem>>, vector<64x64xbf16>
    tpu.vector_store %arg15[%c64_55, %c128_56], %40 {strides = array<i32>} : memref<128x576xbf16, #tpu.memory_space<vmem>>, vector<64x64xbf16>,
    %c1_57 = arith.constant 1 : index
    %c0_58 = arith.constant 0 : index
    %c0_59 = arith.constant 0 : index
    %42 = vector.load %arg13[%c1_57, %c0_58, %c0_59] : memref<6x18x64xbf16, #tpu.memory_space<vmem>>, vector<4x16x64xbf16>
    %43 = vector.shape_cast %42 : vector<4x16x64xbf16> to vector<64x64xbf16>
    %c0_60 = arith.constant 0 : index
    %c192 = arith.constant 192 : index
    %44 = vector.load %arg15[%c0_60, %c192] : memref<128x576xbf16, #tpu.memory_space<vmem>>, vector<64x64xbf16>
    tpu.vector_store %arg15[%c0_60, %c192], %43 {strides = array<i32>} : memref<128x576xbf16, #tpu.memory_space<vmem>>, vector<64x64xbf16>,
    %c1_61 = arith.constant 1 : index
    %c0_62 = arith.constant 0 : index
    %c0_63 = arith.constant 0 : index
    %45 = vector.load %arg14[%c1_61, %c0_62, %c0_63] : memref<6x18x64xbf16, #tpu.memory_space<vmem>>, vector<4x16x64xbf16>
    %46 = vector.shape_cast %45 : vector<4x16x64xbf16> to vector<64x64xbf16>
    %c64_64 = arith.constant 64 : index
    %c192_65 = arith.constant 192 : index
    %47 = vector.load %arg15[%c64_64, %c192_65] : memref<128x576xbf16, #tpu.memory_space<vmem>>, vector<64x64xbf16>
    tpu.vector_store %arg15[%c64_64, %c192_65], %46 {strides = array<i32>} : memref<128x576xbf16, #tpu.memory_space<vmem>>, vector<64x64xbf16>,
    %c1_66 = arith.constant 1 : index
    %c1_67 = arith.constant 1 : index
    %c0_68 = arith.constant 0 : index
    %48 = vector.load %arg13[%c1_66, %c1_67, %c0_68] : memref<6x18x64xbf16, #tpu.memory_space<vmem>>, vector<4x16x64xbf16>
    %49 = vector.shape_cast %48 : vector<4x16x64xbf16> to vector<64x64xbf16>
    %c0_69 = arith.constant 0 : index
    %c256 = arith.constant 256 : index
    %50 = vector.load %arg15[%c0_69, %c256] : memref<128x576xbf16, #tpu.memory_space<vmem>>, vector<64x64xbf16>
    tpu.vector_store %arg15[%c0_69, %c256], %49 {strides = array<i32>} : memref<128x576xbf16, #tpu.memory_space<vmem>>, vector<64x64xbf16>,
    %c1_70 = arith.constant 1 : index
    %c1_71 = arith.constant 1 : index
    %c0_72 = arith.constant 0 : index
    %51 = vector.load %arg14[%c1_70, %c1_71, %c0_72] : memref<6x18x64xbf16, #tpu.memory_space<vmem>>, vector<4x16x64xbf16>
    %52 = vector.shape_cast %51 : vector<4x16x64xbf16> to vector<64x64xbf16>
    %c64_73 = arith.constant 64 : index
    %c256_74 = arith.constant 256 : index
    %53 = vector.load %arg15[%c64_73, %c256_74] : memref<128x576xbf16, #tpu.memory_space<vmem>>, vector<64x64xbf16>
    tpu.vector_store %arg15[%c64_73, %c256_74], %52 {strides = array<i32>} : memref<128x576xbf16, #tpu.memory_space<vmem>>, vector<64x64xbf16>,
    %c1_75 = arith.constant 1 : index
    %c2_76 = arith.constant 2 : index
    %c0_77 = arith.constant 0 : index
    %54 = vector.load %arg13[%c1_75, %c2_76, %c0_77] : memref<6x18x64xbf16, #tpu.memory_space<vmem>>, vector<4x16x64xbf16>
    %55 = vector.shape_cast %54 : vector<4x16x64xbf16> to vector<64x64xbf16>
    %c0_78 = arith.constant 0 : index
    %c320 = arith.constant 320 : index
    %56 = vector.load %arg15[%c0_78, %c320] : memref<128x576xbf16, #tpu.memory_space<vmem>>, vector<64x64xbf16>
    tpu.vector_store %arg15[%c0_78, %c320], %55 {strides = array<i32>} : memref<128x576xbf16, #tpu.memory_space<vmem>>, vector<64x64xbf16>,
    %c1_79 = arith.constant 1 : index
    %c2_80 = arith.constant 2 : index
    %c0_81 = arith.constant 0 : index
    %57 = vector.load %arg14[%c1_79, %c2_80, %c0_81] : memref<6x18x64xbf16, #tpu.memory_space<vmem>>, vector<4x16x64xbf16>
    %58 = vector.shape_cast %57 : vector<4x16x64xbf16> to vector<64x64xbf16>
    %c64_82 = arith.constant 64 : index
    %c320_83 = arith.constant 320 : index
    %59 = vector.load %arg15[%c64_82, %c320_83] : memref<128x576xbf16, #tpu.memory_space<vmem>>, vector<64x64xbf16>
    tpu.vector_store %arg15[%c64_82, %c320_83], %58 {strides = array<i32>} : memref<128x576xbf16, #tpu.memory_space<vmem>>, vector<64x64xbf16>,
    %c2_84 = arith.constant 2 : index
    %c0_85 = arith.constant 0 : index
    %c0_86 = arith.constant 0 : index
    %60 = vector.load %arg13[%c2_84, %c0_85, %c0_86] : memref<6x18x64xbf16, #tpu.memory_space<vmem>>, vector<4x16x64xbf16>
    %61 = vector.shape_cast %60 : vector<4x16x64xbf16> to vector<64x64xbf16>
    %c0_87 = arith.constant 0 : index
    %c384 = arith.constant 384 : index
    %62 = vector.load %arg15[%c0_87, %c384] : memref<128x576xbf16, #tpu.memory_space<vmem>>, vector<64x64xbf16>
    tpu.vector_store %arg15[%c0_87, %c384], %61 {strides = array<i32>} : memref<128x576xbf16, #tpu.memory_space<vmem>>, vector<64x64xbf16>,
    %c2_88 = arith.constant 2 : index
    %c0_89 = arith.constant 0 : index
    %c0_90 = arith.constant 0 : index
    %63 = vector.load %arg14[%c2_88, %c0_89, %c0_90] : memref<6x18x64xbf16, #tpu.memory_space<vmem>>, vector<4x16x64xbf16>
    %64 = vector.shape_cast %63 : vector<4x16x64xbf16> to vector<64x64xbf16>
    %c64_91 = arith.constant 64 : index
    %c384_92 = arith.constant 384 : index
    %65 = vector.load %arg15[%c64_91, %c384_92] : memref<128x576xbf16, #tpu.memory_space<vmem>>, vector<64x64xbf16>
    tpu.vector_store %arg15[%c64_91, %c384_92], %64 {strides = array<i32>} : memref<128x576xbf16, #tpu.memory_space<vmem>>, vector<64x64xbf16>,
    %c2_93 = arith.constant 2 : index
    %c1_94 = arith.constant 1 : index
    %c0_95 = arith.constant 0 : index
    %66 = vector.load %arg13[%c2_93, %c1_94, %c0_95] : memref<6x18x64xbf16, #tpu.memory_space<vmem>>, vector<4x16x64xbf16>
    %67 = vector.shape_cast %66 : vector<4x16x64xbf16> to vector<64x64xbf16>
    %c0_96 = arith.constant 0 : index
    %c448 = arith.constant 448 : index
    %68 = vector.load %arg15[%c0_96, %c448] : memref<128x576xbf16, #tpu.memory_space<vmem>>, vector<64x64xbf16>
    tpu.vector_store %arg15[%c0_96, %c448], %67 {strides = array<i32>} : memref<128x576xbf16, #tpu.memory_space<vmem>>, vector<64x64xbf16>,
    %c2_97 = arith.constant 2 : index
    %c1_98 = arith.constant 1 : index
    %c0_99 = arith.constant 0 : index
    %69 = vector.load %arg14[%c2_97, %c1_98, %c0_99] : memref<6x18x64xbf16, #tpu.memory_space<vmem>>, vector<4x16x64xbf16>
    %70 = vector.shape_cast %69 : vector<4x16x64xbf16> to vector<64x64xbf16>
    %c64_100 = arith.constant 64 : index
    %c448_101 = arith.constant 448 : index
    %71 = vector.load %arg15[%c64_100, %c448_101] : memref<128x576xbf16, #tpu.memory_space<vmem>>, vector<64x64xbf16>
    tpu.vector_store %arg15[%c64_100, %c448_101], %70 {strides = array<i32>} : memref<128x576xbf16, #tpu.memory_space<vmem>>, vector<64x64xbf16>,
    %c2_102 = arith.constant 2 : index
    %c2_103 = arith.constant 2 : index
    %c0_104 = arith.constant 0 : index
    %72 = vector.load %arg13[%c2_102, %c2_103, %c0_104] : memref<6x18x64xbf16, #tpu.memory_space<vmem>>, vector<4x16x64xbf16>
    %73 = vector.shape_cast %72 : vector<4x16x64xbf16> to vector<64x64xbf16>
    %c0_105 = arith.constant 0 : index
    %c512 = arith.constant 512 : index
    %74 = vector.load %arg15[%c0_105, %c512] : memref<128x576xbf16, #tpu.memory_space<vmem>>, vector<64x64xbf16>
    tpu.vector_store %arg15[%c0_105, %c512], %73 {strides = array<i32>} : memref<128x576xbf16, #tpu.memory_space<vmem>>, vector<64x64xbf16>,
    %c2_106 = arith.constant 2 : index
    %c2_107 = arith.constant 2 : index
    %c0_108 = arith.constant 0 : index
    %75 = vector.load %arg14[%c2_106, %c2_107, %c0_108] : memref<6x18x64xbf16, #tpu.memory_space<vmem>>, vector<4x16x64xbf16>
    %76 = vector.shape_cast %75 : vector<4x16x64xbf16> to vector<64x64xbf16>
    %c64_109 = arith.constant 64 : index
    %c512_110 = arith.constant 512 : index
    %77 = vector.load %arg15[%c64_109, %c512_110] : memref<128x576xbf16, #tpu.memory_space<vmem>>, vector<64x64xbf16>
    tpu.vector_store %arg15[%c64_109, %c512_110], %76 {strides = array<i32>} : memref<128x576xbf16, #tpu.memory_space<vmem>>, vector<64x64xbf16>,
    %c0_111 = arith.constant 0 : index
    %c0_112 = arith.constant 0 : index
    %78 = vector.load %arg15[%c0_111, %c0_112] : memref<128x576xbf16, #tpu.memory_space<vmem>>, vector<128x576xbf16>
    %c0_113 = arith.constant 0 : index
    %c0_114 = arith.constant 0 : index
    %79 = vector.load %arg8[%c0_113, %c0_114] : memref<576x64xbf16, #tpu.memory_space<vmem>>, vector<576x64xbf16>
    %cst_115 = arith.constant dense<0.000000e+00> : vector<128x64xf32>
    %80 = tpu.matmul %78, %79, %cst_115 {dimension_numbers = #tpu.dot_dimension_numbers<[1], [0], [0], [1], [0, 0, 1, 1], [], []>} : vector<128x576xbf16>, vector<576x64xbf16>, vector<128x64xf32> -> vector<128x64xf32>
    %c0_116 = arith.constant 0 : index
    %c0_117 = arith.constant 0 : index
    %81 = vector.load %arg9[%c0_116, %c0_117] : memref<1x64xf32, #tpu.memory_space<vmem>>, vector<1x64xf32>
    %82 = vector.shape_cast %81 : vector<1x64xf32> to vector<64xf32>
    %83 = vector.shape_cast %82 : vector<64xf32> to vector<1x64xf32>
    %84 = vector.broadcast %83 : vector<1x64xf32> to vector<128x64xf32>
    %85 = arith.addf %80, %84 : vector<128x64xf32>
    %86 = vector.extract_strided_slice %85 {offsets = [0, 0], sizes = [64, 64], strides = [1, 1]} : vector<128x64xf32> to vector<64x64xf32>
    %87 = vector.extract_strided_slice %85 {offsets = [64, 0], sizes = [64, 64], strides = [1, 1]} : vector<128x64xf32> to vector<64x64xf32>
    %88 = arith.subf %86, %87 : vector<64x64xf32>
    %89 = math.absf %88 : vector<64x64xf32>
    %90 = vector.shape_cast %89 : vector<64x64xf32> to vector<1x64x64xf32>
    %cst_118 = arith.constant dense<0.000000e+00> : vector<1xf32>
    %91 = vector.multi_reduction <add>, %90, %cst_118 [1, 2] : vector<1x64x64xf32> to vector<1xf32>
    %92 = vector.shape_cast %91 : vector<1xf32> to vector<1x1x1xf32>
    %93 = vector.extract %92[0, 0, 0] : f32 from vector<1x1x1xf32>
    %94 = vector.broadcast %93 : f32 to vector<1x1x1x128xf32>
    %c0_119 = arith.constant 0 : index
    %c0_120 = arith.constant 0 : index
    %c0_121 = arith.constant 0 : index
    %c0_122 = arith.constant 0 : index
    %95 = vector.load %arg12[%c0_119, %c0_120, %c0_121, %c0_122] : memref<1x1x1x128xf32, #tpu.memory_space<vmem>>, vector<1x1x1x128xf32>
    tpu.vector_store %arg12[%c0_119, %c0_120, %c0_121, %c0_122], %94 {strides = array<i32>} : memref<1x1x1x128xf32, #tpu.memory_space<vmem>>, vector<1x1x1x128xf32>,
    %cst_123 = arith.constant 0.000000e+00 : f32
    %96 = vector.broadcast %cst_123 : f32 to vector<64x64xf32>
    %97 = arith.maximumf %86, %96 : vector<64x64xf32>
    %cst_124 = arith.constant 0.000000e+00 : f32
    %98 = vector.broadcast %cst_124 : f32 to vector<64x64xf32>
    %99 = arith.maximumf %87, %98 : vector<64x64xf32>
    %100 = vector.shape_cast %97 : vector<64x64xf32> to vector<1x4x16x64xf32>
    %101 = arith.truncf %100 : vector<1x4x16x64xf32> to vector<1x4x16x64xbf16>
    %c0_125 = arith.constant 0 : index
    %c0_126 = arith.constant 0 : index
    %c0_127 = arith.constant 0 : index
    %c0_128 = arith.constant 0 : index
    %102 = vector.load %arg10[%c0_125, %c0_126, %c0_127, %c0_128] : memref<1x4x16x64xbf16, #tpu.memory_space<vmem>>, vector<1x4x16x64xbf16>
    tpu.vector_store %arg10[%c0_125, %c0_126, %c0_127, %c0_128], %101 {strides = array<i32>} : memref<1x4x16x64xbf16, #tpu.memory_space<vmem>>, vector<1x4x16x64xbf16>,
    %103 = vector.shape_cast %99 : vector<64x64xf32> to vector<1x4x16x64xf32>
    %104 = arith.truncf %103 : vector<1x4x16x64xf32> to vector<1x4x16x64xbf16>
    %c0_129 = arith.constant 0 : index
    %c0_130 = arith.constant 0 : index
    %c0_131 = arith.constant 0 : index
    %c0_132 = arith.constant 0 : index
    %105 = vector.load %arg11[%c0_129, %c0_130, %c0_131, %c0_132] : memref<1x4x16x64xbf16, #tpu.memory_space<vmem>>, vector<1x4x16x64xbf16>
    tpu.vector_store %arg11[%c0_129, %c0_130, %c0_131, %c0_132], %104 {strides = array<i32>} : memref<1x4x16x64xbf16, #tpu.memory_space<vmem>>, vector<1x4x16x64xbf16>,
    return
  }
  func.func @transform_0(%arg0: i32, %arg1: i32) -> (i32, i32, i32, i32) {
    %c0_i32 = arith.constant 0 : i32
    %c0_i32_0 = arith.constant 0 : i32
    %c0_i32_1 = arith.constant 0 : i32
    return %arg0, %arg1, %c0_i32, %c0_i32_0 : i32, i32, i32, i32
  }
  func.func @transform_1(%arg0: i32, %arg1: i32) -> (i32, i32, i32, i32) {
    %c4_i32 = arith.constant 4 : i32
    %0 = arith.muli %arg1, %c4_i32 : i32
    %c1_i32 = arith.constant 1 : i32
    %1 = arith.subi %0, %c1_i32 : i32
    %c0_i32 = arith.constant 0 : i32
    %2 = arith.maxsi %1, %c0_i32 : i32
    %c0_i32_0 = arith.constant 0 : i32
    %c0_i32_1 = arith.constant 0 : i32
    %c0_i32_2 = arith.constant 0 : i32
    return %arg0, %2, %c0_i32_0, %c0_i32_1 : i32, i32, i32, i32
  }
  func.func @transform_2(%arg0: i32, %arg1: i32) -> (i32, i32, i32, i32) {
    %c1_i32 = arith.constant 1 : i32
    %0 = arith.addi %arg1, %c1_i32 : i32
    %c4_i32 = arith.constant 4 : i32
    %1 = arith.muli %0, %c4_i32 : i32
    %c15_i32 = arith.constant 15 : i32
    %2 = arith.minsi %1, %c15_i32 : i32
    %c0_i32 = arith.constant 0 : i32
    %c0_i32_0 = arith.constant 0 : i32
    %c0_i32_1 = arith.constant 0 : i32
    return %arg0, %2, %c0_i32, %c0_i32_0 : i32, i32, i32, i32
  }
  func.func @transform_3(%arg0: i32, %arg1: i32) -> (i32, i32, i32, i32) {
    %c0_i32 = arith.constant 0 : i32
    %c0_i32_0 = arith.constant 0 : i32
    %c0_i32_1 = arith.constant 0 : i32
    return %arg0, %arg1, %c0_i32, %c0_i32_0 : i32, i32, i32, i32
  }
  func.func @transform_4(%arg0: i32, %arg1: i32) -> (i32, i32, i32, i32) {
    %c4_i32 = arith.constant 4 : i32
    %0 = arith.muli %arg1, %c4_i32 : i32
    %c1_i32 = arith.constant 1 : i32
    %1 = arith.subi %0, %c1_i32 : i32
    %c0_i32 = arith.constant 0 : i32
    %2 = arith.maxsi %1, %c0_i32 : i32
    %c0_i32_0 = arith.constant 0 : i32
    %c0_i32_1 = arith.constant 0 : i32
    %c0_i32_2 = arith.constant 0 : i32
    return %arg0, %2, %c0_i32_0, %c0_i32_1 : i32, i32, i32, i32
  }
  func.func @transform_5(%arg0: i32, %arg1: i32) -> (i32, i32, i32, i32) {
    %c1_i32 = arith.constant 1 : i32
    %0 = arith.addi %arg1, %c1_i32 : i32
    %c4_i32 = arith.constant 4 : i32
    %1 = arith.muli %0, %c4_i32 : i32
    %c15_i32 = arith.constant 15 : i32
    %2 = arith.minsi %1, %c15_i32 : i32
    %c0_i32 = arith.constant 0 : i32
    %c0_i32_0 = arith.constant 0 : i32
    %c0_i32_1 = arith.constant 0 : i32
    return %arg0, %2, %c0_i32, %c0_i32_0 : i32, i32, i32, i32
  }
  func.func @transform_6(%arg0: i32, %arg1: i32) -> (i32, i32) {
    %c0_i32 = arith.constant 0 : i32
    %c0_i32_0 = arith.constant 0 : i32
    %c0_i32_1 = arith.constant 0 : i32
    return %c0_i32, %c0_i32_0 : i32, i32
  }
  func.func @transform_7(%arg0: i32, %arg1: i32) -> (i32, i32) {
    %c0_i32 = arith.constant 0 : i32
    %c0_i32_0 = arith.constant 0 : i32
    %c0_i32_1 = arith.constant 0 : i32
    return %c0_i32, %c0_i32_0 : i32, i32
  }
  func.func @transform_8(%arg0: i32, %arg1: i32) -> (i32, i32, i32, i32) {
    %c0_i32 = arith.constant 0 : i32
    %c0_i32_0 = arith.constant 0 : i32
    %c0_i32_1 = arith.constant 0 : i32
    return %arg0, %arg1, %c0_i32, %c0_i32_0 : i32, i32, i32, i32
  }
  func.func @transform_9(%arg0: i32, %arg1: i32) -> (i32, i32, i32, i32) {
    %c0_i32 = arith.constant 0 : i32
    %c0_i32_0 = arith.constant 0 : i32
    %c0_i32_1 = arith.constant 0 : i32
    return %arg0, %arg1, %c0_i32, %c0_i32_0 : i32, i32, i32, i32
  }
  func.func @transform_10(%arg0: i32, %arg1: i32) -> (i32, i32, i32, i32) {
    %c0_i32 = arith.constant 0 : i32
    %c0_i32_0 = arith.constant 0 : i32
    %c0_i32_1 = arith.constant 0 : i32
    return %arg0, %arg1, %c0_i32, %c0_i32_0 : i32, i32, i32, i32
  }
}

</mosaic_0001>

<llo_original>
// kernel: conv3x3_pair.1
$region0: #{conv3x3_pair.1}
  #allocation0 [shape = 'u32[]', space=smem, size = 0x4, offset = 0x4, fixed_abs, tag = 'smem constant byte address 0x4 - core index']
  #allocation1 [shape = 'u32[144,128]{1,0:T(1,128)}', space=vmem, size = 0x12000, scoped, tag = 'internal scratch']
  #allocation2 [shape = 'bf16[6,18,64]{2,1,0:T(8,128)(2,1)}', space=vmem, size = 0x9000, scoped, tag = 'scratch operand']
  #allocation3 [shape = 'bf16[6,18,64]{2,1,0:T(8,128)(2,1)}', space=vmem, size = 0x9000, scoped, tag = 'scratch operand']
  #allocation4 [shape = 'bf16[128,576]{1,0:T(16,128)(2,1)}', space=vmem, size = 0x28000, scoped, tag = 'scratch operand']
  %s0 = inlined_call_operand.hbm [shape: bf16[2,16,16,64], index: 0, kind: input, shape index: {}, may-alias: {0,1,2}]
  %s1 = inlined_call_operand.hbm [shape: bf16[2,16,16,64], index: 1, kind: input, shape index: {}, may-alias: {0,1,2}]
  %s2 = inlined_call_operand.hbm [shape: bf16[2,16,16,64], index: 2, kind: input, shape index: {}, may-alias: {0,1,2}]
  %s3 = inlined_call_operand.hbm [shape: bf16[2,16,16,64], index: 3, kind: input, shape index: {}, may-alias: {3,4,5}]
  %s4 = inlined_call_operand.hbm [shape: bf16[2,16,16,64], index: 4, kind: input, shape index: {}, may-alias: {3,4,5}]
  %s5 = inlined_call_operand.hbm [shape: bf16[2,16,16,64], index: 5, kind: input, shape index: {}, may-alias: {3,4,5}]
  %s6 = inlined_call_operand.hbm [shape: bf16[576,64], index: 6, kind: input, shape index: {}]
  %s7 = inlined_call_operand.hbm [shape: f32[1,64], index: 7, kind: input, shape index: {}]
  %s8 = inlined_call_operand.hbm [shape: bf16[2,16,16,64], index: 8, kind: output, shape index: {0}]
  %s9 = inlined_call_operand.hbm [shape: bf16[2,16,16,64], index: 9, kind: output, shape index: {1}]
  %s10 = inlined_call_operand.hbm [shape: f32[2,4,1,128], index: 10, kind: output, shape index: {2}]
  %11 = xla_tuple %s8, %s9, %s10
  %s12 = sld [smem:[#allocation0]]
  $region129: #{conv3x3_pair.1} parent=0
    _
  %s14 = ssub.s32 1, %s12
  %s15 = scalar_select 0, %s14, %s12
  $region1: #{conv3x3_pair.1} parent=0
    #allocation5 [shape = 'u8[32768]{0}', space=vmem, size = 0x8000, scoped, tag = 'input window, operand 0']
    #allocation6 [shape = 's32[2]{0}', space=sflag, size = 0x8, scoped, tag = 'scoped memory for conv3x3_pair.1']
    #allocation7 [shape = 's32[2]{0}', space=sflag, size = 0x8, scoped, tag = 'scoped memory for conv3x3_pair.1']
    #allocation8 [shape = 'u8[8192]{0}', space=vmem, size = 0x2000, scoped, tag = 'input window, operand 1']
    #allocation9 [shape = 's32[2]{0}', space=sflag, size = 0x8, scoped, tag = 'scoped memory for conv3x3_pair.1']
    #allocation10 [shape = 'u8[8192]{0}', space=vmem, size = 0x2000, scoped, tag = 'input window, operand 2']
    #allocation11 [shape = 'u8[32768]{0}', space=vmem, size = 0x8000, scoped, tag = 'input window, operand 3']
    #allocation12 [shape = 's32[2]{0}', space=sflag, size = 0x8, scoped, tag = 'scoped memory for conv3x3_pair.1']
    #allocation13 [shape = 'u8[8192]{0}', space=vmem, size = 0x2000, scoped, tag = 'input window, operand 4']
    #allocation14 [shape = 'u8[8192]{0}', space=vmem, size = 0x2000, scoped, tag = 'input window, operand 5']
    #allocation15 [shape = 's32[2]{0}', space=sflag, size = 0x8, scoped, tag = 'scoped memory for conv3x3_pair.1']
    #allocation16 [shape = 'u8[147456]{0}', space=vmem, size = 0x24000, scoped, tag = 'input window, operand 6, single buffered']
    #allocation17 [shape = 'u8[512]{0}', space=vmem, size = 0x400, scoped, tag = 'input window, operand 7, single buffered']
    #allocation18 [shape = 's32[1]{0}', space=sflag, size = 0x4, scoped, tag = 'scoped memory for conv3x3_pair.1']
    #allocation19 [shape = 'u8[32768]{0}', space=vmem, size = 0x8000, scoped, tag = 'output window, operand 0']
    #allocation20 [shape = 'u8[32768]{0}', space=vmem, size = 0x8000, scoped, tag = 'output window, operand 1']
    #allocation21 [shape = 's32[2]{0}', space=sflag, size = 0x8, scoped, tag = 'scoped memory for conv3x3_pair.1']
    #allocation22 [shape = 'u8[1024]{0}', space=vmem, size = 0x400, scoped, tag = 'output window, operand 2']
    %16 = vsyncpa [#allocation6], 0
    %s17 = scalar_lea.sflag [#allocation6], 1
    %18 = vsyncpa %s17, 0
    %19 = vsyncpa [#allocation9], 0
    %s20 = scalar_lea.sflag [#allocation9], 1
    %21 = vsyncpa %s20, 0
    %22 = vsyncpa [#allocation12], 0
    %s23 = scalar_lea.sflag [#allocation12], 1
    %24 = vsyncpa %s23, 0
    %25 = vsyncpa [#allocation15], 0
    %s26 = scalar_lea.sflag [#allocation15], 1
    %27 = vsyncpa %s26, 0
    %28 = vsyncpa [#allocation18], 0
    %29 = vsyncpa [#allocation7], 0
    %s30 = scalar_lea.sflag [#allocation7], 1
    %31 = vsyncpa %s30, 0
    %32 = vsyncpa [#allocation21], 0
    %s33 = scalar_lea.sflag [#allocation21], 1
    %34 = vsyncpa %s33, 0
    loop: start=0, step=1, limit=10
    $region2: #{conv3x3_pair.1} parent=1 // loop_pre_header
      _
    $region3: #{conv3x3_pair.1} parent=1 // loop_header
      %s36 = sphi 0, %s40
      %p37 = scmp.ge.s32.totalorder %s36, 10
      %s43 = sphi 0, %s55
      %s44 = sphi 0, %s51
      %s45 = sphi 0, %s43
      %s46 = sphi 0, %s44
      %s47 = sphi 0, %s45
      %s48 = sphi 0, %s46
      %s60 = sphi 0, %s62
      %s63 = sphi 0, %s60
      %s64 = sphi 0, %s63
      %s80 = sphi 0, %s64
      %s96 = sphi 0, %s98
      %s99 = sphi 0, %s96
      %s100 = sphi 0, %s99
      %s116 = sphi 0, %s100
      %s132 = sphi 0, %s134
      %s135 = sphi 0, %s132
      %s136 = sphi 0, %s135
      %s152 = sphi 0, %s136
      %s160 = sphi 0, %s162
      %s163 = sphi 0, %s160
      %s164 = sphi 0, %s163
      %s180 = sphi 0, %s164
      %s196 = sphi 0, %s198
      %s199 = sphi 0, %s196
      %s200 = sphi 0, %s199
      %s216 = sphi 0, %s200
      %s232 = sphi 0, %s234
      %s235 = sphi 0, %s232
      %s236 = sphi 0, %s235
      %s252 = sphi 0, %s236
      %s256 = sphi 0, %s256
      %s258 = sphi 0, %s256
      %s259 = sphi 0, %s258
      %s273 = sphi 0, %s259
      %s277 = sphi 0, %s277
      %s279 = sphi 0, %s277
      %s280 = sphi 0, %s279
      %s294 = sphi 0, %s280
      %s302 = sphi 0, %s304
      %s305 = sphi 0, %s302
      %s306 = sphi 0, %s305
      %s322 = sphi 0, %s306
      %s330 = sphi 0, %s332
      %s333 = sphi 0, %s330
      %s334 = sphi 0, %s333
      %s350 = sphi 0, %s334
      %s358 = sphi 0, %s360
      %s361 = sphi 0, %s358
      %s362 = sphi 0, %s361
      %s378 = sphi 0, %s362
    $region4: #{conv3x3_pair.1} parent=1 // loop_header_branch
      %39 = sbr.rel (%p37) target = $region8
    $region5: #{conv3x3_pair.1} parent=1 // loop_body
      %s41 = ssub.s32 %s36, 1
      %s42 = ssub.s32 %s36, 2
      %s49 = sadd.s32 1, %s44
      %p50 = scmp.ge.s32.totalorder %s49, 4
      %s51 = scalar_select %p50, 0, %s49
      %s52 = sadd.s32 1, %s43
      %s53 = scalar_select %p50, %s52, %s43
      %p54 = scmp.ge.s32.totalorder %s53, 2
      %s55 = scalar_select %p54, 0, %s53
      %s56 = ssub.s32 %s43, %s55
      %s57 = ssub.s32 %s44, %s51
      %s58 = sor.u32 %s56, %s57
      %p59 = scmp.eq.s32.totalorder %s58, 0
      %s61 = sadd.s32 %s60, 1
      %s62 = scalar_select %p59, %s60, %s61
      %p65 = pneg %p59
      %p66 = scmp.eq.s32.totalorder %s36, 7
      %p67 = por %p65, %p66
      %p68 = scmp.ne.s32.totalorder %s60, %s63
      %p69 = scmp.eq.s32.totalorder %s36, 0
      %p70 = por %p68, %p69
      %p71 = scmp.ne.s32.totalorder %s60, %s63
      %p72 = scmp.eq.s32.totalorder %s41, 7
      %p73 = por %p71, %p72
      %p74 = scmp.ne.s32.totalorder %s63, %s64
      %p75 = scmp.eq.s32.totalorder %s41, 0
      %p76 = por %p74, %p75
      %p77 = scmp.ne.s32.totalorder %s63, %s64
      %p78 = scmp.eq.s32.totalorder %s42, 7
      %p79 = por %p77, %p78
      %p81 = scmp.ne.s32.totalorder %s64, %s80
      %p82 = scmp.eq.s32.totalorder %s42, 0
      %p83 = por %p81, %p82
      %s84 = smul.u32 %s44, 4
      %s85 = ssub.s32 %s84, 1
      %p86 = scmp.gt.s32.totalorder %s85, 0
      %s87 = scalar_select %p86, %s85, 0
      %s88 = smul.u32 %s51, 4
      %s89 = ssub.s32 %s88, 1
      %p90 = scmp.gt.s32.totalorder %s89, 0
      %s91 = scalar_select %p90, %s89, 0
      %s92 = ssub.s32 %s43, %s55
      %s93 = ssub.s32 %s87, %s91
      %s94 = sor.u32 %s92, %s93
      %p95 = scmp.eq.s32.totalorder %s94, 0
      %s97 = sadd.s32 %s96, 1
      %s98 = scalar_select %p95, %s96, %s97
      %p101 = pneg %p95
      %p102 = scmp.eq.s32.totalorder %s36, 7
      %p103 = por %p101, %p102
      %p104 = scmp.ne.s32.totalorder %s96, %s99
      %p105 = scmp.eq.s32.totalorder %s36, 0
      %p106 = por %p104, %p105
      %p107 = scmp.ne.s32.totalorder %s96, %s99
      %p108 = scmp.eq.s32.totalorder %s41, 7
      %p109 = por %p107, %p108
      %p110 = scmp.ne.s32.totalorder %s99, %s100
      %p111 = scmp.eq.s32.totalorder %s41, 0
      %p112 = por %p110, %p111
      %p113 = scmp.ne.s32.totalorder %s99, %s100
      %p114 = scmp.eq.s32.totalorder %s42, 7
      %p115 = por %p113, %p114
      %p117 = scmp.ne.s32.totalorder %s100, %s116
      %p118 = scmp.eq.s32.totalorder %s42, 0
      %p119 = por %p117, %p118
      %s120 = sadd.s32 %s44, 1
      %s121 = smul.u32 %s120, 4
      %p122 = scmp.lt.s32.totalorder %s121, 15
      %s123 = scalar_select %p122, %s121, 15
      %s124 = sadd.s32 %s51, 1
      %s125 = smul.u32 %s124, 4
      %p126 = scmp.lt.s32.totalorder %s125, 15
      %s127 = scalar_select %p126, %s125, 15
      %s128 = ssub.s32 %s43, %s55
      %s129 = ssub.s32 %s123, %s127
      %s130 = sor.u32 %s128, %s129
      %p131 = scmp.eq.s32.totalorder %s130, 0
      %s133 = sadd.s32 %s132, 1
      %s134 = scalar_select %p131, %s132, %s133
      %p137 = pneg %p131
      %p138 = scmp.eq.s32.totalorder %s36, 7
      %p139 = por %p137, %p138
      %p140 = scmp.ne.s32.totalorder %s132, %s135
      %p141 = scmp.eq.s32.totalorder %s36, 0
      %p142 = por %p140, %p141
      %p143 = scmp.ne.s32.totalorder %s132, %s135
      %p144 = scmp.eq.s32.totalorder %s41, 7
      %p145 = por %p143, %p144
      %p146 = scmp.ne.s32.totalorder %s135, %s136
      %p147 = scmp.eq.s32.totalorder %s41, 0
      %p148 = por %p146, %p147
      %p149 = scmp.ne.s32.totalorder %s135, %s136
      %p150 = scmp.eq.s32.totalorder %s42, 7
      %p151 = por %p149, %p150
      %p153 = scmp.ne.s32.totalorder %s136, %s152
      %p154 = scmp.eq.s32.totalorder %s42, 0
      %p155 = por %p153, %p154
      %s156 = ssub.s32 %s43, %s55
      %s157 = ssub.s32 %s44, %s51
      %s158 = sor.u32 %s156, %s157
      %p159 = scmp.eq.s32.totalorder %s158, 0
      %s161 = sadd.s32 %s160, 1
      %s162 = scalar_select %p159, %s160, %s161
      %p165 = pneg %p159
      %p166 = scmp.eq.s32.totalorder %s36, 7
      %p167 = por %p165, %p166
      %p168 = scmp.ne.s32.totalorder %s160, %s163
      %p169 = scmp.eq.s32.totalorder %s36, 0
      %p170 = por %p168, %p169
      %p171 = scmp.ne.s32.totalorder %s160, %s163
      %p172 = scmp.eq.s32.totalorder %s41, 7
      %p173 = por %p171, %p172
      %p174 = scmp.ne.s32.totalorder %s163, %s164
      %p175 = scmp.eq.s32.totalorder %s41, 0
      %p176 = por %p174, %p175
      %p177 = scmp.ne.s32.totalorder %s163, %s164
      %p178 = scmp.eq.s32.totalorder %s42, 7
      %p179 = por %p177, %p178
      %p181 = scmp.ne.s32.totalorder %s164, %s180
      %p182 = scmp.eq.s32.totalorder %s42, 0
      %p183 = por %p181, %p182
      %s184 = smul.u32 %s44, 4
      %s185 = ssub.s32 %s184, 1
      %p186 = scmp.gt.s32.totalorder %s185, 0
      %s187 = scalar_select %p186, %s185, 0
      %s188 = smul.u32 %s51, 4
      %s189 = ssub.s32 %s188, 1
      %p190 = scmp.gt.s32.totalorder %s189, 0
      %s191 = scalar_select %p190, %s189, 0
      %s192 = ssub.s32 %s43, %s55
      %s193 = ssub.s32 %s187, %s191
      %s194 = sor.u32 %s192, %s193
      %p195 = scmp.eq.s32.totalorder %s194, 0
      %s197 = sadd.s32 %s196, 1
      %s198 = scalar_select %p195, %s196, %s197
      %p201 = pneg %p195
      %p202 = scmp.eq.s32.totalorder %s36, 7
      %p203 = por %p201, %p202
      %p204 = scmp.ne.s32.totalorder %s196, %s199
      %p205 = scmp.eq.s32.totalorder %s36, 0
      %p206 = por %p204, %p205
      %p207 = scmp.ne.s32.totalorder %s196, %s199
      %p208 = scmp.eq.s32.totalorder %s41, 7
      %p209 = por %p207, %p208
      %p210 = scmp.ne.s32.totalorder %s199, %s200
      %p211 = scmp.eq.s32.totalorder %s41, 0
      %p212 = por %p210, %p211
      %p213 = scmp.ne.s32.totalorder %s199, %s200
      %p214 = scmp.eq.s32.totalorder %s42, 7
      %p215 = por %p213, %p214
      %p217 = scmp.ne.s32.totalorder %s200, %s216
      %p218 = scmp.eq.s32.totalorder %s42, 0
      %p219 = por %p217, %p218
      %s220 = sadd.s32 %s44, 1
      %s221 = smul.u32 %s220, 4
      %p222 = scmp.lt.s32.totalorder %s221, 15
      %s223 = scalar_select %p222, %s221, 15
      %s224 = sadd.s32 %s51, 1
      %s225 = smul.u32 %s224, 4
      %p226 = scmp.lt.s32.totalorder %s225, 15
      %s227 = scalar_select %p226, %s225, 15
      %s228 = ssub.s32 %s43, %s55
      %s229 = ssub.s32 %s223, %s227
      %s230 = sor.u32 %s228, %s229
      %p231 = scmp.eq.s32.totalorder %s230, 0
      %s233 = sadd.s32 %s232, 1
      %s234 = scalar_select %p231, %s232, %s233
      %p237 = pneg %p231
      %p238 = scmp.eq.s32.totalorder %s36, 7
      %p239 = por %p237, %p238
      %p240 = scmp.ne.s32.totalorder %s232, %s235
      %p241 = scmp.eq.s32.totalorder %s36, 0
      %p242 = por %p240, %p241
      %p243 = scmp.ne.s32.totalorder %s232, %s235
      %p244 = scmp.eq.s32.totalorder %s41, 7
      %p245 = por %p243, %p244
      %p246 = scmp.ne.s32.totalorder %s235, %s236
      %p247 = scmp.eq.s32.totalorder %s41, 0
      %p248 = por %p246, %p247
      %p249 = scmp.ne.s32.totalorder %s235, %s236
      %p250 = scmp.eq.s32.totalorder %s42, 7
      %p251 = por %p249, %p250
      %p253 = scmp.ne.s32.totalorder %s236, %s252
      %p254 = scmp.eq.s32.totalorder %s42, 0
      %p255 = por %p253, %p254
      %s257 = sadd.s32 %s256, 1
      %p260 = scmp.eq.s32.totalorder %s36, 7
      %p261 = scmp.ne.s32.totalorder %s256, %s258
      %p262 = scmp.eq.s32.totalorder %s36, 0
      %p263 = por %p261, %p262
      %p264 = scmp.ne.s32.totalorder %s256, %s258
      %p265 = scmp.eq.s32.totalorder %s41, 7
      %p266 = por %p264, %p265
      %p267 = scmp.ne.s32.totalorder %s258, %s259
      %p268 = scmp.eq.s32.totalorder %s41, 0
      %p269 = por %p267, %p268
      %p270 = scmp.ne.s32.totalorder %s258, %s259
      %p271 = scmp.eq.s32.totalorder %s42, 7
      %p272 = por %p270, %p271
      %p274 = scmp.ne.s32.totalorder %s259, %s273
      %p275 = scmp.eq.s32.totalorder %s42, 0
      %p276 = por %p274, %p275
      %s278 = sadd.s32 %s277, 1
      %p281 = scmp.eq.s32.totalorder %s36, 7
      %p282 = scmp.ne.s32.totalorder %s277, %s279
      %p283 = scmp.eq.s32.totalorder %s36, 0
      %p284 = por %p282, %p283
      %p285 = scmp.ne.s32.totalorder %s277, %s279
      %p286 = scmp.eq.s32.totalorder %s41, 7
      %p287 = por %p285, %p286
      %p288 = scmp.ne.s32.totalorder %s279, %s280
      %p289 = scmp.eq.s32.totalorder %s41, 0
      %p290 = por %p288, %p289
      %p291 = scmp.ne.s32.totalorder %s279, %s280
      %p292 = scmp.eq.s32.totalorder %s42, 7
      %p293 = por %p291, %p292
      %p295 = scmp.ne.s32.totalorder %s280, %s294
      %p296 = scmp.eq.s32.totalorder %s42, 0
      %p297 = por %p295, %p296
      %s298 = ssub.s32 %s43, %s55
      %s299 = ssub.s32 %s44, %s51
      %s300 = sor.u32 %s298, %s299
      %p301 = scmp.eq.s32.totalorder %s300, 0
      %s303 = sadd.s32 %s302, 1
      %s304 = scalar_select %p301, %s302, %s303
      %p307 = pneg %p301
      %p308 = scmp.eq.s32.totalorder %s36, 7
      %p309 = por %p307, %p308
      %p310 = scmp.ne.s32.totalorder %s302, %s305
      %p311 = scmp.eq.s32.totalorder %s36, 0
      %p312 = por %p310, %p311
      %p313 = scmp.ne.s32.totalorder %s302, %s305
      %p314 = scmp.eq.s32.totalorder %s41, 7
      %p315 = por %p313, %p314
      %p316 = scmp.ne.s32.totalorder %s305, %s306
      %p317 = scmp.eq.s32.totalorder %s41, 0
      %p318 = por %p316, %p317
      %p319 = scmp.ne.s32.totalorder %s305, %s306
      %p320 = scmp.eq.s32.totalorder %s42, 7
      %p321 = por %p319, %p320
      %p323 = scmp.ne.s32.totalorder %s306, %s322
      %p324 = scmp.eq.s32.totalorder %s42, 0
      %p325 = por %p323, %p324
      %s326 = ssub.s32 %s43, %s55
      %s327 = ssub.s32 %s44, %s51
      %s328 = sor.u32 %s326, %s327
      %p329 = scmp.eq.s32.totalorder %s328, 0
      %s331 = sadd.s32 %s330, 1
      %s332 = scalar_select %p329, %s330, %s331
      %p335 = pneg %p329
      %p336 = scmp.eq.s32.totalorder %s36, 7
      %p337 = por %p335, %p336
      %p338 = scmp.ne.s32.totalorder %s330, %s333
      %p339 = scmp.eq.s32.totalorder %s36, 0
      %p340 = por %p338, %p339
      %p341 = scmp.ne.s32.totalorder %s330, %s333
      %p342 = scmp.eq.s32.totalorder %s41, 7
      %p343 = por %p341, %p342
      %p344 = scmp.ne.s32.totalorder %s333, %s334
      %p345 = scmp.eq.s32.totalorder %s41, 0
      %p346 = por %p344, %p345
      %p347 = scmp.ne.s32.totalorder %s333, %s334
      %p348 = scmp.eq.s32.totalorder %s42, 7
      %p349 = por %p347, %p348
      %p351 = scmp.ne.s32.totalorder %s334, %s350
      %p352 = scmp.eq.s32.totalorder %s42, 0
      %p353 = por %p351, %p352
      %s354 = ssub.s32 %s43, %s55
      %s355 = ssub.s32 %s44, %s51
      %s356 = sor.u32 %s354, %s355
      %p357 = scmp.eq.s32.totalorder %s356, 0
      %s359 = sadd.s32 %s358, 1
      %s360 = scalar_select %p357, %s358, %s359
      %p363 = pneg %p357
      %p364 = scmp.eq.s32.totalorder %s36, 7
      %p365 = por %p363, %p364
      %p366 = scmp.ne.s32.totalorder %s358, %s361
      %p367 = scmp.eq.s32.totalorder %s36, 0
      %p368 = por %p366, %p367
      %p369 = scmp.ne.s32.totalorder %s358, %s361
      %p370 = scmp.eq.s32.totalorder %s41, 7
      %p371 = por %p369, %p370
      %p372 = scmp.ne.s32.totalorder %s361, %s362
      %p373 = scmp.eq.s32.totalorder %s41, 0
      %p374 = por %p372, %p373
      %p375 = scmp.ne.s32.totalorder %s361, %s362
      %p376 = scmp.eq.s32.totalorder %s42, 7
      %p377 = por %p375, %p376
      %p379 = scmp.ne.s32.totalorder %s362, %s378
      %p380 = scmp.eq.s32.totalorder %s42, 0
      %p381 = por %p379, %p380
      %p382 = scmp.le.s32.totalorder 1, %s36
      %p383 = scmp.lt.s32.totalorder %s36, 9
      %p384 = pnand %p382, %p383
      %p385 = pneg %p384
      // Predicated region
      $region9: #{conv3x3_pair.1} parent=5 // pred_check
        _
      $region10: #{conv3x3_pair.1} parent=5 // pred_check_branch
        %387 = sbr.rel (%p384) target = $region12
      $region11: #{conv3x3_pair.1} parent=5 // pred_region
        %s388 = ssub.s32 %s36, 1
        // Predicated region
        $region13: #{conv3x3_pair.1} parent=11 // pred_check
          %p389 = pneg %p269
        $region14: #{conv3x3_pair.1} parent=11 // pred_check_branch
          %391 = sbr.rel (%p389) target = $region16
        $region15: #{conv3x3_pair.1} parent=11 // pred_region
          %s393 = ssub.s32 4608, 4608
          %394 = vsyncadd [#allocation15], %s393
          %s395 = sshll.u32 [#allocation16], 4
          %s396 = int_to_ptr.vmem [resolvable:$true] %s395
          %401 = dma.hbm_to_vmem [thread:$0]  %s6, 4608, %s396, [#allocation15], 64, 64, 4
        $region16: #{conv3x3_pair.1} parent=11 // pred_fallthru
          _
        // Predicated region
        $region17: #{conv3x3_pair.1} parent=11 // pred_check
          %p402 = pneg %p290
        $region18: #{conv3x3_pair.1} parent=11 // pred_check_branch
          %404 = sbr.rel (%p402) target = $region20
        $region19: #{conv3x3_pair.1} parent=11 // pred_region
          %s406 = ssub.s32 16, 16
          %407 = vsyncadd [#allocation18], %s406
          %s409 = sshll.u32 [#allocation17], 4
          %s410 = int_to_ptr.vmem [resolvable:$true] %s409
          %412 = dma.hbm_to_vmem [thread:$0]  %s7, 16, %s410, [#allocation18]
        $region20: #{conv3x3_pair.1} parent=11 // pred_fallthru
          _
      $region12: #{conv3x3_pair.1} parent=5 // pred_fallthru
        _
      %p413 = scmp.lt.s32.totalorder %s36, 8
      // Predicated region
      $region21: #{conv3x3_pair.1} parent=5 // pred_check
        %p414 = pneg %p413
      $region22: #{conv3x3_pair.1} parent=5 // pred_check_branch
        %416 = sbr.rel (%p414) target = $region24
      $region23: #{conv3x3_pair.1} parent=5 // pred_region
        // Predicated region
        $region25: #{conv3x3_pair.1} parent=23 // pred_check
          %p417 = pneg %p70
        $region26: #{conv3x3_pair.1} parent=23 // pred_check_branch
          %419 = sbr.rel (%p417) target = $region28
        $region27: #{conv3x3_pair.1} parent=23 // pred_region
          %s420 = sand.u32 %s60, 1
          %s421 = scalar_lea.sflag [#allocation6], %s420
          %s422 = sand.u32 %s60, 1
          %s423 = smul.addr %s422, 32
          %s424 = scalar_lea.vmem [#allocation5], %s423
          %s425 = smul.u32 4, %s44
          %s427 = ssub.s32 512, 512
          %428 = vsyncadd %s421, %s427
          %s429 = smul.addr %s425, 2
          %s430 = smul.addr %s43, 32
          %s431 = sadd.s32 %s429, %s430
          %s432 = smul.addr %s431, 64
          %s433 = scalar_lea.hbm %s0, %s432
          %s434 = sshll.u32 %s424, 4
          %s435 = int_to_ptr.vmem [resolvable:$true] %s434
          %440 = dma.hbm_to_vmem [thread:$0]  %s433, 512, %s435, %s421, 64, 64, 4
        $region28: #{conv3x3_pair.1} parent=23 // pred_fallthru
          _
        // Predicated region
        $region29: #{conv3x3_pair.1} parent=23 // pred_check
          %p441 = pneg %p106
        $region30: #{conv3x3_pair.1} parent=23 // pred_check_branch
          %443 = sbr.rel (%p441) target = $region32
        $region31: #{conv3x3_pair.1} parent=23 // pred_region
          %s444 = sand.u32 %s36, 1
          %s445 = scalar_lea.sflag [#allocation9], %s444
          %s446 = sand.u32 %s96, 1
          %s447 = smul.addr %s446, 8
          %s448 = scalar_lea.vmem [#allocation8], %s447
          %s449 = smul.u32 %s44, 4
          %s450 = ssub.s32 %s449, 1
          %p451 = scmp.gt.s32.totalorder %s450, 0
          %s452 = scalar_select %p451, %s450, 0
          %s454 = ssub.s32 128, 128
          %455 = vsyncadd %s445, %s454
          %s456 = smul.addr %s452, 2
          %s457 = smul.addr %s43, 32
          %s458 = sadd.s32 %s456, %s457
          %s459 = smul.addr %s458, 64
          %s460 = scalar_lea.hbm %s1, %s459
          %s461 = sshll.u32 %s448, 4
          %s462 = int_to_ptr.vmem [resolvable:$true] %s461
          %467 = dma.hbm_to_vmem [thread:$0]  %s460, 128, %s462, %s445, 64, 64, 4
        $region32: #{conv3x3_pair.1} parent=23 // pred_fallthru
          _
        // Predicated region
        $region33: #{conv3x3_pair.1} parent=23 // pred_check
          %p468 = pneg %p142
        $region34: #{conv3x3_pair.1} parent=23 // pred_check_branch
          %470 = sbr.rel (%p468) target = $region36
        $region35: #{conv3x3_pair.1} parent=23 // pred_region
          %s471 = sand.u32 %s36, 1
          %s472 = scalar_lea.sflag [#allocation9], %s471
          %s473 = sand.u32 %s132, 1
          %s474 = smul.addr %s473, 8
          %s475 = scalar_lea.vmem [#allocation10], %s474
          %s476 = sadd.s32 %s44, 1
          %s477 = smul.u32 %s476, 4
          %p478 = scmp.lt.s32.totalorder %s477, 15
          %s479 = scalar_select %p478, %s477, 15
          %s481 = ssub.s32 128, 128
          %482 = vsyncadd %s472, %s481
          %s483 = smul.addr %s479, 2
          %s484 = smul.addr %s43, 32
          %s485 = sadd.s32 %s483, %s484
          %s486 = smul.addr %s485, 64
          %s487 = scalar_lea.hbm %s2, %s486
          %s488 = sshll.u32 %s475, 4
          %s489 = int_to_ptr.vmem [resolvable:$true] %s488
          %494 = dma.hbm_to_vmem [thread:$0]  %s487, 128, %s489, %s472, 64, 64, 4
        $region36: #{conv3x3_pair.1} parent=23 // pred_fallthru
          _
        // Predicated region
        $region37: #{conv3x3_pair.1} parent=23 // pred_check
          %p495 = pneg %p170
        $region38: #{conv3x3_pair.1} parent=23 // pred_check_branch
          %497 = sbr.rel (%p495) target = $region40
        $region39: #{conv3x3_pair.1} parent=23 // pred_region
          %s498 = sand.u32 %s36, 1
          %s499 = scalar_lea.sflag [#allocation12], %s498
          %s500 = sand.u32 %s160, 1
          %s501 = smul.addr %s500, 32
          %s502 = scalar_lea.vmem [#allocation11], %s501
          %s503 = smul.u32 4, %s44
          %s505 = ssub.s32 512, 512
          %506 = vsyncadd %s499, %s505
          %s507 = smul.addr %s503, 2
          %s508 = smul.addr %s43, 32
          %s509 = sadd.s32 %s507, %s508
          %s510 = smul.addr %s509, 64
          %s511 = scalar_lea.hbm %s3, %s510
          %s512 = sshll.u32 %s502, 4
          %s513 = int_to_ptr.vmem [resolvable:$true] %s512
          %518 = dma.hbm_to_vmem [thread:$0]  %s511, 512, %s513, %s499, 64, 64, 4
        $region40: #{conv3x3_pair.1} parent=23 // pred_fallthru
          _
        // Predicated region
        $region41: #{conv3x3_pair.1} parent=23 // pred_check
          %p519 = pneg %p206
        $region42: #{conv3x3_pair.1} parent=23 // pred_check_branch
          %521 = sbr.rel (%p519) target = $region44
        $region43: #{conv3x3_pair.1} parent=23 // pred_region
          %s522 = sand.u32 %s36, 1
          %s523 = scalar_lea.sflag [#allocation12], %s522
          %s524 = sand.u32 %s196, 1
          %s525 = smul.addr %s524, 8
          %s526 = scalar_lea.vmem [#allocation13], %s525
          %s527 = smul.u32 %s44, 4
          %s528 = ssub.s32 %s527, 1
          %p529 = scmp.gt.s32.totalorder %s528, 0
          %s530 = scalar_select %p529, %s528, 0
          %s532 = ssub.s32 128, 128
          %533 = vsyncadd %s523, %s532
          %s534 = smul.addr %s530, 2
          %s535 = smul.addr %s43, 32
          %s536 = sadd.s32 %s534, %s535
          %s537 = smul.addr %s536, 64
          %s538 = scalar_lea.hbm %s4, %s537
          %s539 = sshll.u32 %s526, 4
          %s540 = int_to_ptr.vmem [resolvable:$true] %s539
          %545 = dma.hbm_to_vmem [thread:$0]  %s538, 128, %s540, %s523, 64, 64, 4
        $region44: #{conv3x3_pair.1} parent=23 // pred_fallthru
          _
        // Predicated region
        $region45: #{conv3x3_pair.1} parent=23 // pred_check
          %p546 = pneg %p242
        $region46: #{conv3x3_pair.1} parent=23 // pred_check_branch
          %548 = sbr.rel (%p546) target = $region48
        $region47: #{conv3x3_pair.1} parent=23 // pred_region
          %s549 = sand.u32 %s36, 1
          %s550 = scalar_lea.sflag [#allocation15], %s549
          %s551 = sand.u32 %s232, 1
          %s552 = smul.addr %s551, 8
          %s553 = scalar_lea.vmem [#allocation14], %s552
          %s554 = sadd.s32 %s44, 1
          %s555 = smul.u32 %s554, 4
          %p556 = scmp.lt.s32.totalorder %s555, 15
          %s557 = scalar_select %p556, %s555, 15
          %s559 = ssub.s32 128, 128
          %560 = vsyncadd %s550, %s559
          %s561 = smul.addr %s557, 2
          %s562 = smul.addr %s43, 32
          %s563 = sadd.s32 %s561, %s562
          %s564 = smul.addr %s563, 64
          %s565 = scalar_lea.hbm %s5, %s564
          %s566 = sshll.u32 %s553, 4
          %s567 = int_to_ptr.vmem [resolvable:$true] %s566
          %572 = dma.hbm_to_vmem [thread:$0]  %s565, 128, %s567, %s550, 64, 64, 4
        $region48: #{conv3x3_pair.1} parent=23 // pred_fallthru
          _
      $region24: #{conv3x3_pair.1} parent=5 // pred_fallthru
        _
      %p573 = scmp.le.s32.totalorder 1, %s36
      %p574 = scmp.lt.s32.totalorder %s36, 9
      %p575 = pnand %p573, %p574
      %p576 = pneg %p575
      // Predicated region
      $region49: #{conv3x3_pair.1} parent=5 // pred_check
        _
      $region50: #{conv3x3_pair.1} parent=5 // pred_check_branch
        %578 = sbr.rel (%p575) target = $region52
      $region51: #{conv3x3_pair.1} parent=5 // pred_region
        %s579 = ssub.s32 %s36, 1
        %s580 = sand.u32 %s63, 1
        %s581 = scalar_lea.sflag [#allocation6], %s580
        %s582 = sand.u32 %s63, 1
        %s583 = smul.addr %s582, 32
        %s584 = scalar_lea.vmem [#allocation5], %s583
        // Predicated region
        $region53: #{conv3x3_pair.1} parent=51 // pred_check
          %p585 = pneg %p76
        $region54: #{conv3x3_pair.1} parent=51 // pred_check_branch
          %587 = sbr.rel (%p585) target = $region56
        $region55: #{conv3x3_pair.1} parent=51 // pred_region
          %588 = dma.done %s581, 512
        $region56: #{conv3x3_pair.1} parent=51 // pred_fallthru
          _
        %s589 = sand.u32 %s41, 1
        %s590 = scalar_lea.sflag [#allocation9], %s589
        %s591 = sand.u32 %s99, 1
        %s592 = smul.addr %s591, 8
        %s593 = scalar_lea.vmem [#allocation8], %s592
        // Predicated region
        $region57: #{conv3x3_pair.1} parent=51 // pred_check
          %p594 = pneg %p112
        $region58: #{conv3x3_pair.1} parent=51 // pred_check_branch
          %596 = sbr.rel (%p594) target = $region60
        $region59: #{conv3x3_pair.1} parent=51 // pred_region
          %597 = dma.done %s590, 128
        $region60: #{conv3x3_pair.1} parent=51 // pred_fallthru
          _
        %s598 = sand.u32 %s41, 1
        %s599 = scalar_lea.sflag [#allocation9], %s598
        %s600 = sand.u32 %s135, 1
        %s601 = smul.addr %s600, 8
        %s602 = scalar_lea.vmem [#allocation10], %s601
        // Predicated region
        $region61: #{conv3x3_pair.1} parent=51 // pred_check
          %p603 = pneg %p148
        $region62: #{conv3x3_pair.1} parent=51 // pred_check_branch
          %605 = sbr.rel (%p603) target = $region64
        $region63: #{conv3x3_pair.1} parent=51 // pred_region
          %606 = dma.done %s599, 128
        $region64: #{conv3x3_pair.1} parent=51 // pred_fallthru
          _
        %s607 = sand.u32 %s41, 1
        %s608 = scalar_lea.sflag [#allocation12], %s607
        %s609 = sand.u32 %s163, 1
        %s610 = smul.addr %s609, 32
        %s611 = scalar_lea.vmem [#allocation11], %s610
        // Predicated region
        $region65: #{conv3x3_pair.1} parent=51 // pred_check
          %p612 = pneg %p176
        $region66: #{conv3x3_pair.1} parent=51 // pred_check_branch
          %614 = sbr.rel (%p612) target = $region68
        $region67: #{conv3x3_pair.1} parent=51 // pred_region
          %615 = dma.done %s608, 512
        $region68: #{conv3x3_pair.1} parent=51 // pred_fallthru
          _
        %s616 = sand.u32 %s41, 1
        %s617 = scalar_lea.sflag [#allocation12], %s616
        %s618 = sand.u32 %s199, 1
        %s619 = smul.addr %s618, 8
        %s620 = scalar_lea.vmem [#allocation13], %s619
        // Predicated region
        $region69: #{conv3x3_pair.1} parent=51 // pred_check
          %p621 = pneg %p212
        $region70: #{conv3x3_pair.1} parent=51 // pred_check_branch
          %623 = sbr.rel (%p621) target = $region72
        $region71: #{conv3x3_pair.1} parent=51 // pred_region
          %624 = dma.done %s617, 128
        $region72: #{conv3x3_pair.1} parent=51 // pred_fallthru
          _
        %s625 = sand.u32 %s41, 1
        %s626 = scalar_lea.sflag [#allocation15], %s625
        %s627 = sand.u32 %s235, 1
        %s628 = smul.addr %s627, 8
        %s629 = scalar_lea.vmem [#allocation14], %s628
        // Predicated region
        $region73: #{conv3x3_pair.1} parent=51 // pred_check
          %p630 = pneg %p248
        $region74: #{conv3x3_pair.1} parent=51 // pred_check_branch
          %632 = sbr.rel (%p630) target = $region76
        $region75: #{conv3x3_pair.1} parent=51 // pred_region
          %633 = dma.done %s626, 128
        $region76: #{conv3x3_pair.1} parent=51 // pred_fallthru
          _
        // Predicated region
        $region77: #{conv3x3_pair.1} parent=51 // pred_check
          %p634 = pneg %p269
        $region78: #{conv3x3_pair.1} parent=51 // pred_check_branch
          %636 = sbr.rel (%p634) target = $region80
        $region79: #{conv3x3_pair.1} parent=51 // pred_region
          %637 = dma.done [#allocation15], 4608
        $region80: #{conv3x3_pair.1} parent=51 // pred_fallthru
          _
        // Predicated region
        $region81: #{conv3x3_pair.1} parent=51 // pred_check
          %p638 = pneg %p290
        $region82: #{conv3x3_pair.1} parent=51 // pred_check_branch
          %640 = sbr.rel (%p638) target = $region84
        $region83: #{conv3x3_pair.1} parent=51 // pred_region
          %641 = dma.done [#allocation18], 16
        $region84: #{conv3x3_pair.1} parent=51 // pred_fallthru
          _
        %s642 = sand.u32 %s63, 1
        %s643 = scalar_lea.sflag [#allocation6], %s642
        %s644 = sand.u32 %s63, 1
        %s645 = smul.addr %s644, 32
        %s646 = scalar_lea.vmem [#allocation5], %s645
        %p647 = pneg %p76
        %p648 = pneg %p73
        %s649 = sand.u32 %s41, 1
        %s650 = scalar_lea.sflag [#allocation9], %s649
        %s651 = sand.u32 %s99, 1
        %s652 = smul.addr %s651, 8
        %s653 = scalar_lea.vmem [#allocation8], %s652
        %p654 = pneg %p112
        %p655 = pneg %p109
        %s656 = sand.u32 %s41, 1
        %s657 = scalar_lea.sflag [#allocation9], %s656
        %s658 = sand.u32 %s135, 1
        %s659 = smul.addr %s658, 8
        %s660 = scalar_lea.vmem [#allocation10], %s659
        %p661 = pneg %p148
        %p662 = pneg %p145
        %s663 = sand.u32 %s41, 1
        %s664 = scalar_lea.sflag [#allocation12], %s663
        %s665 = sand.u32 %s163, 1
        %s666 = smul.addr %s665, 32
        %s667 = scalar_lea.vmem [#allocation11], %s666
        %p668 = pneg %p176
        %p669 = pneg %p173
        %s670 = sand.u32 %s41, 1
        %s671 = scalar_lea.sflag [#allocation12], %s670
        %s672 = sand.u32 %s199, 1
        %s673 = smul.addr %s672, 8
        %s674 = scalar_lea.vmem [#allocation13], %s673
        %p675 = pneg %p212
        %p676 = pneg %p209
        %s677 = sand.u32 %s41, 1
        %s678 = scalar_lea.sflag [#allocation15], %s677
        %s679 = sand.u32 %s235, 1
        %s680 = smul.addr %s679, 8
        %s681 = scalar_lea.vmem [#allocation14], %s680
        %p682 = pneg %p248
        %p683 = pneg %p245
        %p684 = pneg %p269
        %p685 = pneg %p266
        %p686 = pneg %p290
        %p687 = pneg %p287
        %p688 = pneg %p318
        %p689 = pneg %p315
        %s690 = sand.u32 %s305, 1
        %s691 = scalar_lea.sflag [#allocation7], %s690
        %s692 = sand.u32 %s305, 1
        %s693 = smul.addr %s692, 32
        %s694 = scalar_lea.vmem [#allocation19], %s693
        %p695 = pneg %p346
        %p696 = pneg %p343
        %s697 = sand.u32 %s41, 1
        %s698 = scalar_lea.sflag [#allocation21], %s697
        %s699 = sand.u32 %s333, 1
        %s700 = smul.addr %s699, 32
        %s701 = scalar_lea.vmem [#allocation20], %s700
        %p702 = pneg %p374
        %p703 = pneg %p371
        %s704 = sand.u32 %s41, 1
        %s705 = scalar_lea.sflag [#allocation21], %s704
        %s706 = sand.u32 %s361, 1
        %s707 = scalar_lea.vmem [#allocation22], %s706
        %s708 = smul.u32 4, %s46
        %s709 = smul.u32 %s46, 4
        %s710 = ssub.s32 %s709, 1
        %p711 = scmp.gt.s32.totalorder %s710, 0
        %s712 = scalar_select %p711, %s710, 0
        %s713 = sadd.s32 %s46, 1
        %s714 = smul.u32 %s713, 4
        %p715 = scmp.lt.s32.totalorder %s714, 15
        %s716 = scalar_select %p715, %s714, 15
        %s717 = smul.u32 4, %s46
        %s718 = smul.u32 %s46, 4
        %s719 = ssub.s32 %s718, 1
        %p720 = scmp.gt.s32.totalorder %s719, 0
        %s721 = scalar_select %p720, %s719, 0
        %s722 = sadd.s32 %s46, 1
        %s723 = smul.u32 %s722, 4
        %p724 = scmp.lt.s32.totalorder %s723, 15
        %s725 = scalar_select %p724, %s723, 15
        %s726 = smul.u32 4, %s46
        %s727 = smul.u32 4, %s46
        %vm729 = vcmask 516096
        %vm730 = vsmask.f32 256
        %vm731 = vmand %vm729, %vm730
        %v732 = vld [vmem:[#allocation2] sm:$0x1]
        %v733 = vsel %vm731, 0, %v732
        %734 = vst [vmem:[#allocation2] sm:$0x1] %v733
        %v735 = vld [vmem:[#allocation2 + $0xc] sm:$0x1]
        %v736 = vsel %vm731, 0, %v735
        %737 = vst [vmem:[#allocation2 + $0xc] sm:$0x1] %v736
        %v738 = vld [vmem:[#allocation2 + $0x18] sm:$0x1]
        %v739 = vsel %vm731, 0, %v738
        %740 = vst [vmem:[#allocation2 + $0x18] sm:$0x1] %v739
        %v741 = vld [vmem:[#allocation2 + $0x24] sm:$0x1]
        %v742 = vsel %vm731, 0, %v741
        %743 = vst [vmem:[#allocation2 + $0x24] sm:$0x1] %v742
        %v744 = vld [vmem:[#allocation2 + $0x30] sm:$0x1]
        %v745 = vsel %vm731, 0, %v744
        %746 = vst [vmem:[#allocation2 + $0x30] sm:$0x1] %v745
        %v747 = vld [vmem:[#allocation2 + $0x3c] sm:$0x1]
        %v748 = vsel %vm731, 0, %v747
        %749 = vst [vmem:[#allocation2 + $0x3c] sm:$0x1] %v748
        %vm750 = vsmask.f32 7938
        %vm751 = vmand %vm729, %vm750
        %v752 = vld [vmem:[#allocation2 + $0x8] sm:$0x1]
        %v753 = vsel %vm751, 0, %v752
        %754 = vst [vmem:[#allocation2 + $0x8] sm:$0x1] %v753
        %v755 = vld [vmem:[#allocation2 + $0x14] sm:$0x1]
        %v756 = vsel %vm751, 0, %v755
        %757 = vst [vmem:[#allocation2 + $0x14] sm:$0x1] %v756
        %v758 = vld [vmem:[#allocation2 + $0x20] sm:$0x1]
        %v759 = vsel %vm751, 0, %v758
        %760 = vst [vmem:[#allocation2 + $0x20] sm:$0x1] %v759
        %v761 = vld [vmem:[#allocation2 + $0x2c] sm:$0x1]
        %v762 = vsel %vm751, 0, %v761
        %763 = vst [vmem:[#allocation2 + $0x2c] sm:$0x1] %v762
        %v764 = vld [vmem:[#allocation2 + $0x38] sm:$0x1]
        %v765 = vsel %vm751, 0, %v764
        %766 = vst [vmem:[#allocation2 + $0x38] sm:$0x1] %v765
        %v767 = vld [vmem:[#allocation2 + $0x44] sm:$0x1]
        %v768 = vsel %vm751, 0, %v767
        %769 = vst [vmem:[#allocation2 + $0x44] sm:$0x1] %v768
        %v770 = vld [vmem:[#allocation3] sm:$0x1]
        %v771 = vsel %vm731, 0, %v770
        %772 = vst [vmem:[#allocation3] sm:$0x1] %v771
        %v773 = vld [vmem:[#allocation3 + $0xc] sm:$0x1]
        %v774 = vsel %vm731, 0, %v773
        %775 = vst [vmem:[#allocation3 + $0xc] sm:$0x1] %v774
        %v776 = vld [vmem:[#allocation3 + $0x18] sm:$0x1]
        %v777 = vsel %vm731, 0, %v776
        %778 = vst [vmem:[#allocation3 + $0x18] sm:$0x1] %v777
        %v779 = vld [vmem:[#allocation3 + $0x24] sm:$0x1]
        %v780 = vsel %vm731, 0, %v779
        %781 = vst [vmem:[#allocation3 + $0x24] sm:$0x1] %v780
        %v782 = vld [vmem:[#allocation3 + $0x30] sm:$0x1]
        %v783 = vsel %vm731, 0, %v782
        %784 = vst [vmem:[#allocation3 + $0x30] sm:$0x1] %v783
        %v785 = vld [vmem:[#allocation3 + $0x3c] sm:$0x1]
        %v786 = vsel %vm731, 0, %v785
        %787 = vst [vmem:[#allocation3 + $0x3c] sm:$0x1] %v786
        %v788 = vld [vmem:[#allocation3 + $0x8] sm:$0x1]
        %v789 = vsel %vm751, 0, %v788
        %790 = vst [vmem:[#allocation3 + $0x8] sm:$0x1] %v789
        %v791 = vld [vmem:[#allocation3 + $0x14] sm:$0x1]
        %v792 = vsel %vm751, 0, %v791
        %793 = vst [vmem:[#allocation3 + $0x14] sm:$0x1] %v792
        %v794 = vld [vmem:[#allocation3 + $0x20] sm:$0x1]
        %v795 = vsel %vm751, 0, %v794
        %796 = vst [vmem:[#allocation3 + $0x20] sm:$0x1] %v795
        %v797 = vld [vmem:[#allocation3 + $0x2c] sm:$0x1]
        %v798 = vsel %vm751, 0, %v797
        %799 = vst [vmem:[#allocation3 + $0x2c] sm:$0x1] %v798
        %v800 = vld [vmem:[#allocation3 + $0x38] sm:$0x1]
        %v801 = vsel %vm751, 0, %v800
        %802 = vst [vmem:[#allocation3 + $0x38] sm:$0x1] %v801
        %v803 = vld [vmem:[#allocation3 + $0x44] sm:$0x1]
        %v804 = vsel %vm751, 0, %v803
        %805 = vst [vmem:[#allocation3 + $0x44] sm:$0x1] %v804
        %v806 = vld [vmem:[%s584] sm:$0xf]
        %v807 = vld [vmem:[%s584 + $0x4] sm:$0xf]
        %v808 = vld [vmem:[%s584 + $0x8] sm:$0xf]
        %v809 = vld [vmem:[%s584 + $0xc] sm:$0xf]
        %v810 = vld [vmem:[%s584 + $0x10] sm:$0xf]
        %v811 = vld [vmem:[%s584 + $0x14] sm:$0xf]
        %v812 = vld [vmem:[%s584 + $0x18] sm:$0xf]
        %v813 = vld [vmem:[%s584 + $0x1c] sm:$0xf]
        %vm814 = vsmask.f32 4368
        %vm815 = vmor %vm730, %vm814
        %v817 = vshrl.u32 %v806, 16
        %v819 = vrot.slane %v817, 7
        %v820 = vshll.u32 %v806, 16
        %v822 = vor.u32 %v819, %v820
        %v823 = vrot.slane %v819, 4
        %v825 = vshrl.u32 %v807, 16
        %v827 = vrot.slane %v825, 7
        %v828 = vshll.u32 %v807, 16
        %v830 = vor.u32 %v827, %v828
        %v831 = vsel %vm815, %v823, %v830
        %v832 = vrot.slane %v827, 4
        %v834 = vshrl.u32 %v808, 16
        %v836 = vrot.slane %v834, 7
        %v837 = vshll.u32 %v808, 16
        %v839 = vor.u32 %v836, %v837
        %v840 = vrot.slane %v836, 4
        %v842 = vshrl.u32 %v809, 16
        %v844 = vrot.slane %v842, 7
        %v845 = vshll.u32 %v809, 16
        %v847 = vor.u32 %v844, %v845
        %v848 = vsel %vm815, %v840, %v847
        %v849 = vrot.slane %v844, 4
        %v851 = vshrl.u32 %v810, 16
        %v853 = vrot.slane %v851, 7
        %v854 = vshll.u32 %v810, 16
        %v856 = vor.u32 %v853, %v854
        %v857 = vrot.slane %v853, 4
        %v859 = vshrl.u32 %v811, 16
        %v861 = vrot.slane %v859, 7
        %v862 = vshll.u32 %v811, 16
        %v864 = vor.u32 %v861, %v862
        %v865 = vsel %vm815, %v857, %v864
        %v866 = vrot.slane %v861, 4
        %v868 = vshrl.u32 %v812, 16
        %v870 = vrot.slane %v868, 7
        %v871 = vshll.u32 %v812, 16
        %v873 = vor.u32 %v870, %v871
        %v874 = vrot.slane %v870, 4
        %v876 = vshrl.u32 %v813, 16
        %v878 = vrot.slane %v876, 7
        %v879 = vshll.u32 %v813, 16
        %v881 = vor.u32 %v878, %v879
        %v882 = vsel %vm815, %v874, %v881
        %v883 = vrot.slane %v878, 4
        %s896 = scalar_lea.vmem [#allocation2], 12
        %vm897 = vcmask 519168
        %vm898 = vmand %vm897, %vm750
        %v899 = vld [vmem:[%s896] sm:$0xf]
        %v900 = vsel %vm898, %v822, %v899
        %901 = vst [vmem:[%s896] sm:$0xf] %v900
        %vm902 = vcmask 519168
        %903 = vst.msk [vmem:[%s896 + $0x4] sm:$0xf] %vm902, %v831
        %v904 = vld [vmem:[%s896 + $0x8] sm:$0x1]
        %v905 = vsel %vm731, %v832, %v904
        %906 = vst [vmem:[%s896 + $0x8] sm:$0x1] %v905
        %v907 = vld [vmem:[%s896 + $0xc] sm:$0xf]
        %v908 = vsel %vm898, %v839, %v907
        %909 = vst [vmem:[%s896 + $0xc] sm:$0xf] %v908
        %910 = vst.msk [vmem:[%s896 + $0x10] sm:$0xf] %vm902, %v848
        %v911 = vld [vmem:[%s896 + $0x14] sm:$0x1]
        %v912 = vsel %vm731, %v849, %v911
        %913 = vst [vmem:[%s896 + $0x14] sm:$0x1] %v912
        %v914 = vld [vmem:[%s896 + $0x18] sm:$0xf]
        %v915 = vsel %vm898, %v856, %v914
        %916 = vst [vmem:[%s896 + $0x18] sm:$0xf] %v915
        %917 = vst.msk [vmem:[%s896 + $0x1c] sm:$0xf] %vm902, %v865
        %v918 = vld [vmem:[%s896 + $0x20] sm:$0x1]
        %v919 = vsel %vm731, %v866, %v918
        %920 = vst [vmem:[%s896 + $0x20] sm:$0x1] %v919
        %v921 = vld [vmem:[%s896 + $0x24] sm:$0xf]
        %v922 = vsel %vm898, %v873, %v921
        %923 = vst [vmem:[%s896 + $0x24] sm:$0xf] %v922
        %924 = vst.msk [vmem:[%s896 + $0x28] sm:$0xf] %vm902, %v882
        %v925 = vld [vmem:[%s896 + $0x2c] sm:$0x1]
        %v926 = vsel %vm731, %v883, %v925
        %927 = vst [vmem:[%s896 + $0x2c] sm:$0x1] %v926
        %v928 = vld [vmem:[%s611] sm:$0xf]
        %v929 = vld [vmem:[%s611 + $0x4] sm:$0xf]
        %v930 = vld [vmem:[%s611 + $0x8] sm:$0xf]
        %v931 = vld [vmem:[%s611 + $0xc] sm:$0xf]
        %v932 = vld [vmem:[%s611 + $0x10] sm:$0xf]
        %v933 = vld [vmem:[%s611 + $0x14] sm:$0xf]
        %v934 = vld [vmem:[%s611 + $0x18] sm:$0xf]
        %v935 = vld [vmem:[%s611 + $0x1c] sm:$0xf]
        %v937 = vshrl.u32 %v928, 16
        %v939 = vrot.slane %v937, 7
        %v940 = vshll.u32 %v928, 16
        %v942 = vor.u32 %v939, %v940
        %v943 = vrot.slane %v939, 4
        %v945 = vshrl.u32 %v929, 16
        %v947 = vrot.slane %v945, 7
        %v948 = vshll.u32 %v929, 16
        %v950 = vor.u32 %v947, %v948
        %v951 = vsel %vm815, %v943, %v950
        %v952 = vrot.slane %v947, 4
        %v954 = vshrl.u32 %v930, 16
        %v956 = vrot.slane %v954, 7
        %v957 = vshll.u32 %v930, 16
        %v959 = vor.u32 %v956, %v957
        %v960 = vrot.slane %v956, 4
        %v962 = vshrl.u32 %v931, 16
        %v964 = vrot.slane %v962, 7
        %v965 = vshll.u32 %v931, 16
        %v967 = vor.u32 %v964, %v965
        %v968 = vsel %vm815, %v960, %v967
        %v969 = vrot.slane %v964, 4
        %v971 = vshrl.u32 %v932, 16
        %v973 = vrot.slane %v971, 7
        %v974 = vshll.u32 %v932, 16
        %v976 = vor.u32 %v973, %v974
        %v977 = vrot.slane %v973, 4
        %v979 = vshrl.u32 %v933, 16
        %v981 = vrot.slane %v979, 7
        %v982 = vshll.u32 %v933, 16
        %v984 = vor.u32 %v981, %v982
        %v985 = vsel %vm815, %v977, %v984
        %v986 = vrot.slane %v981, 4
        %v988 = vshrl.u32 %v934, 16
        %v990 = vrot.slane %v988, 7
        %v991 = vshll.u32 %v934, 16
        %v993 = vor.u32 %v990, %v991
        %v994 = vrot.slane %v990, 4
        %v996 = vshrl.u32 %v935, 16
        %v998 = vrot.slane %v996, 7
        %v999 = vshll.u32 %v935, 16
        %v1001 = vor.u32 %v998, %v999
        %v1002 = vsel %vm815, %v994, %v1001
        %v1003 = vrot.slane %v998, 4
        %s1016 = scalar_lea.vmem [#allocation3], 12
        %v1017 = vld [vmem:[%s1016] sm:$0xf]
        %v1018 = vsel %vm898, %v942, %v1017
        %1019 = vst [vmem:[%s1016] sm:$0xf] %v1018
        %1020 = vst.msk [vmem:[%s1016 + $0x4] sm:$0xf] %vm902, %v951
        %v1021 = vld [vmem:[%s1016 + $0x8] sm:$0x1]
        %v1022 = vsel %vm731, %v952, %v1021
        %1023 = vst [vmem:[%s1016 + $0x8] sm:$0x1] %v1022
        %v1024 = vld [vmem:[%s1016 + $0xc] sm:$0xf]
        %v1025 = vsel %vm898, %v959, %v1024
        %1026 = vst [vmem:[%s1016 + $0xc] sm:$0xf] %v1025
        %1027 = vst.msk [vmem:[%s1016 + $0x10] sm:$0xf] %vm902, %v968
        %v1028 = vld [vmem:[%s1016 + $0x14] sm:$0x1]
        %v1029 = vsel %vm731, %v969, %v1028
        %1030 = vst [vmem:[%s1016 + $0x14] sm:$0x1] %v1029
        %v1031 = vld [vmem:[%s1016 + $0x18] sm:$0xf]
        %v1032 = vsel %vm898, %v976, %v1031
        %1033 = vst [vmem:[%s1016 + $0x18] sm:$0xf] %v1032
        %1034 = vst.msk [vmem:[%s1016 + $0x1c] sm:$0xf] %vm902, %v985
        %v1035 = vld [vmem:[%s1016 + $0x20] sm:$0x1]
        %v1036 = vsel %vm731, %v986, %v1035
        %1037 = vst [vmem:[%s1016 + $0x20] sm:$0x1] %v1036
        %v1038 = vld [vmem:[%s1016 + $0x24] sm:$0xf]
        %v1039 = vsel %vm898, %v993, %v1038
        %1040 = vst [vmem:[%s1016 + $0x24] sm:$0xf] %v1039
        %1041 = vst.msk [vmem:[%s1016 + $0x28] sm:$0xf] %vm902, %v1002
        %v1042 = vld [vmem:[%s1016 + $0x2c] sm:$0x1]
        %v1043 = vsel %vm731, %v1003, %v1042
        %1044 = vst [vmem:[%s1016 + $0x2c] sm:$0x1] %v1043
        %p1045 = scmp.eq.s32.totalorder %s46, 0
        // Predicated region
        $region85: #{conv3x3_pair.1} parent=51 // pred_check
          %p1046 = pneg %p1045
        $region86: #{conv3x3_pair.1} parent=51 // pred_check_branch
          %1048 = sbr.rel (%p1046) target = $region88
        $region87: #{conv3x3_pair.1} parent=51 // pred_region
          %v1049 = vld [vmem:[#allocation2] sm:$0xf]
          %v1050 = vsel %vm898, 0, %v1049
          %1051 = vst [vmem:[#allocation2] sm:$0xf] %v1050
          %1052 = vst.msk [vmem:[#allocation2 + $0x4] sm:$0xf] %vm902, 0
          %v1053 = vld [vmem:[#allocation2 + $0x8] sm:$0x1]
          %v1054 = vsel %vm731, 0, %v1053
          %1055 = vst [vmem:[#allocation2 + $0x8] sm:$0x1] %v1054
          %v1056 = vld [vmem:[#allocation3] sm:$0xf]
          %v1057 = vsel %vm898, 0, %v1056
          %1058 = vst [vmem:[#allocation3] sm:$0xf] %v1057
          %1059 = vst.msk [vmem:[#allocation3 + $0x4] sm:$0xf] %vm902, 0
          %v1060 = vld [vmem:[#allocation3 + $0x8] sm:$0x1]
          %v1061 = vsel %vm731, 0, %v1060
          %1062 = vst [vmem:[#allocation3 + $0x8] sm:$0x1] %v1061
        $region88: #{conv3x3_pair.1} parent=51 // pred_fallthru
          _
        %p1063 = scmp.gt.s32.totalorder %s46, 0
        // Predicated region
        $region89: #{conv3x3_pair.1} parent=51 // pred_check
          %p1064 = pneg %p1063
        $region90: #{conv3x3_pair.1} parent=51 // pred_check_branch
          %1066 = sbr.rel (%p1064) target = $region92
        $region91: #{conv3x3_pair.1} parent=51 // pred_region
          %v1067 = vld [vmem:[%s593] sm:$0xf]
          %v1068 = vld [vmem:[%s593 + $0x4] sm:$0xf]
          %v1070 = vshrl.u32 %v1067, 16
          %v1072 = vrot.slane %v1070, 7
          %v1073 = vshll.u32 %v1067, 16
          %v1075 = vor.u32 %v1072, %v1073
          %v1076 = vrot.slane %v1072, 4
          %v1078 = vshrl.u32 %v1068, 16
          %v1080 = vrot.slane %v1078, 7
          %v1081 = vshll.u32 %v1068, 16
          %v1083 = vor.u32 %v1080, %v1081
          %v1084 = vsel %vm815, %v1076, %v1083
          %v1085 = vrot.slane %v1080, 4
          %v1089 = vld [vmem:[#allocation2] sm:$0xf]
          %v1090 = vsel %vm898, %v1075, %v1089
          %1091 = vst [vmem:[#allocation2] sm:$0xf] %v1090
          %1092 = vst.msk [vmem:[#allocation2 + $0x4] sm:$0xf] %vm902, %v1084
          %v1093 = vld [vmem:[#allocation2 + $0x8] sm:$0x1]
          %v1094 = vsel %vm731, %v1085, %v1093
          %1095 = vst [vmem:[#allocation2 + $0x8] sm:$0x1] %v1094
          %v1096 = vld [vmem:[%s620] sm:$0xf]
          %v1097 = vld [vmem:[%s620 + $0x4] sm:$0xf]
          %v1099 = vshrl.u32 %v1096, 16
          %v1101 = vrot.slane %v1099, 7
          %v1102 = vshll.u32 %v1096, 16
          %v1104 = vor.u32 %v1101, %v1102
          %v1105 = vrot.slane %v1101, 4
          %v1107 = vshrl.u32 %v1097, 16
          %v1109 = vrot.slane %v1107, 7
          %v1110 = vshll.u32 %v1097, 16
          %v1112 = vor.u32 %v1109, %v1110
          %v1113 = vsel %vm815, %v1105, %v1112
          %v1114 = vrot.slane %v1109, 4
          %v1118 = vld [vmem:[#allocation3] sm:$0xf]
          %v1119 = vsel %vm898, %v1104, %v1118
          %1120 = vst [vmem:[#allocation3] sm:$0xf] %v1119
          %1121 = vst.msk [vmem:[#allocation3 + $0x4] sm:$0xf] %vm902, %v1113
          %v1122 = vld [vmem:[#allocation3 + $0x8] sm:$0x1]
          %v1123 = vsel %vm731, %v1114, %v1122
          %1124 = vst [vmem:[#allocation3 + $0x8] sm:$0x1] %v1123
        $region92: #{conv3x3_pair.1} parent=51 // pred_fallthru
          _
        %p1125 = scmp.eq.s32.totalorder %s46, 3
        // Predicated region
        $region93: #{conv3x3_pair.1} parent=51 // pred_check
          %p1126 = pneg %p1125
        $region94: #{conv3x3_pair.1} parent=51 // pred_check_branch
          %1128 = sbr.rel (%p1126) target = $region96
        $region95: #{conv3x3_pair.1} parent=51 // pred_region
          %s1129 = scalar_lea.vmem [#allocation2], 60
          %v1130 = vld [vmem:[%s1129] sm:$0xf]
          %v1131 = vsel %vm898, 0, %v1130
          %1132 = vst [vmem:[%s1129] sm:$0xf] %v1131
          %1133 = vst.msk [vmem:[%s1129 + $0x4] sm:$0xf] %vm902, 0
          %v1134 = vld [vmem:[%s1129 + $0x8] sm:$0x1]
          %v1135 = vsel %vm731, 0, %v1134
          %1136 = vst [vmem:[%s1129 + $0x8] sm:$0x1] %v1135
          %s1137 = scalar_lea.vmem [#allocation3], 60
          %v1138 = vld [vmem:[%s1137] sm:$0xf]
          %v1139 = vsel %vm898, 0, %v1138
          %1140 = vst [vmem:[%s1137] sm:$0xf] %v1139
          %1141 = vst.msk [vmem:[%s1137 + $0x4] sm:$0xf] %vm902, 0
          %v1142 = vld [vmem:[%s1137 + $0x8] sm:$0x1]
          %v1143 = vsel %vm731, 0, %v1142
          %1144 = vst [vmem:[%s1137 + $0x8] sm:$0x1] %v1143
        $region96: #{conv3x3_pair.1} parent=51 // pred_fallthru
          _
        %p1145 = scmp.lt.s32.totalorder %s46, 3
        // Predicated region
        $region97: #{conv3x3_pair.1} parent=51 // pred_check
          %p1146 = pneg %p1145
        $region98: #{conv3x3_pair.1} parent=51 // pred_check_branch
          %1148 = sbr.rel (%p1146) target = $region100
        $region99: #{conv3x3_pair.1} parent=51 // pred_region
          %v1149 = vld [vmem:[%s602] sm:$0xf]
          %v1150 = vld [vmem:[%s602 + $0x4] sm:$0xf]
          %v1152 = vshrl.u32 %v1149, 16
          %v1154 = vrot.slane %v1152, 7
          %v1155 = vshll.u32 %v1149, 16
          %v1157 = vor.u32 %v1154, %v1155
          %v1158 = vrot.slane %v1154, 4
          %v1160 = vshrl.u32 %v1150, 16
          %v1162 = vrot.slane %v1160, 7
          %v1163 = vshll.u32 %v1150, 16
          %v1165 = vor.u32 %v1162, %v1163
          %v1166 = vsel %vm815, %v1158, %v1165
          %v1167 = vrot.slane %v1162, 4
          %s1171 = scalar_lea.vmem [#allocation2], 60
          %v1172 = vld [vmem:[%s1171] sm:$0xf]
          %v1173 = vsel %vm898, %v1157, %v1172
          %1174 = vst [vmem:[%s1171] sm:$0xf] %v1173
          %1175 = vst.msk [vmem:[%s1171 + $0x4] sm:$0xf] %vm902, %v1166
          %v1176 = vld [vmem:[%s1171 + $0x8] sm:$0x1]
          %v1177 = vsel %vm731, %v1167, %v1176
          %1178 = vst [vmem:[%s1171 + $0x8] sm:$0x1] %v1177
          %v1179 = vld [vmem:[%s629] sm:$0xf]
          %v1180 = vld [vmem:[%s629 + $0x4] sm:$0xf]
          %v1182 = vshrl.u32 %v1179, 16
          %v1184 = vrot.slane %v1182, 7
          %v1185 = vshll.u32 %v1179, 16
          %v1187 = vor.u32 %v1184, %v1185
          %v1188 = vrot.slane %v1184, 4
          %v1190 = vshrl.u32 %v1180, 16
          %v1192 = vrot.slane %v1190, 7
          %v1193 = vshll.u32 %v1180, 16
          %v1195 = vor.u32 %v1192, %v1193
          %v1196 = vsel %vm815, %v1188, %v1195
          %v1197 = vrot.slane %v1192, 4
          %s1201 = scalar_lea.vmem [#allocation3], 60
          %v1202 = vld [vmem:[%s1201] sm:$0xf]
          %v1203 = vsel %vm898, %v1187, %v1202
          %1204 = vst [vmem:[%s1201] sm:$0xf] %v1203
          %1205 = vst.msk [vmem:[%s1201 + $0x4] sm:$0xf] %vm902, %v1196
          %v1206 = vld [vmem:[%s1201 + $0x8] sm:$0x1]
          %v1207 = vsel %vm731, %v1197, %v1206
          %1208 = vst [vmem:[%s1201 + $0x8] sm:$0x1] %v1207
        $region100: #{conv3x3_pair.1} parent=51 // pred_fallthru
          _
        %v1209 = vld [vmem:[#allocation2] sm:$0xf]
        %v1210 = vld [vmem:[#allocation2 + $0x4] sm:$0xf]
        %v1211 = vld [vmem:[#allocation2 + $0xc] sm:$0xf]
        %v1212 = vld [vmem:[#allocation2 + $0x10] sm:$0xf]
        %v1213 = vld [vmem:[#allocation2 + $0x18] sm:$0xf]
        %v1214 = vld [vmem:[#allocation2 + $0x1c] sm:$0xf]
        %v1215 = vld [vmem:[#allocation2 + $0x24] sm:$0xf]
        %v1216 = vld [vmem:[#allocation2 + $0x28] sm:$0xf]
        %v1225 = vunpack.c.l.b16 %v1209
        %v1226 = vunpack.c.l.b16 %v1210
        %v1227 = vunpack.c.l.b16 %v1211
        %v1228 = vunpack.c.l.b16 %v1212
        %v1229 = vunpack.c.l.b16 %v1213
        %v1230 = vunpack.c.l.b16 %v1214
        %v1231 = vunpack.c.l.b16 %v1215
        %v1232 = vunpack.c.l.b16 %v1216
        %v1233 = vpack.c.b16 %v1226, %v1225
        %v1234 = vpack.c.b16 %v1228, %v1227
        %v1235 = vpack.c.b16 %v1230, %v1229
        %v1236 = vpack.c.b16 %v1232, %v1231
        %vm1241 = vcmask 523264
        %1242 = vst.msk [vmem:[#allocation4] sm:$0xff] %vm1241, %v1233
        %1243 = vst.msk [vmem:[#allocation4 + $0x28] sm:$0xff] %vm1241, %v1234
        %1244 = vst.msk [vmem:[#allocation4 + $0x50] sm:$0xff] %vm1241, %v1235
        %1245 = vst.msk [vmem:[#allocation4 + $0x78] sm:$0xff] %vm1241, %v1236
        %v1246 = vld [vmem:[#allocation3] sm:$0xf]
        %v1247 = vld [vmem:[#allocation3 + $0x4] sm:$0xf]
        %v1248 = vld [vmem:[#allocation3 + $0xc] sm:$0xf]
        %v1249 = vld [vmem:[#allocation3 + $0x10] sm:$0xf]
        %v1250 = vld [vmem:[#allocation3 + $0x18] sm:$0xf]
        %v1251 = vld [vmem:[#allocation3 + $0x1c] sm:$0xf]
        %v1252 = vld [vmem:[#allocation3 + $0x24] sm:$0xf]
        %v1253 = vld [vmem:[#allocation3 + $0x28] sm:$0xf]
        %v1262 = vunpack.c.l.b16 %v1246
        %v1263 = vunpack.c.l.b16 %v1247
        %v1264 = vunpack.c.l.b16 %v1248
        %v1265 = vunpack.c.l.b16 %v1249
        %v1266 = vunpack.c.l.b16 %v1250
        %v1267 = vunpack.c.l.b16 %v1251
        %v1268 = vunpack.c.l.b16 %v1252
        %v1269 = vunpack.c.l.b16 %v1253
        %v1270 = vpack.c.b16 %v1263, %v1262
        %v1271 = vpack.c.b16 %v1265, %v1264
        %v1272 = vpack.c.b16 %v1267, %v1266
        %v1273 = vpack.c.b16 %v1269, %v1268
        %1278 = vst.msk [vmem:[#allocation4 + $0xa0] sm:$0xff] %vm1241, %v1270
        %1279 = vst.msk [vmem:[#allocation4 + $0xc8] sm:$0xff] %vm1241, %v1271
        %1280 = vst.msk [vmem:[#allocation4 + $0xf0] sm:$0xff] %vm1241, %v1272
        %1281 = vst.msk [vmem:[#allocation4 + $0x118] sm:$0xff] %vm1241, %v1273
        %v1282 = vld [vmem:[#allocation2] sm:$0xf]
        %v1283 = vld [vmem:[#allocation2 + $0x4] sm:$0xf]
        %v1284 = vld [vmem:[#allocation2 + $0x8] sm:$0x1]
        %v1285 = vld [vmem:[#allocation2 + $0xc] sm:$0xf]
        %v1286 = vld [vmem:[#allocation2 + $0x10] sm:$0xf]
        %v1287 = vld [vmem:[#allocation2 + $0x14] sm:$0x1]
        %v1288 = vld [vmem:[#allocation2 + $0x18] sm:$0xf]
        %v1289 = vld [vmem:[#allocation2 + $0x1c] sm:$0xf]
        %v1290 = vld [vmem:[#allocation2 + $0x20] sm:$0x1]
        %v1291 = vld [vmem:[#allocation2 + $0x24] sm:$0xf]
        %v1292 = vld [vmem:[#allocation2 + $0x28] sm:$0xf]
        %v1293 = vld [vmem:[#allocation2 + $0x2c] sm:$0x1]
        %vm1294 = vsmask.f32 3328
        %vm1295 = vsmask.f32 7440
        %vm1296 = vmor %vm1294, %vm1295
        %v1298 = vshrl.u32 %v1282, 16
        %v1300 = vrot.slane %v1298, 4
        %v1301 = vshll.u32 %v1282, 16
        %v1303 = vrot.slane %v1301, 5
        %v1304 = vor.u32 %v1300, %v1303
        %v1305 = vrot.slane %v1304, 4
        %v1307 = vshll.u32 %v1283, 16
        %v1309 = vrot.slane %v1307, 5
        %v1310 = vsel %vm1296, %v1305, %v1309
        %v1311 = vshrl.u32 %v1283, 16
        %v1313 = vrot.slane %v1311, 4
        %v1314 = vor.u32 %v1313, %v1309
        %v1315 = vrot.slane %v1314, 4
        %v1317 = vshll.u32 %v1284, 16
        %v1319 = vrot.slane %v1317, 5
        %v1320 = vsel %vm1296, %v1315, %v1319
        %v1322 = vshrl.u32 %v1285, 16
        %v1324 = vrot.slane %v1322, 4
        %v1325 = vshll.u32 %v1285, 16
        %v1327 = vrot.slane %v1325, 5
        %v1328 = vor.u32 %v1324, %v1327
        %v1329 = vrot.slane %v1328, 4
        %v1331 = vshll.u32 %v1286, 16
        %v1333 = vrot.slane %v1331, 5
        %v1334 = vsel %vm1296, %v1329, %v1333
        %v1335 = vshrl.u32 %v1286, 16
        %v1337 = vrot.slane %v1335, 4
        %v1338 = vor.u32 %v1337, %v1333
        %v1339 = vrot.slane %v1338, 4
        %v1341 = vshll.u32 %v1287, 16
        %v1343 = vrot.slane %v1341, 5
        %v1344 = vsel %vm1296, %v1339, %v1343
        %v1346 = vshrl.u32 %v1288, 16
        %v1348 = vrot.slane %v1346, 4
        %v1349 = vshll.u32 %v1288, 16
        %v1351 = vrot.slane %v1349, 5
        %v1352 = vor.u32 %v1348, %v1351
        %v1353 = vrot.slane %v1352, 4
        %v1355 = vshll.u32 %v1289, 16
        %v1357 = vrot.slane %v1355, 5
        %v1358 = vsel %vm1296, %v1353, %v1357
        %v1359 = vshrl.u32 %v1289, 16
        %v1361 = vrot.slane %v1359, 4
        %v1362 = vor.u32 %v1361, %v1357
        %v1363 = vrot.slane %v1362, 4
        %v1365 = vshll.u32 %v1290, 16
        %v1367 = vrot.slane %v1365, 5
        %v1368 = vsel %vm1296, %v1363, %v1367
        %v1370 = vshrl.u32 %v1291, 16
        %v1372 = vrot.slane %v1370, 4
        %v1373 = vshll.u32 %v1291, 16
        %v1375 = vrot.slane %v1373, 5
        %v1376 = vor.u32 %v1372, %v1375
        %v1377 = vrot.slane %v1376, 4
        %v1379 = vshll.u32 %v1292, 16
        %v1381 = vrot.slane %v1379, 5
        %v1382 = vsel %vm1296, %v1377, %v1381
        %v1383 = vshrl.u32 %v1292, 16
        %v1385 = vrot.slane %v1383, 4
        %v1386 = vor.u32 %v1385, %v1381
        %v1387 = vrot.slane %v1386, 4
        %v1389 = vshll.u32 %v1293, 16
        %v1391 = vrot.slane %v1389, 5
        %v1392 = vsel %vm1296, %v1387, %v1391
        %v1393 = vunpack.c.l.b16 %v1310
        %v1394 = vunpack.c.l.b16 %v1320
        %v1395 = vunpack.c.l.b16 %v1334
        %v1396 = vunpack.c.l.b16 %v1344
        %v1397 = vunpack.c.l.b16 %v1358
        %v1398 = vunpack.c.l.b16 %v1368
        %v1399 = vunpack.c.l.b16 %v1382
        %v1400 = vunpack.c.l.b16 %v1392
        %v1401 = vpack.c.b16 %v1394, %v1393
        %v1402 = vpack.c.b16 %v1396, %v1395
        %v1403 = vpack.c.b16 %v1398, %v1397
        %v1404 = vpack.c.b16 %v1400, %v1399
        %1405 = vrot.lane.b32.xlu0 %v1401, 64
        %v1406 = vpop.permute.xlu0 %1405
        %1407 = vrot.lane.b32.xlu0 %v1402, 64
        %v1408 = vpop.permute.xlu0 %1407
        %1409 = vrot.lane.b32.xlu0 %v1403, 64
        %v1410 = vpop.permute.xlu0 %1409
        %1411 = vrot.lane.b32.xlu0 %v1404, 64
        %v1412 = vpop.permute.xlu0 %1411
        %vm1417 = vcmask 1048064
        %1418 = vst.msk [vmem:[#allocation4] sm:$0xff] %vm1417, %v1406
        %1419 = vst.msk [vmem:[#allocation4 + $0x28] sm:$0xff] %vm1417, %v1408
        %1420 = vst.msk [vmem:[#allocation4 + $0x50] sm:$0xff] %vm1417, %v1410
        %1421 = vst.msk [vmem:[#allocation4 + $0x78] sm:$0xff] %vm1417, %v1412
        %v1422 = vld [vmem:[#allocation3] sm:$0xf]
        %v1423 = vld [vmem:[#allocation3 + $0x4] sm:$0xf]
        %v1424 = vld [vmem:[#allocation3 + $0x8] sm:$0x1]
        %v1425 = vld [vmem:[#allocation3 + $0xc] sm:$0xf]
        %v1426 = vld [vmem:[#allocation3 + $0x10] sm:$0xf]
        %v1427 = vld [vmem:[#allocation3 + $0x14] sm:$0x1]
        %v1428 = vld [vmem:[#allocation3 + $0x18] sm:$0xf]
        %v1429 = vld [vmem:[#allocation3 + $0x1c] sm:$0xf]
        %v1430 = vld [vmem:[#allocation3 + $0x20] sm:$0x1]
        %v1431 = vld [vmem:[#allocation3 + $0x24] sm:$0xf]
        %v1432 = vld [vmem:[#allocation3 + $0x28] sm:$0xf]
        %v1433 = vld [vmem:[#allocation3 + $0x2c] sm:$0x1]
        %v1435 = vshrl.u32 %v1422, 16
        %v1437 = vrot.slane %v1435, 4
        %v1438 = vshll.u32 %v1422, 16
        %v1440 = vrot.slane %v1438, 5
        %v1441 = vor.u32 %v1437, %v1440
        %v1442 = vrot.slane %v1441, 4
        %v1444 = vshll.u32 %v1423, 16
        %v1446 = vrot.slane %v1444, 5
        %v1447 = vsel %vm1296, %v1442, %v1446
        %v1448 = vshrl.u32 %v1423, 16
        %v1450 = vrot.slane %v1448, 4
        %v1451 = vor.u32 %v1450, %v1446
        %v1452 = vrot.slane %v1451, 4
        %v1454 = vshll.u32 %v1424, 16
        %v1456 = vrot.slane %v1454, 5
        %v1457 = vsel %vm1296, %v1452, %v1456
        %v1459 = vshrl.u32 %v1425, 16
        %v1461 = vrot.slane %v1459, 4
        %v1462 = vshll.u32 %v1425, 16
        %v1464 = vrot.slane %v1462, 5
        %v1465 = vor.u32 %v1461, %v1464
        %v1466 = vrot.slane %v1465, 4
        %v1468 = vshll.u32 %v1426, 16
        %v1470 = vrot.slane %v1468, 5
        %v1471 = vsel %vm1296, %v1466, %v1470
        %v1472 = vshrl.u32 %v1426, 16
        %v1474 = vrot.slane %v1472, 4
        %v1475 = vor.u32 %v1474, %v1470
        %v1476 = vrot.slane %v1475, 4
        %v1478 = vshll.u32 %v1427, 16
        %v1480 = vrot.slane %v1478, 5
        %v1481 = vsel %vm1296, %v1476, %v1480
        %v1483 = vshrl.u32 %v1428, 16
        %v1485 = vrot.slane %v1483, 4
        %v1486 = vshll.u32 %v1428, 16
        %v1488 = vrot.slane %v1486, 5
        %v1489 = vor.u32 %v1485, %v1488
        %v1490 = vrot.slane %v1489, 4
        %v1492 = vshll.u32 %v1429, 16
        %v1494 = vrot.slane %v1492, 5
        %v1495 = vsel %vm1296, %v1490, %v1494
        %v1496 = vshrl.u32 %v1429, 16
        %v1498 = vrot.slane %v1496, 4
        %v1499 = vor.u32 %v1498, %v1494
        %v1500 = vrot.slane %v1499, 4
        %v1502 = vshll.u32 %v1430, 16
        %v1504 = vrot.slane %v1502, 5
        %v1505 = vsel %vm1296, %v1500, %v1504
        %v1507 = vshrl.u32 %v1431, 16
        %v1509 = vrot.slane %v1507, 4
        %v1510 = vshll.u32 %v1431, 16
        %v1512 = vrot.slane %v1510, 5
        %v1513 = vor.u32 %v1509, %v1512
        %v1514 = vrot.slane %v1513, 4
        %v1516 = vshll.u32 %v1432, 16
        %v1518 = vrot.slane %v1516, 5
        %v1519 = vsel %vm1296, %v1514, %v1518
        %v1520 = vshrl.u32 %v1432, 16
        %v1522 = vrot.slane %v1520, 4
        %v1523 = vor.u32 %v1522, %v1518
        %v1524 = vrot.slane %v1523, 4
        %v1526 = vshll.u32 %v1433, 16
        %v1528 = vrot.slane %v1526, 5
        %v1529 = vsel %vm1296, %v1524, %v1528
        %v1530 = vunpack.c.l.b16 %v1447
        %v1531 = vunpack.c.l.b16 %v1457
        %v1532 = vunpack.c.l.b16 %v1471
        %v1533 = vunpack.c.l.b16 %v1481
        %v1534 = vunpack.c.l.b16 %v1495
        %v1535 = vunpack.c.l.b16 %v1505
        %v1536 = vunpack.c.l.b16 %v1519
        %v1537 = vunpack.c.l.b16 %v1529
        %v1538 = vpack.c.b16 %v1531, %v1530
        %v1539 = vpack.c.b16 %v1533, %v1532
        %v1540 = vpack.c.b16 %v1535, %v1534
        %v1541 = vpack.c.b16 %v1537, %v1536
        %1542 = vrot.lane.b32.xlu0 %v1538, 64
        %v1543 = vpop.permute.xlu0 %1542
        %1544 = vrot.lane.b32.xlu0 %v1539, 64
        %v1545 = vpop.permute.xlu0 %1544
        %1546 = vrot.lane.b32.xlu0 %v1540, 64
        %v1547 = vpop.permute.xlu0 %1546
        %1548 = vrot.lane.b32.xlu0 %v1541, 64
        %v1549 = vpop.permute.xlu0 %1548
        %1554 = vst.msk [vmem:[#allocation4 + $0xa0] sm:$0xff] %vm1417, %v1543
        %1555 = vst.msk [vmem:[#allocation4 + $0xc8] sm:$0xff] %vm1417, %v1545
        %1556 = vst.msk [vmem:[#allocation4 + $0xf0] sm:$0xff] %vm1417, %v1547
        %1557 = vst.msk [vmem:[#allocation4 + $0x118] sm:$0xff] %vm1417, %v1549
        %v1558 = vld [vmem:[#allocation2] sm:$0xe]
        %v1559 = vld [vmem:[#allocation2 + $0x4] sm:$0xf]
        %v1560 = vld [vmem:[#allocation2 + $0x8] sm:$0x1]
        %v1561 = vld [vmem:[#allocation2 + $0xc] sm:$0xe]
        %v1562 = vld [vmem:[#allocation2 + $0x10] sm:$0xf]
        %v1563 = vld [vmem:[#allocation2 + $0x14] sm:$0x1]
        %v1564 = vld [vmem:[#allocation2 + $0x18] sm:$0xe]
        %v1565 = vld [vmem:[#allocation2 + $0x1c] sm:$0xf]
        %v1566 = vld [vmem:[#allocation2 + $0x20] sm:$0x1]
        %v1567 = vld [vmem:[#allocation2 + $0x24] sm:$0xe]
        %v1568 = vld [vmem:[#allocation2 + $0x28] sm:$0xf]
        %v1569 = vld [vmem:[#allocation2 + $0x2c] sm:$0x1]
        %vm1582 = vcmask 1042432
        %vm1583 = vcmask 1046532
        %vm1584 = vmor %vm1582, %vm1583
        %v1585 = vrot.slane %v1558, 5
        %v1586 = vrot.slane %v1585, 4
        %v1587 = vrot.slane %v1559, 5
        %v1588 = vsel %vm1584, %v1586, %v1587
        %v1589 = vrot.slane %v1587, 4
        %v1590 = vrot.slane %v1560, 5
        %v1591 = vsel %vm1584, %v1589, %v1590
        %v1592 = vrot.slane %v1561, 5
        %v1593 = vrot.slane %v1592, 4
        %v1594 = vrot.slane %v1562, 5
        %v1595 = vsel %vm1584, %v1593, %v1594
        %v1596 = vrot.slane %v1594, 4
        %v1597 = vrot.slane %v1563, 5
        %v1598 = vsel %vm1584, %v1596, %v1597
        %v1599 = vrot.slane %v1564, 5
        %v1600 = vrot.slane %v1599, 4
        %v1601 = vrot.slane %v1565, 5
        %v1602 = vsel %vm1584, %v1600, %v1601
        %v1603 = vrot.slane %v1601, 4
        %v1604 = vrot.slane %v1566, 5
        %v1605 = vsel %vm1584, %v1603, %v1604
        %v1606 = vrot.slane %v1567, 5
        %v1607 = vrot.slane %v1606, 4
        %v1608 = vrot.slane %v1568, 5
        %v1609 = vsel %vm1584, %v1607, %v1608
        %v1610 = vrot.slane %v1608, 4
        %v1611 = vrot.slane %v1569, 5
        %v1612 = vsel %vm1584, %v1610, %v1611
        %v1613 = vunpack.c.l.b16 %v1588
        %v1614 = vunpack.c.l.b16 %v1591
        %v1615 = vunpack.c.l.b16 %v1595
        %v1616 = vunpack.c.l.b16 %v1598
        %v1617 = vunpack.c.l.b16 %v1602
        %v1618 = vunpack.c.l.b16 %v1605
        %v1619 = vunpack.c.l.b16 %v1609
        %v1620 = vunpack.c.l.b16 %v1612
        %v1621 = vpack.c.b16 %v1614, %v1613
        %v1622 = vpack.c.b16 %v1616, %v1615
        %v1623 = vpack.c.b16 %v1618, %v1617
        %v1624 = vpack.c.b16 %v1620, %v1619
        %1629 = vst.msk [vmem:[#allocation4 + $0x8] sm:$0xff] %vm1241, %v1621
        %1630 = vst.msk [vmem:[#allocation4 + $0x30] sm:$0xff] %vm1241, %v1622
        %1631 = vst.msk [vmem:[#allocation4 + $0x58] sm:$0xff] %vm1241, %v1623
        %1632 = vst.msk [vmem:[#allocation4 + $0x80] sm:$0xff] %vm1241, %v1624
        %v1633 = vld [vmem:[#allocation3] sm:$0xe]
        %v1634 = vld [vmem:[#allocation3 + $0x4] sm:$0xf]
        %v1635 = vld [vmem:[#allocation3 + $0x8] sm:$0x1]
        %v1636 = vld [vmem:[#allocation3 + $0xc] sm:$0xe]
        %v1637 = vld [vmem:[#allocation3 + $0x10] sm:$0xf]
        %v1638 = vld [vmem:[#allocation3 + $0x14] sm:$0x1]
        %v1639 = vld [vmem:[#allocation3 + $0x18] sm:$0xe]
        %v1640 = vld [vmem:[#allocation3 + $0x1c] sm:$0xf]
        %v1641 = vld [vmem:[#allocation3 + $0x20] sm:$0x1]
        %v1642 = vld [vmem:[#allocation3 + $0x24] sm:$0xe]
        %v1643 = vld [vmem:[#allocation3 + $0x28] sm:$0xf]
        %v1644 = vld [vmem:[#allocation3 + $0x2c] sm:$0x1]
        %v1657 = vrot.slane %v1633, 5
        %v1658 = vrot.slane %v1657, 4
        %v1659 = vrot.slane %v1634, 5
        %v1660 = vsel %vm1584, %v1658, %v1659
        %v1661 = vrot.slane %v1659, 4
        %v1662 = vrot.slane %v1635, 5
        %v1663 = vsel %vm1584, %v1661, %v1662
        %v1664 = vrot.slane %v1636, 5
        %v1665 = vrot.slane %v1664, 4
        %v1666 = vrot.slane %v1637, 5
        %v1667 = vsel %vm1584, %v1665, %v1666
        %v1668 = vrot.slane %v1666, 4
        %v1669 = vrot.slane %v1638, 5
        %v1670 = vsel %vm1584, %v1668, %v1669
        %v1671 = vrot.slane %v1639, 5
        %v1672 = vrot.slane %v1671, 4
        %v1673 = vrot.slane %v1640, 5
        %v1674 = vsel %vm1584, %v1672, %v1673
        %v1675 = vrot.slane %v1673, 4
        %v1676 = vrot.slane %v1641, 5
        %v1677 = vsel %vm1584, %v1675, %v1676
        %v1678 = vrot.slane %v1642, 5
        %v1679 = vrot.slane %v1678, 4
        %v1680 = vrot.slane %v1643, 5
        %v1681 = vsel %vm1584, %v1679, %v1680
        %v1682 = vrot.slane %v1680, 4
        %v1683 = vrot.slane %v1644, 5
        %v1684 = vsel %vm1584, %v1682, %v1683
        %v1685 = vunpack.c.l.b16 %v1660
        %v1686 = vunpack.c.l.b16 %v1663
        %v1687 = vunpack.c.l.b16 %v1667
        %v1688 = vunpack.c.l.b16 %v1670
        %v1689 = vunpack.c.l.b16 %v1674
        %v1690 = vunpack.c.l.b16 %v1677
        %v1691 = vunpack.c.l.b16 %v1681
        %v1692 = vunpack.c.l.b16 %v1684
        %v1693 = vpack.c.b16 %v1686, %v1685
        %v1694 = vpack.c.b16 %v1688, %v1687
        %v1695 = vpack.c.b16 %v1690, %v1689
        %v1696 = vpack.c.b16 %v1692, %v1691
        %1701 = vst.msk [vmem:[#allocation4 + $0xa8] sm:$0xff] %vm1241, %v1693
        %1702 = vst.msk [vmem:[#allocation4 + $0xd0] sm:$0xff] %vm1241, %v1694
        %1703 = vst.msk [vmem:[#allocation4 + $0xf8] sm:$0xff] %vm1241, %v1695
        %1704 = vst.msk [vmem:[#allocation4 + $0x120] sm:$0xff] %vm1241, %v1696
        %v1705 = vld [vmem:[%s896] sm:$0xf]
        %v1706 = vld [vmem:[%s896 + $0x4] sm:$0xf]
        %v1707 = vld [vmem:[%s896 + $0xc] sm:$0xf]
        %v1708 = vld [vmem:[%s896 + $0x10] sm:$0xf]
        %v1709 = vld [vmem:[%s896 + $0x18] sm:$0xf]
        %v1710 = vld [vmem:[%s896 + $0x1c] sm:$0xf]
        %v1711 = vld [vmem:[%s896 + $0x24] sm:$0xf]
        %v1712 = vld [vmem:[%s896 + $0x28] sm:$0xf]
        %v1721 = vunpack.c.l.b16 %v1705
        %v1722 = vunpack.c.l.b16 %v1706
        %v1723 = vunpack.c.l.b16 %v1707
        %v1724 = vunpack.c.l.b16 %v1708
        %v1725 = vunpack.c.l.b16 %v1709
        %v1726 = vunpack.c.l.b16 %v1710
        %v1727 = vunpack.c.l.b16 %v1711
        %v1728 = vunpack.c.l.b16 %v1712
        %v1729 = vpack.c.b16 %v1722, %v1721
        %v1730 = vpack.c.b16 %v1724, %v1723
        %v1731 = vpack.c.b16 %v1726, %v1725
        %v1732 = vpack.c.b16 %v1728, %v1727
        %1733 = vrot.lane.b32.xlu0 %v1729, 64
        %v1734 = vpop.permute.xlu0 %1733
        %1735 = vrot.lane.b32.xlu0 %v1730, 64
        %v1736 = vpop.permute.xlu0 %1735
        %1737 = vrot.lane.b32.xlu0 %v1731, 64
        %v1738 = vpop.permute.xlu0 %1737
        %1739 = vrot.lane.b32.xlu0 %v1732, 64
        %v1740 = vpop.permute.xlu0 %1739
        %1745 = vst.msk [vmem:[#allocation4 + $0x8] sm:$0xff] %vm1417, %v1734
        %1746 = vst.msk [vmem:[#allocation4 + $0x30] sm:$0xff] %vm1417, %v1736
        %1747 = vst.msk [vmem:[#allocation4 + $0x58] sm:$0xff] %vm1417, %v1738
        %1748 = vst.msk [vmem:[#allocation4 + $0x80] sm:$0xff] %vm1417, %v1740
        %v1749 = vld [vmem:[%s1016] sm:$0xf]
        %v1750 = vld [vmem:[%s1016 + $0x4] sm:$0xf]
        %v1751 = vld [vmem:[%s1016 + $0xc] sm:$0xf]
        %v1752 = vld [vmem:[%s1016 + $0x10] sm:$0xf]
        %v1753 = vld [vmem:[%s1016 + $0x18] sm:$0xf]
        %v1754 = vld [vmem:[%s1016 + $0x1c] sm:$0xf]
        %v1755 = vld [vmem:[%s1016 + $0x24] sm:$0xf]
        %v1756 = vld [vmem:[%s1016 + $0x28] sm:$0xf]
        %v1765 = vunpack.c.l.b16 %v1749
        %v1766 = vunpack.c.l.b16 %v1750
        %v1767 = vunpack.c.l.b16 %v1751
        %v1768 = vunpack.c.l.b16 %v1752
        %v1769 = vunpack.c.l.b16 %v1753
        %v1770 = vunpack.c.l.b16 %v1754
        %v1771 = vunpack.c.l.b16 %v1755
        %v1772 = vunpack.c.l.b16 %v1756
        %v1773 = vpack.c.b16 %v1766, %v1765
        %v1774 = vpack.c.b16 %v1768, %v1767
        %v1775 = vpack.c.b16 %v1770, %v1769
        %v1776 = vpack.c.b16 %v1772, %v1771
        %1777 = vrot.lane.b32.xlu0 %v1773, 64
        %v1778 = vpop.permute.xlu0 %1777
        %1779 = vrot.lane.b32.xlu0 %v1774, 64
        %v1780 = vpop.permute.xlu0 %1779
        %1781 = vrot.lane.b32.xlu0 %v1775, 64
        %v1782 = vpop.permute.xlu0 %1781
        %1783 = vrot.lane.b32.xlu0 %v1776, 64
        %v1784 = vpop.permute.xlu0 %1783
        %1789 = vst.msk [vmem:[#allocation4 + $0xa8] sm:$0xff] %vm1417, %v1778
        %1790 = vst.msk [vmem:[#allocation4 + $0xd0] sm:$0xff] %vm1417, %v1780
        %1791 = vst.msk [vmem:[#allocation4 + $0xf8] sm:$0xff] %vm1417, %v1782
        %1792 = vst.msk [vmem:[#allocation4 + $0x120] sm:$0xff] %vm1417, %v1784
        %v1793 = vld [vmem:[%s896] sm:$0xf]
        %v1794 = vld [vmem:[%s896 + $0x4] sm:$0xf]
        %v1795 = vld [vmem:[%s896 + $0x8] sm:$0x1]
        %v1796 = vld [vmem:[%s896 + $0xc] sm:$0xf]
        %v1797 = vld [vmem:[%s896 + $0x10] sm:$0xf]
        %v1798 = vld [vmem:[%s896 + $0x14] sm:$0x1]
        %v1799 = vld [vmem:[%s896 + $0x18] sm:$0xf]
        %v1800 = vld [vmem:[%s896 + $0x1c] sm:$0xf]
        %v1801 = vld [vmem:[%s896 + $0x20] sm:$0x1]
        %v1802 = vld [vmem:[%s896 + $0x24] sm:$0xf]
        %v1803 = vld [vmem:[%s896 + $0x28] sm:$0xf]
        %v1804 = vld [vmem:[%s896 + $0x2c] sm:$0x1]
        %v1806 = vshrl.u32 %v1793, 16
        %v1808 = vrot.slane %v1806, 4
        %v1809 = vshll.u32 %v1793, 16
        %v1811 = vrot.slane %v1809, 5
        %v1812 = vor.u32 %v1808, %v1811
        %v1813 = vrot.slane %v1812, 4
        %v1815 = vshll.u32 %v1794, 16
        %v1817 = vrot.slane %v1815, 5
        %v1818 = vsel %vm1296, %v1813, %v1817
        %v1819 = vshrl.u32 %v1794, 16
        %v1821 = vrot.slane %v1819, 4
        %v1822 = vor.u32 %v1821, %v1817
        %v1823 = vrot.slane %v1822, 4
        %v1825 = vshll.u32 %v1795, 16
        %v1827 = vrot.slane %v1825, 5
        %v1828 = vsel %vm1296, %v1823, %v1827
        %v1830 = vshrl.u32 %v1796, 16
        %v1832 = vrot.slane %v1830, 4
        %v1833 = vshll.u32 %v1796, 16
        %v1835 = vrot.slane %v1833, 5
        %v1836 = vor.u32 %v1832, %v1835
        %v1837 = vrot.slane %v1836, 4
        %v1839 = vshll.u32 %v1797, 16
        %v1841 = vrot.slane %v1839, 5
        %v1842 = vsel %vm1296, %v1837, %v1841
        %v1843 = vshrl.u32 %v1797, 16
        %v1845 = vrot.slane %v1843, 4
        %v1846 = vor.u32 %v1845, %v1841
        %v1847 = vrot.slane %v1846, 4
        %v1849 = vshll.u32 %v1798, 16
        %v1851 = vrot.slane %v1849, 5
        %v1852 = vsel %vm1296, %v1847, %v1851
        %v1854 = vshrl.u32 %v1799, 16
        %v1856 = vrot.slane %v1854, 4
        %v1857 = vshll.u32 %v1799, 16
        %v1859 = vrot.slane %v1857, 5
        %v1860 = vor.u32 %v1856, %v1859
        %v1861 = vrot.slane %v1860, 4
        %v1863 = vshll.u32 %v1800, 16
        %v1865 = vrot.slane %v1863, 5
        %v1866 = vsel %vm1296, %v1861, %v1865
        %v1867 = vshrl.u32 %v1800, 16
        %v1869 = vrot.slane %v1867, 4
        %v1870 = vor.u32 %v1869, %v1865
        %v1871 = vrot.slane %v1870, 4
        %v1873 = vshll.u32 %v1801, 16
        %v1875 = vrot.slane %v1873, 5
        %v1876 = vsel %vm1296, %v1871, %v1875
        %v1878 = vshrl.u32 %v1802, 16
        %v1880 = vrot.slane %v1878, 4
        %v1881 = vshll.u32 %v1802, 16
        %v1883 = vrot.slane %v1881, 5
        %v1884 = vor.u32 %v1880, %v1883
        %v1885 = vrot.slane %v1884, 4
        %v1887 = vshll.u32 %v1803, 16
        %v1889 = vrot.slane %v1887, 5
        %v1890 = vsel %vm1296, %v1885, %v1889
        %v1891 = vshrl.u32 %v1803, 16
        %v1893 = vrot.slane %v1891, 4
        %v1894 = vor.u32 %v1893, %v1889
        %v1895 = vrot.slane %v1894, 4
        %v1897 = vshll.u32 %v1804, 16
        %v1899 = vrot.slane %v1897, 5
        %v1900 = vsel %vm1296, %v1895, %v1899
        %v1901 = vunpack.c.l.b16 %v1818
        %v1902 = vunpack.c.l.b16 %v1828
        %v1903 = vunpack.c.l.b16 %v1842
        %v1904 = vunpack.c.l.b16 %v1852
        %v1905 = vunpack.c.l.b16 %v1866
        %v1906 = vunpack.c.l.b16 %v1876
        %v1907 = vunpack.c.l.b16 %v1890
        %v1908 = vunpack.c.l.b16 %v1900
        %v1909 = vpack.c.b16 %v1902, %v1901
        %v1910 = vpack.c.b16 %v1904, %v1903
        %v1911 = vpack.c.b16 %v1906, %v1905
        %v1912 = vpack.c.b16 %v1908, %v1907
        %1917 = vst.msk [vmem:[#allocation4 + $0x10] sm:$0xff] %vm1241, %v1909
        %1918 = vst.msk [vmem:[#allocation4 + $0x38] sm:$0xff] %vm1241, %v1910
        %1919 = vst.msk [vmem:[#allocation4 + $0x60] sm:$0xff] %vm1241, %v1911
        %1920 = vst.msk [vmem:[#allocation4 + $0x88] sm:$0xff] %vm1241, %v1912
        %v1921 = vld [vmem:[%s1016] sm:$0xf]
        %v1922 = vld [vmem:[%s1016 + $0x4] sm:$0xf]
        %v1923 = vld [vmem:[%s1016 + $0x8] sm:$0x1]
        %v1924 = vld [vmem:[%s1016 + $0xc] sm:$0xf]
        %v1925 = vld [vmem:[%s1016 + $0x10] sm:$0xf]
        %v1926 = vld [vmem:[%s1016 + $0x14] sm:$0x1]
        %v1927 = vld [vmem:[%s1016 + $0x18] sm:$0xf]
        %v1928 = vld [vmem:[%s1016 + $0x1c] sm:$0xf]
        %v1929 = vld [vmem:[%s1016 + $0x20] sm:$0x1]
        %v1930 = vld [vmem:[%s1016 + $0x24] sm:$0xf]
        %v1931 = vld [vmem:[%s1016 + $0x28] sm:$0xf]
        %v1932 = vld [vmem:[%s1016 + $0x2c] sm:$0x1]
        %v1934 = vshrl.u32 %v1921, 16
        %v1936 = vrot.slane %v1934, 4
        %v1937 = vshll.u32 %v1921, 16
        %v1939 = vrot.slane %v1937, 5
        %v1940 = vor.u32 %v1936, %v1939
        %v1941 = vrot.slane %v1940, 4
        %v1943 = vshll.u32 %v1922, 16
        %v1945 = vrot.slane %v1943, 5
        %v1946 = vsel %vm1296, %v1941, %v1945
        %v1947 = vshrl.u32 %v1922, 16
        %v1949 = vrot.slane %v1947, 4
        %v1950 = vor.u32 %v1949, %v1945
        %v1951 = vrot.slane %v1950, 4
        %v1953 = vshll.u32 %v1923, 16
        %v1955 = vrot.slane %v1953, 5
        %v1956 = vsel %vm1296, %v1951, %v1955
        %v1958 = vshrl.u32 %v1924, 16
        %v1960 = vrot.slane %v1958, 4
        %v1961 = vshll.u32 %v1924, 16
        %v1963 = vrot.slane %v1961, 5
        %v1964 = vor.u32 %v1960, %v1963
        %v1965 = vrot.slane %v1964, 4
        %v1967 = vshll.u32 %v1925, 16
        %v1969 = vrot.slane %v1967, 5
        %v1970 = vsel %vm1296, %v1965, %v1969
        %v1971 = vshrl.u32 %v1925, 16
        %v1973 = vrot.slane %v1971, 4
        %v1974 = vor.u32 %v1973, %v1969
        %v1975 = vrot.slane %v1974, 4
        %v1977 = vshll.u32 %v1926, 16
        %v1979 = vrot.slane %v1977, 5
        %v1980 = vsel %vm1296, %v1975, %v1979
        %v1982 = vshrl.u32 %v1927, 16
        %v1984 = vrot.slane %v1982, 4
        %v1985 = vshll.u32 %v1927, 16
        %v1987 = vrot.slane %v1985, 5
        %v1988 = vor.u32 %v1984, %v1987
        %v1989 = vrot.slane %v1988, 4
        %v1991 = vshll.u32 %v1928, 16
        %v1993 = vrot.slane %v1991, 5
        %v1994 = vsel %vm1296, %v1989, %v1993
        %v1995 = vshrl.u32 %v1928, 16
        %v1997 = vrot.slane %v1995, 4
        %v1998 = vor.u32 %v1997, %v1993
        %v1999 = vrot.slane %v1998, 4
        %v2001 = vshll.u32 %v1929, 16
        %v2003 = vrot.slane %v2001, 5
        %v2004 = vsel %vm1296, %v1999, %v2003
        %v2006 = vshrl.u32 %v1930, 16
        %v2008 = vrot.slane %v2006, 4
        %v2009 = vshll.u32 %v1930, 16
        %v2011 = vrot.slane %v2009, 5
        %v2012 = vor.u32 %v2008, %v2011
        %v2013 = vrot.slane %v2012, 4
        %v2015 = vshll.u32 %v1931, 16
        %v2017 = vrot.slane %v2015, 5
        %v2018 = vsel %vm1296, %v2013, %v2017
        %v2019 = vshrl.u32 %v1931, 16
        %v2021 = vrot.slane %v2019, 4
        %v2022 = vor.u32 %v2021, %v2017
        %v2023 = vrot.slane %v2022, 4
        %v2025 = vshll.u32 %v1932, 16
        %v2027 = vrot.slane %v2025, 5
        %v2028 = vsel %vm1296, %v2023, %v2027
        %v2029 = vunpack.c.l.b16 %v1946
        %v2030 = vunpack.c.l.b16 %v1956
        %v2031 = vunpack.c.l.b16 %v1970
        %v2032 = vunpack.c.l.b16 %v1980
        %v2033 = vunpack.c.l.b16 %v1994
        %v2034 = vunpack.c.l.b16 %v2004
        %v2035 = vunpack.c.l.b16 %v2018
        %v2036 = vunpack.c.l.b16 %v2028
        %v2037 = vpack.c.b16 %v2030, %v2029
        %v2038 = vpack.c.b16 %v2032, %v2031
        %v2039 = vpack.c.b16 %v2034, %v2033
        %v2040 = vpack.c.b16 %v2036, %v2035
        %2045 = vst.msk [vmem:[#allocation4 + $0xb0] sm:$0xff] %vm1241, %v2037
        %2046 = vst.msk [vmem:[#allocation4 + $0xd8] sm:$0xff] %vm1241, %v2038
        %2047 = vst.msk [vmem:[#allocation4 + $0x100] sm:$0xff] %vm1241, %v2039
        %2048 = vst.msk [vmem:[#allocation4 + $0x128] sm:$0xff] %vm1241, %v2040
        %v2049 = vld [vmem:[%s896] sm:$0xe]
        %v2050 = vld [vmem:[%s896 + $0x4] sm:$0xf]
        %v2051 = vld [vmem:[%s896 + $0x8] sm:$0x1]
        %v2052 = vld [vmem:[%s896 + $0xc] sm:$0xe]
        %v2053 = vld [vmem:[%s896 + $0x10] sm:$0xf]
        %v2054 = vld [vmem:[%s896 + $0x14] sm:$0x1]
        %v2055 = vld [vmem:[%s896 + $0x18] sm:$0xe]
        %v2056 = vld [vmem:[%s896 + $0x1c] sm:$0xf]
        %v2057 = vld [vmem:[%s896 + $0x20] sm:$0x1]
        %v2058 = vld [vmem:[%s896 + $0x24] sm:$0xe]
        %v2059 = vld [vmem:[%s896 + $0x28] sm:$0xf]
        %v2060 = vld [vmem:[%s896 + $0x2c] sm:$0x1]
        %v2073 = vrot.slane %v2049, 5
        %v2074 = vrot.slane %v2073, 4
        %v2075 = vrot.slane %v2050, 5
        %v2076 = vsel %vm1584, %v2074, %v2075
        %v2077 = vrot.slane %v2075, 4
        %v2078 = vrot.slane %v2051, 5
        %v2079 = vsel %vm1584, %v2077, %v2078
        %v2080 = vrot.slane %v2052, 5
        %v2081 = vrot.slane %v2080, 4
        %v2082 = vrot.slane %v2053, 5
        %v2083 = vsel %vm1584, %v2081, %v2082
        %v2084 = vrot.slane %v2082, 4
        %v2085 = vrot.slane %v2054, 5
        %v2086 = vsel %vm1584, %v2084, %v2085
        %v2087 = vrot.slane %v2055, 5
        %v2088 = vrot.slane %v2087, 4
        %v2089 = vrot.slane %v2056, 5
        %v2090 = vsel %vm1584, %v2088, %v2089
        %v2091 = vrot.slane %v2089, 4
        %v2092 = vrot.slane %v2057, 5
        %v2093 = vsel %vm1584, %v2091, %v2092
        %v2094 = vrot.slane %v2058, 5
        %v2095 = vrot.slane %v2094, 4
        %v2096 = vrot.slane %v2059, 5
        %v2097 = vsel %vm1584, %v2095, %v2096
        %v2098 = vrot.slane %v2096, 4
        %v2099 = vrot.slane %v2060, 5
        %v2100 = vsel %vm1584, %v2098, %v2099
        %v2101 = vunpack.c.l.b16 %v2076
        %v2102 = vunpack.c.l.b16 %v2079
        %v2103 = vunpack.c.l.b16 %v2083
        %v2104 = vunpack.c.l.b16 %v2086
        %v2105 = vunpack.c.l.b16 %v2090
        %v2106 = vunpack.c.l.b16 %v2093
        %v2107 = vunpack.c.l.b16 %v2097
        %v2108 = vunpack.c.l.b16 %v2100
        %v2109 = vpack.c.b16 %v2102, %v2101
        %v2110 = vpack.c.b16 %v2104, %v2103
        %v2111 = vpack.c.b16 %v2106, %v2105
        %v2112 = vpack.c.b16 %v2108, %v2107
        %2113 = vrot.lane.b32.xlu0 %v2109, 64
        %v2114 = vpop.permute.xlu0 %2113
        %2115 = vrot.lane.b32.xlu0 %v2110, 64
        %v2116 = vpop.permute.xlu0 %2115
        %2117 = vrot.lane.b32.xlu0 %v2111, 64
        %v2118 = vpop.permute.xlu0 %2117
        %2119 = vrot.lane.b32.xlu0 %v2112, 64
        %v2120 = vpop.permute.xlu0 %2119
        %2125 = vst.msk [vmem:[#allocation4 + $0x10] sm:$0xff] %vm1417, %v2114
        %2126 = vst.msk [vmem:[#allocation4 + $0x38] sm:$0xff] %vm1417, %v2116
        %2127 = vst.msk [vmem:[#allocation4 + $0x60] sm:$0xff] %vm1417, %v2118
        %2128 = vst.msk [vmem:[#allocation4 + $0x88] sm:$0xff] %vm1417, %v2120
        %v2129 = vld [vmem:[%s1016] sm:$0xe]
        %v2130 = vld [vmem:[%s1016 + $0x4] sm:$0xf]
        %v2131 = vld [vmem:[%s1016 + $0x8] sm:$0x1]
        %v2132 = vld [vmem:[%s1016 + $0xc] sm:$0xe]
        %v2133 = vld [vmem:[%s1016 + $0x10] sm:$0xf]
        %v2134 = vld [vmem:[%s1016 + $0x14] sm:$0x1]
        %v2135 = vld [vmem:[%s1016 + $0x18] sm:$0xe]
        %v2136 = vld [vmem:[%s1016 + $0x1c] sm:$0xf]
        %v2137 = vld [vmem:[%s1016 + $0x20] sm:$0x1]
        %v2138 = vld [vmem:[%s1016 + $0x24] sm:$0xe]
        %v2139 = vld [vmem:[%s1016 + $0x28] sm:$0xf]
        %v2140 = vld [vmem:[%s1016 + $0x2c] sm:$0x1]
        %v2153 = vrot.slane %v2129, 5
        %v2154 = vrot.slane %v2153, 4
        %v2155 = vrot.slane %v2130, 5
        %v2156 = vsel %vm1584, %v2154, %v2155
        %v2157 = vrot.slane %v2155, 4
        %v2158 = vrot.slane %v2131, 5
        %v2159 = vsel %vm1584, %v2157, %v2158
        %v2160 = vrot.slane %v2132, 5
        %v2161 = vrot.slane %v2160, 4
        %v2162 = vrot.slane %v2133, 5
        %v2163 = vsel %vm1584, %v2161, %v2162
        %v2164 = vrot.slane %v2162, 4
        %v2165 = vrot.slane %v2134, 5
        %v2166 = vsel %vm1584, %v2164, %v2165
        %v2167 = vrot.slane %v2135, 5
        %v2168 = vrot.slane %v2167, 4
        %v2169 = vrot.slane %v2136, 5
        %v2170 = vsel %vm1584, %v2168, %v2169
        %v2171 = vrot.slane %v2169, 4
        %v2172 = vrot.slane %v2137, 5
        %v2173 = vsel %vm1584, %v2171, %v2172
        %v2174 = vrot.slane %v2138, 5
        %v2175 = vrot.slane %v2174, 4
        %v2176 = vrot.slane %v2139, 5
        %v2177 = vsel %vm1584, %v2175, %v2176
        %v2178 = vrot.slane %v2176, 4
        %v2179 = vrot.slane %v2140, 5
        %v2180 = vsel %vm1584, %v2178, %v2179
        %v2181 = vunpack.c.l.b16 %v2156
        %v2182 = vunpack.c.l.b16 %v2159
        %v2183 = vunpack.c.l.b16 %v2163
        %v2184 = vunpack.c.l.b16 %v2166
        %v2185 = vunpack.c.l.b16 %v2170
        %v2186 = vunpack.c.l.b16 %v2173
        %v2187 = vunpack.c.l.b16 %v2177
        %v2188 = vunpack.c.l.b16 %v2180
        %v2189 = vpack.c.b16 %v2182, %v2181
        %v2190 = vpack.c.b16 %v2184, %v2183
        %v2191 = vpack.c.b16 %v2186, %v2185
        %v2192 = vpack.c.b16 %v2188, %v2187
        %2193 = vrot.lane.b32.xlu0 %v2189, 64
        %v2194 = vpop.permute.xlu0 %2193
        %2195 = vrot.lane.b32.xlu0 %v2190, 64
        %v2196 = vpop.permute.xlu0 %2195
        %2197 = vrot.lane.b32.xlu0 %v2191, 64
        %v2198 = vpop.permute.xlu0 %2197
        %2199 = vrot.lane.b32.xlu0 %v2192, 64
        %v2200 = vpop.permute.xlu0 %2199
        %2205 = vst.msk [vmem:[#allocation4 + $0xb0] sm:$0xff] %vm1417, %v2194
        %2206 = vst.msk [vmem:[#allocation4 + $0xd8] sm:$0xff] %vm1417, %v2196
        %2207 = vst.msk [vmem:[#allocation4 + $0x100] sm:$0xff] %vm1417, %v2198
        %2208 = vst.msk [vmem:[#allocation4 + $0x128] sm:$0xff] %vm1417, %v2200
        %s2209 = scalar_lea.vmem [#allocation2], 24
        %v2210 = vld [vmem:[%s2209] sm:$0xf]
        %v2211 = vld [vmem:[%s2209 + $0x4] sm:$0xf]
        %v2212 = vld [vmem:[%s2209 + $0xc] sm:$0xf]
        %v2213 = vld [vmem:[%s2209 + $0x10] sm:$0xf]
        %v2214 = vld [vmem:[%s2209 + $0x18] sm:$0xf]
        %v2215 = vld [vmem:[%s2209 + $0x1c] sm:$0xf]
        %v2216 = vld [vmem:[%s2209 + $0x24] sm:$0xf]
        %v2217 = vld [vmem:[%s2209 + $0x28] sm:$0xf]
        %v2226 = vunpack.c.l.b16 %v2210
        %v2227 = vunpack.c.l.b16 %v2211
        %v2228 = vunpack.c.l.b16 %v2212
        %v2229 = vunpack.c.l.b16 %v2213
        %v2230 = vunpack.c.l.b16 %v2214
        %v2231 = vunpack.c.l.b16 %v2215
        %v2232 = vunpack.c.l.b16 %v2216
        %v2233 = vunpack.c.l.b16 %v2217
        %v2234 = vpack.c.b16 %v2227, %v2226
        %v2235 = vpack.c.b16 %v2229, %v2228
        %v2236 = vpack.c.b16 %v2231, %v2230
        %v2237 = vpack.c.b16 %v2233, %v2232
        %2242 = vst.msk [vmem:[#allocation4 + $0x18] sm:$0xff] %vm1241, %v2234
        %2243 = vst.msk [vmem:[#allocation4 + $0x40] sm:$0xff] %vm1241, %v2235
        %2244 = vst.msk [vmem:[#allocation4 + $0x68] sm:$0xff] %vm1241, %v2236
        %2245 = vst.msk [vmem:[#allocation4 + $0x90] sm:$0xff] %vm1241, %v2237
        %s2246 = scalar_lea.vmem [#allocation3], 24
        %v2247 = vld [vmem:[%s2246] sm:$0xf]
        %v2248 = vld [vmem:[%s2246 + $0x4] sm:$0xf]
        %v2249 = vld [vmem:[%s2246 + $0xc] sm:$0xf]
        %v2250 = vld [vmem:[%s2246 + $0x10] sm:$0xf]
        %v2251 = vld [vmem:[%s2246 + $0x18] sm:$0xf]
        %v2252 = vld [vmem:[%s2246 + $0x1c] sm:$0xf]
        %v2253 = vld [vmem:[%s2246 + $0x24] sm:$0xf]
        %v2254 = vld [vmem:[%s2246 + $0x28] sm:$0xf]
        %v2263 = vunpack.c.l.b16 %v2247
        %v2264 = vunpack.c.l.b16 %v2248
        %v2265 = vunpack.c.l.b16 %v2249
        %v2266 = vunpack.c.l.b16 %v2250
        %v2267 = vunpack.c.l.b16 %v2251
        %v2268 = vunpack.c.l.b16 %v2252
        %v2269 = vunpack.c.l.b16 %v2253
        %v2270 = vunpack.c.l.b16 %v2254
        %v2271 = vpack.c.b16 %v2264, %v2263
        %v2272 = vpack.c.b16 %v2266, %v2265
        %v2273 = vpack.c.b16 %v2268, %v2267
        %v2274 = vpack.c.b16 %v2270, %v2269
        %2279 = vst.msk [vmem:[#allocation4 + $0xb8] sm:$0xff] %vm1241, %v2271
        %2280 = vst.msk [vmem:[#allocation4 + $0xe0] sm:$0xff] %vm1241, %v2272
        %2281 = vst.msk [vmem:[#allocation4 + $0x108] sm:$0xff] %vm1241, %v2273
        %2282 = vst.msk [vmem:[#allocation4 + $0x130] sm:$0xff] %vm1241, %v2274
        %v2283 = vld [vmem:[%s2209] sm:$0xf]
        %v2284 = vld [vmem:[%s2209 + $0x4] sm:$0xf]
        %v2285 = vld [vmem:[%s2209 + $0x8] sm:$0x1]
        %v2286 = vld [vmem:[%s2209 + $0xc] sm:$0xf]
        %v2287 = vld [vmem:[%s2209 + $0x10] sm:$0xf]
        %v2288 = vld [vmem:[%s2209 + $0x14] sm:$0x1]
        %v2289 = vld [vmem:[%s2209 + $0x18] sm:$0xf]
        %v2290 = vld [vmem:[%s2209 + $0x1c] sm:$0xf]
        %v2291 = vld [vmem:[%s2209 + $0x20] sm:$0x1]
        %v2292 = vld [vmem:[%s2209 + $0x24] sm:$0xf]
        %v2293 = vld [vmem:[%s2209 + $0x28] sm:$0xf]
        %v2294 = vld [vmem:[%s2209 + $0x2c] sm:$0x1]
        %v2296 = vshrl.u32 %v2283, 16
        %v2298 = vrot.slane %v2296, 4
        %v2299 = vshll.u32 %v2283, 16
        %v2301 = vrot.slane %v2299, 5
        %v2302 = vor.u32 %v2298, %v2301
        %v2303 = vrot.slane %v2302, 4
        %v2305 = vshll.u32 %v2284, 16
        %v2307 = vrot.slane %v2305, 5
        %v2308 = vsel %vm1296, %v2303, %v2307
        %v2309 = vshrl.u32 %v2284, 16
        %v2311 = vrot.slane %v2309, 4
        %v2312 = vor.u32 %v2311, %v2307
        %v2313 = vrot.slane %v2312, 4
        %v2315 = vshll.u32 %v2285, 16
        %v2317 = vrot.slane %v2315, 5
        %v2318 = vsel %vm1296, %v2313, %v2317
        %v2320 = vshrl.u32 %v2286, 16
        %v2322 = vrot.slane %v2320, 4
        %v2323 = vshll.u32 %v2286, 16
        %v2325 = vrot.slane %v2323, 5
        %v2326 = vor.u32 %v2322, %v2325
        %v2327 = vrot.slane %v2326, 4
        %v2329 = vshll.u32 %v2287, 16
        %v2331 = vrot.slane %v2329, 5
        %v2332 = vsel %vm1296, %v2327, %v2331
        %v2333 = vshrl.u32 %v2287, 16
        %v2335 = vrot.slane %v2333, 4
        %v2336 = vor.u32 %v2335, %v2331
        %v2337 = vrot.slane %v2336, 4
        %v2339 = vshll.u32 %v2288, 16
        %v2341 = vrot.slane %v2339, 5
        %v2342 = vsel %vm1296, %v2337, %v2341
        %v2344 = vshrl.u32 %v2289, 16
        %v2346 = vrot.slane %v2344, 4
        %v2347 = vshll.u32 %v2289, 16
        %v2349 = vrot.slane %v2347, 5
        %v2350 = vor.u32 %v2346, %v2349
        %v2351 = vrot.slane %v2350, 4
        %v2353 = vshll.u32 %v2290, 16
        %v2355 = vrot.slane %v2353, 5
        %v2356 = vsel %vm1296, %v2351, %v2355
        %v2357 = vshrl.u32 %v2290, 16
        %v2359 = vrot.slane %v2357, 4
        %v2360 = vor.u32 %v2359, %v2355
        %v2361 = vrot.slane %v2360, 4
        %v2363 = vshll.u32 %v2291, 16
        %v2365 = vrot.slane %v2363, 5
        %v2366 = vsel %vm1296, %v2361, %v2365
        %v2368 = vshrl.u32 %v2292, 16
        %v2370 = vrot.slane %v2368, 4
        %v2371 = vshll.u32 %v2292, 16
        %v2373 = vrot.slane %v2371, 5
        %v2374 = vor.u32 %v2370, %v2373
        %v2375 = vrot.slane %v2374, 4
        %v2377 = vshll.u32 %v2293, 16
        %v2379 = vrot.slane %v2377, 5
        %v2380 = vsel %vm1296, %v2375, %v2379
        %v2381 = vshrl.u32 %v2293, 16
        %v2383 = vrot.slane %v2381, 4
        %v2384 = vor.u32 %v2383, %v2379
        %v2385 = vrot.slane %v2384, 4
        %v2387 = vshll.u32 %v2294, 16
        %v2389 = vrot.slane %v2387, 5
        %v2390 = vsel %vm1296, %v2385, %v2389
        %v2391 = vunpack.c.l.b16 %v2308
        %v2392 = vunpack.c.l.b16 %v2318
        %v2393 = vunpack.c.l.b16 %v2332
        %v2394 = vunpack.c.l.b16 %v2342
        %v2395 = vunpack.c.l.b16 %v2356
        %v2396 = vunpack.c.l.b16 %v2366
        %v2397 = vunpack.c.l.b16 %v2380
        %v2398 = vunpack.c.l.b16 %v2390
        %v2399 = vpack.c.b16 %v2392, %v2391
        %v2400 = vpack.c.b16 %v2394, %v2393
        %v2401 = vpack.c.b16 %v2396, %v2395
        %v2402 = vpack.c.b16 %v2398, %v2397
        %2403 = vrot.lane.b32.xlu0 %v2399, 64
        %v2404 = vpop.permute.xlu0 %2403
        %2405 = vrot.lane.b32.xlu0 %v2400, 64
        %v2406 = vpop.permute.xlu0 %2405
        %2407 = vrot.lane.b32.xlu0 %v2401, 64
        %v2408 = vpop.permute.xlu0 %2407
        %2409 = vrot.lane.b32.xlu0 %v2402, 64
        %v2410 = vpop.permute.xlu0 %2409
        %2415 = vst.msk [vmem:[#allocation4 + $0x18] sm:$0xff] %vm1417, %v2404
        %2416 = vst.msk [vmem:[#allocation4 + $0x40] sm:$0xff] %vm1417, %v2406
        %2417 = vst.msk [vmem:[#allocation4 + $0x68] sm:$0xff] %vm1417, %v2408
        %2418 = vst.msk [vmem:[#allocation4 + $0x90] sm:$0xff] %vm1417, %v2410
        %v2419 = vld [vmem:[%s2246] sm:$0xf]
        %v2420 = vld [vmem:[%s2246 + $0x4] sm:$0xf]
        %v2421 = vld [vmem:[%s2246 + $0x8] sm:$0x1]
        %v2422 = vld [vmem:[%s2246 + $0xc] sm:$0xf]
        %v2423 = vld [vmem:[%s2246 + $0x10] sm:$0xf]
        %v2424 = vld [vmem:[%s2246 + $0x14] sm:$0x1]
        %v2425 = vld [vmem:[%s2246 + $0x18] sm:$0xf]
        %v2426 = vld [vmem:[%s2246 + $0x1c] sm:$0xf]
        %v2427 = vld [vmem:[%s2246 + $0x20] sm:$0x1]
        %v2428 = vld [vmem:[%s2246 + $0x24] sm:$0xf]
        %v2429 = vld [vmem:[%s2246 + $0x28] sm:$0xf]
        %v2430 = vld [vmem:[%s2246 + $0x2c] sm:$0x1]
        %v2432 = vshrl.u32 %v2419, 16
        %v2434 = vrot.slane %v2432, 4
        %v2435 = vshll.u32 %v2419, 16
        %v2437 = vrot.slane %v2435, 5
        %v2438 = vor.u32 %v2434, %v2437
        %v2439 = vrot.slane %v2438, 4
        %v2441 = vshll.u32 %v2420, 16
        %v2443 = vrot.slane %v2441, 5
        %v2444 = vsel %vm1296, %v2439, %v2443
        %v2445 = vshrl.u32 %v2420, 16
        %v2447 = vrot.slane %v2445, 4
        %v2448 = vor.u32 %v2447, %v2443
        %v2449 = vrot.slane %v2448, 4
        %v2451 = vshll.u32 %v2421, 16
        %v2453 = vrot.slane %v2451, 5
        %v2454 = vsel %vm1296, %v2449, %v2453
        %v2456 = vshrl.u32 %v2422, 16
        %v2458 = vrot.slane %v2456, 4
        %v2459 = vshll.u32 %v2422, 16
        %v2461 = vrot.slane %v2459, 5
        %v2462 = vor.u32 %v2458, %v2461
        %v2463 = vrot.slane %v2462, 4
        %v2465 = vshll.u32 %v2423, 16
        %v2467 = vrot.slane %v2465, 5
        %v2468 = vsel %vm1296, %v2463, %v2467
        %v2469 = vshrl.u32 %v2423, 16
        %v2471 = vrot.slane %v2469, 4
        %v2472 = vor.u32 %v2471, %v2467
        %v2473 = vrot.slane %v2472, 4
        %v2475 = vshll.u32 %v2424, 16
        %v2477 = vrot.slane %v2475, 5
        %v2478 = vsel %vm1296, %v2473, %v2477
        %v2480 = vshrl.u32 %v2425, 16
        %v2482 = vrot.slane %v2480, 4
        %v2483 = vshll.u32 %v2425, 16
        %v2485 = vrot.slane %v2483, 5
        %v2486 = vor.u32 %v2482, %v2485
        %v2487 = vrot.slane %v2486, 4
        %v2489 = vshll.u32 %v2426, 16
        %v2491 = vrot.slane %v2489, 5
        %v2492 = vsel %vm1296, %v2487, %v2491
        %v2493 = vshrl.u32 %v2426, 16
        %v2495 = vrot.slane %v2493, 4
        %v2496 = vor.u32 %v2495, %v2491
        %v2497 = vrot.slane %v2496, 4
        %v2499 = vshll.u32 %v2427, 16
        %v2501 = vrot.slane %v2499, 5
        %v2502 = vsel %vm1296, %v2497, %v2501
        %v2504 = vshrl.u32 %v2428, 16
        %v2506 = vrot.slane %v2504, 4
        %v2507 = vshll.u32 %v2428, 16
        %v2509 = vrot.slane %v2507, 5
        %v2510 = vor.u32 %v2506, %v2509
        %v2511 = vrot.slane %v2510, 4
        %v2513 = vshll.u32 %v2429, 16
        %v2515 = vrot.slane %v2513, 5
        %v2516 = vsel %vm1296, %v2511, %v2515
        %v2517 = vshrl.u32 %v2429, 16
        %v2519 = vrot.slane %v2517, 4
        %v2520 = vor.u32 %v2519, %v2515
        %v2521 = vrot.slane %v2520, 4
        %v2523 = vshll.u32 %v2430, 16
        %v2525 = vrot.slane %v2523, 5
        %v2526 = vsel %vm1296, %v2521, %v2525
        %v2527 = vunpack.c.l.b16 %v2444
        %v2528 = vunpack.c.l.b16 %v2454
        %v2529 = vunpack.c.l.b16 %v2468
        %v2530 = vunpack.c.l.b16 %v2478
        %v2531 = vunpack.c.l.b16 %v2492
        %v2532 = vunpack.c.l.b16 %v2502
        %v2533 = vunpack.c.l.b16 %v2516
        %v2534 = vunpack.c.l.b16 %v2526
        %v2535 = vpack.c.b16 %v2528, %v2527
        %v2536 = vpack.c.b16 %v2530, %v2529
        %v2537 = vpack.c.b16 %v2532, %v2531
        %v2538 = vpack.c.b16 %v2534, %v2533
        %2539 = vrot.lane.b32.xlu0 %v2535, 64
        %v2540 = vpop.permute.xlu0 %2539
        %2541 = vrot.lane.b32.xlu0 %v2536, 64
        %v2542 = vpop.permute.xlu0 %2541
        %2543 = vrot.lane.b32.xlu0 %v2537, 64
        %v2544 = vpop.permute.xlu0 %2543
        %2545 = vrot.lane.b32.xlu0 %v2538, 64
        %v2546 = vpop.permute.xlu0 %2545
        %2551 = vst.msk [vmem:[#allocation4 + $0xb8] sm:$0xff] %vm1417, %v2540
        %2552 = vst.msk [vmem:[#allocation4 + $0xe0] sm:$0xff] %vm1417, %v2542
        %2553 = vst.msk [vmem:[#allocation4 + $0x108] sm:$0xff] %vm1417, %v2544
        %2554 = vst.msk [vmem:[#allocation4 + $0x130] sm:$0xff] %vm1417, %v2546
        %v2555 = vld [vmem:[%s2209] sm:$0xe]
        %v2556 = vld [vmem:[%s2209 + $0x4] sm:$0xf]
        %v2557 = vld [vmem:[%s2209 + $0x8] sm:$0x1]
        %v2558 = vld [vmem:[%s2209 + $0xc] sm:$0xe]
        %v2559 = vld [vmem:[%s2209 + $0x10] sm:$0xf]
        %v2560 = vld [vmem:[%s2209 + $0x14] sm:$0x1]
        %v2561 = vld [vmem:[%s2209 + $0x18] sm:$0xe]
        %v2562 = vld [vmem:[%s2209 + $0x1c] sm:$0xf]
        %v2563 = vld [vmem:[%s2209 + $0x20] sm:$0x1]
        %v2564 = vld [vmem:[%s2209 + $0x24] sm:$0xe]
        %v2565 = vld [vmem:[%s2209 + $0x28] sm:$0xf]
        %v2566 = vld [vmem:[%s2209 + $0x2c] sm:$0x1]
        %v2579 = vrot.slane %v2555, 5
        %v2580 = vrot.slane %v2579, 4
        %v2581 = vrot.slane %v2556, 5
        %v2582 = vsel %vm1584, %v2580, %v2581
        %v2583 = vrot.slane %v2581, 4
        %v2584 = vrot.slane %v2557, 5
        %v2585 = vsel %vm1584, %v2583, %v2584
        %v2586 = vrot.slane %v2558, 5
        %v2587 = vrot.slane %v2586, 4
        %v2588 = vrot.slane %v2559, 5
        %v2589 = vsel %vm1584, %v2587, %v2588
        %v2590 = vrot.slane %v2588, 4
        %v2591 = vrot.slane %v2560, 5
        %v2592 = vsel %vm1584, %v2590, %v2591
        %v2593 = vrot.slane %v2561, 5
        %v2594 = vrot.slane %v2593, 4
        %v2595 = vrot.slane %v2562, 5
        %v2596 = vsel %vm1584, %v2594, %v2595
        %v2597 = vrot.slane %v2595, 4
        %v2598 = vrot.slane %v2563, 5
        %v2599 = vsel %vm1584, %v2597, %v2598
        %v2600 = vrot.slane %v2564, 5
        %v2601 = vrot.slane %v2600, 4
        %v2602 = vrot.slane %v2565, 5
        %v2603 = vsel %vm1584, %v2601, %v2602
        %v2604 = vrot.slane %v2602, 4
        %v2605 = vrot.slane %v2566, 5
        %v2606 = vsel %vm1584, %v2604, %v2605
        %v2607 = vunpack.c.l.b16 %v2582
        %v2608 = vunpack.c.l.b16 %v2585
        %v2609 = vunpack.c.l.b16 %v2589
        %v2610 = vunpack.c.l.b16 %v2592
        %v2611 = vunpack.c.l.b16 %v2596
        %v2612 = vunpack.c.l.b16 %v2599
        %v2613 = vunpack.c.l.b16 %v2603
        %v2614 = vunpack.c.l.b16 %v2606
        %v2615 = vpack.c.b16 %v2608, %v2607
        %v2616 = vpack.c.b16 %v2610, %v2609
        %v2617 = vpack.c.b16 %v2612, %v2611
        %v2618 = vpack.c.b16 %v2614, %v2613
        %2623 = vst.msk [vmem:[#allocation4 + $0x20] sm:$0xff] %vm1241, %v2615
        %2624 = vst.msk [vmem:[#allocation4 + $0x48] sm:$0xff] %vm1241, %v2616
        %2625 = vst.msk [vmem:[#allocation4 + $0x70] sm:$0xff] %vm1241, %v2617
        %2626 = vst.msk [vmem:[#allocation4 + $0x98] sm:$0xff] %vm1241, %v2618
        %v2627 = vld [vmem:[%s2246] sm:$0xe]
        %v2628 = vld [vmem:[%s2246 + $0x4] sm:$0xf]
        %v2629 = vld [vmem:[%s2246 + $0x8] sm:$0x1]
        %v2630 = vld [vmem:[%s2246 + $0xc] sm:$0xe]
        %v2631 = vld [vmem:[%s2246 + $0x10] sm:$0xf]
        %v2632 = vld [vmem:[%s2246 + $0x14] sm:$0x1]
        %v2633 = vld [vmem:[%s2246 + $0x18] sm:$0xe]
        %v2634 = vld [vmem:[%s2246 + $0x1c] sm:$0xf]
        %v2635 = vld [vmem:[%s2246 + $0x20] sm:$0x1]
        %v2636 = vld [vmem:[%s2246 + $0x24] sm:$0xe]
        %v2637 = vld [vmem:[%s2246 + $0x28] sm:$0xf]
        %v2638 = vld [vmem:[%s2246 + $0x2c] sm:$0x1]
        %v2651 = vrot.slane %v2627, 5
        %v2652 = vrot.slane %v2651, 4
        %v2653 = vrot.slane %v2628, 5
        %v2654 = vsel %vm1584, %v2652, %v2653
        %v2655 = vrot.slane %v2653, 4
        %v2656 = vrot.slane %v2629, 5
        %v2657 = vsel %vm1584, %v2655, %v2656
        %v2658 = vrot.slane %v2630, 5
        %v2659 = vrot.slane %v2658, 4
        %v2660 = vrot.slane %v2631, 5
        %v2661 = vsel %vm1584, %v2659, %v2660
        %v2662 = vrot.slane %v2660, 4
        %v2663 = vrot.slane %v2632, 5
        %v2664 = vsel %vm1584, %v2662, %v2663
        %v2665 = vrot.slane %v2633, 5
        %v2666 = vrot.slane %v2665, 4
        %v2667 = vrot.slane %v2634, 5
        %v2668 = vsel %vm1584, %v2666, %v2667
        %v2669 = vrot.slane %v2667, 4
        %v2670 = vrot.slane %v2635, 5
        %v2671 = vsel %vm1584, %v2669, %v2670
        %v2672 = vrot.slane %v2636, 5
        %v2673 = vrot.slane %v2672, 4
        %v2674 = vrot.slane %v2637, 5
        %v2675 = vsel %vm1584, %v2673, %v2674
        %v2676 = vrot.slane %v2674, 4
        %v2677 = vrot.slane %v2638, 5
        %v2678 = vsel %vm1584, %v2676, %v2677
        %v2679 = vunpack.c.l.b16 %v2654
        %v2680 = vunpack.c.l.b16 %v2657
        %v2681 = vunpack.c.l.b16 %v2661
        %v2682 = vunpack.c.l.b16 %v2664
        %v2683 = vunpack.c.l.b16 %v2668
        %v2684 = vunpack.c.l.b16 %v2671
        %v2685 = vunpack.c.l.b16 %v2675
        %v2686 = vunpack.c.l.b16 %v2678
        %v2687 = vpack.c.b16 %v2680, %v2679
        %v2688 = vpack.c.b16 %v2682, %v2681
        %v2689 = vpack.c.b16 %v2684, %v2683
        %v2690 = vpack.c.b16 %v2686, %v2685
        %2695 = vst.msk [vmem:[#allocation4 + $0xc0] sm:$0xff] %vm1241, %v2687
        %2696 = vst.msk [vmem:[#allocation4 + $0xe8] sm:$0xff] %vm1241, %v2688
        %2697 = vst.msk [vmem:[#allocation4 + $0x110] sm:$0xff] %vm1241, %v2689
        %2698 = vst.msk [vmem:[#allocation4 + $0x138] sm:$0xff] %vm1241, %v2690
        %v2699 = vld [vmem:[#allocation4] sm:$0xff]
        %v2700 = vld [vmem:[#allocation4 + $0x8] sm:$0xff]
        %v2701 = vld [vmem:[#allocation4 + $0x10] sm:$0xff]
        %v2702 = vld [vmem:[#allocation4 + $0x18] sm:$0xff]
        %v2703 = vld [vmem:[#allocation4 + $0x20] sm:$0xff]
        %v2704 = vld [vmem:[#allocation4 + $0x28] sm:$0xff]
        %v2705 = vld [vmem:[#allocation4 + $0x30] sm:$0xff]
        %v2706 = vld [vmem:[#allocation4 + $0x38] sm:$0xff]
        %v2707 = vld [vmem:[#allocation4 + $0x40] sm:$0xff]
        %v2708 = vld [vmem:[#allocation4 + $0x48] sm:$0xff]
        %v2709 = vld [vmem:[#allocation4 + $0x50] sm:$0xff]
        %v2710 = vld [vmem:[#allocation4 + $0x58] sm:$0xff]
        %v2711 = vld [vmem:[#allocation4 + $0x60] sm:$0xff]
        %v2712 = vld [vmem:[#allocation4 + $0x68] sm:$0xff]
        %v2713 = vld [vmem:[#allocation4 + $0x70] sm:$0xff]
        %v2714 = vld [vmem:[#allocation4 + $0x78] sm:$0xff]
        %v2715 = vld [vmem:[#allocation4 + $0x80] sm:$0xff]
        %v2716 = vld [vmem:[#allocation4 + $0x88] sm:$0xff]
        %v2717 = vld [vmem:[#allocation4 + $0x90] sm:$0xff]
        %v2718 = vld [vmem:[#allocation4 + $0x98] sm:$0xff]
        %v2719 = vld [vmem:[#allocation4 + $0xa0] sm:$0xff]
        %v2720 = vld [vmem:[#allocation4 + $0xa8] sm:$0xff]
        %v2721 = vld [vmem:[#allocation4 + $0xb0] sm:$0xff]
        %v2722 = vld [vmem:[#allocation4 + $0xb8] sm:$0xff]
        %v2723 = vld [vmem:[#allocation4 + $0xc0] sm:$0xff]
        %v2724 = vld [vmem:[#allocation4 + $0xc8] sm:$0xff]
        %v2725 = vld [vmem:[#allocation4 + $0xd0] sm:$0xff]
        %v2726 = vld [vmem:[#allocation4 + $0xd8] sm:$0xff]
        %v2727 = vld [vmem:[#allocation4 + $0xe0] sm:$0xff]
        %v2728 = vld [vmem:[#allocation4 + $0xe8] sm:$0xff]
        %v2729 = vld [vmem:[#allocation4 + $0xf0] sm:$0xff]
        %v2730 = vld [vmem:[#allocation4 + $0xf8] sm:$0xff]
        %v2731 = vld [vmem:[#allocation4 + $0x100] sm:$0xff]
        %v2732 = vld [vmem:[#allocation4 + $0x108] sm:$0xff]
        %v2733 = vld [vmem:[#allocation4 + $0x110] sm:$0xff]
        %v2734 = vld [vmem:[#allocation4 + $0x118] sm:$0xff]
        %v2735 = vld [vmem:[#allocation4 + $0x120] sm:$0xff]
        %v2736 = vld [vmem:[#allocation4 + $0x128] sm:$0xff]
        %v2737 = vld [vmem:[#allocation4 + $0x130] sm:$0xff]
        %v2738 = vld [vmem:[#allocation4 + $0x138] sm:$0xff]
        %v2739 = vld [vmem:[#allocation16] sm:$0xf]
        %v2740 = vld [vmem:[#allocation16 + $0x4] sm:$0xf]
        %v2741 = vld [vmem:[#allocation16 + $0x8] sm:$0xf]
        %v2742 = vld [vmem:[#allocation16 + $0xc] sm:$0xf]
        %v2743 = vld [vmem:[#allocation16 + $0x10] sm:$0xf]
        %v2744 = vld [vmem:[#allocation16 + $0x14] sm:$0xf]
        %v2745 = vld [vmem:[#allocation16 + $0x18] sm:$0xf]
        %v2746 = vld [vmem:[#allocation16 + $0x1c] sm:$0xf]
        %v2747 = vld [vmem:[#allocation16 + $0x20] sm:$0xf]
        %v2748 = vld [vmem:[#allocation16 + $0x24] sm:$0xf]
        %v2749 = vld [vmem:[#allocation16 + $0x28] sm:$0xf]
        %v2750 = vld [vmem:[#allocation16 + $0x2c] sm:$0xf]
        %v2751 = vld [vmem:[#allocation16 + $0x30] sm:$0xf]
        %v2752 = vld [vmem:[#allocation16 + $0x34] sm:$0xf]
        %v2753 = vld [vmem:[#allocation16 + $0x38] sm:$0xf]
        %v2754 = vld [vmem:[#allocation16 + $0x3c] sm:$0xf]
        %v2755 = vld [vmem:[#allocation16 + $0x40] sm:$0xf]
        %v2756 = vld [vmem:[#allocation16 + $0x44] sm:$0xf]
        %v2757 = vld [vmem:[#allocation16 + $0x48] sm:$0xf]
        %v2758 = vld [vmem:[#allocation16 + $0x4c] sm:$0xf]
        %v2759 = vld [vmem:[#allocation16 + $0x50] sm:$0xf]
        %v2760 = vld [vmem:[#allocation16 + $0x54] sm:$0xf]
        %v2761 = vld [vmem:[#allocation16 + $0x58] sm:$0xf]
        %v2762 = vld [vmem:[#allocation16 + $0x5c] sm:$0xf]
        %v2763 = vld [vmem:[#allocation16 + $0x60] sm:$0xf]
        %v2764 = vld [vmem:[#allocation16 + $0x64] sm:$0xf]
        %v2765 = vld [vmem:[#allocation16 + $0x68] sm:$0xf]
        %v2766 = vld [vmem:[#allocation16 + $0x6c] sm:$0xf]
        %v2767 = vld [vmem:[#allocation16 + $0x70] sm:$0xf]
        %v2768 = vld [vmem:[#allocation16 + $0x74] sm:$0xf]
        %v2769 = vld [vmem:[#allocation16 + $0x78] sm:$0xf]
        %v2770 = vld [vmem:[#allocation16 + $0x7c] sm:$0xf]
        %v2771 = vld [vmem:[#allocation16 + $0x80] sm:$0xf]
        %v2772 = vld [vmem:[#allocation16 + $0x84] sm:$0xf]
        %v2773 = vld [vmem:[#allocation16 + $0x88] sm:$0xf]
        %v2774 = vld [vmem:[#allocation16 + $0x8c] sm:$0xf]
        %v2775 = vld [vmem:[#allocation16 + $0x90] sm:$0xf]
        %v2776 = vld [vmem:[#allocation16 + $0x94] sm:$0xf]
        %v2777 = vld [vmem:[#allocation16 + $0x98] sm:$0xf]
        %v2778 = vld [vmem:[#allocation16 + $0x9c] sm:$0xf]
        %v2779 = vld [vmem:[#allocation16 + $0xa0] sm:$0xf]
        %v2780 = vld [vmem:[#allocation16 + $0xa4] sm:$0xf]
        %v2781 = vld [vmem:[#allocation16 + $0xa8] sm:$0xf]
        %v2782 = vld [vmem:[#allocation16 + $0xac] sm:$0xf]
        %v2783 = vld [vmem:[#allocation16 + $0xb0] sm:$0xf]
        %v2784 = vld [vmem:[#allocation16 + $0xb4] sm:$0xf]
        %v2785 = vld [vmem:[#allocation16 + $0xb8] sm:$0xf]
        %v2786 = vld [vmem:[#allocation16 + $0xbc] sm:$0xf]
        %v2787 = vld [vmem:[#allocation16 + $0xc0] sm:$0xf]
        %v2788 = vld [vmem:[#allocation16 + $0xc4] sm:$0xf]
        %v2789 = vld [vmem:[#allocation16 + $0xc8] sm:$0xf]
        %v2790 = vld [vmem:[#allocation16 + $0xcc] sm:$0xf]
        %v2791 = vld [vmem:[#allocation16 + $0xd0] sm:$0xf]
        %v2792 = vld [vmem:[#allocation16 + $0xd4] sm:$0xf]
        %v2793 = vld [vmem:[#allocation16 + $0xd8] sm:$0xf]
        %v2794 = vld [vmem:[#allocation16 + $0xdc] sm:$0xf]
        %v2795 = vld [vmem:[#allocation16 + $0xe0] sm:$0xf]
        %v2796 = vld [vmem:[#allocation16 + $0xe4] sm:$0xf]
        %v2797 = vld [vmem:[#allocation16 + $0xe8] sm:$0xf]
        %v2798 = vld [vmem:[#allocation16 + $0xec] sm:$0xf]
        %v2799 = vld [vmem:[#allocation16 + $0xf0] sm:$0xf]
        %v2800 = vld [vmem:[#allocation16 + $0xf4] sm:$0xf]
        %v2801 = vld [vmem:[#allocation16 + $0xf8] sm:$0xf]
        %v2802 = vld [vmem:[#allocation16 + $0xfc] sm:$0xf]
        %v2803 = vld [vmem:[#allocation16 + $0x100] sm:$0xf]
        %v2804 = vld [vmem:[#allocation16 + $0x104] sm:$0xf]
        %v2805 = vld [vmem:[#allocation16 + $0x108] sm:$0xf]
        %v2806 = vld [vmem:[#allocation16 + $0x10c] sm:$0xf]
        %v2807 = vld [vmem:[#allocation16 + $0x110] sm:$0xf]
        %v2808 = vld [vmem:[#allocation16 + $0x114] sm:$0xf]
        %v2809 = vld [vmem:[#allocation16 + $0x118] sm:$0xf]
        %v2810 = vld [vmem:[#allocation16 + $0x11c] sm:$0xf]
        %v2811 = vld [vmem:[#allocation17] sm:$0x1]
        %v2813 = vlaneseq
        %v2814 = vshrl.u32 %v2813, 7
        %v2815 = vsub.s32 0, %v2814
        %v2816 = vrot.slane %v2811, %v2815
        %v2890 = vunpack.c.l.b16 %v2739
        %v2891 = vunpack.c.l.b16 %v2740
        %v2892 = vunpack.c.l.b16 %v2741
        %v2893 = vunpack.c.l.b16 %v2742
        %v2894 = vunpack.c.l.b16 %v2743
        %v2895 = vunpack.c.l.b16 %v2744
        %v2896 = vunpack.c.l.b16 %v2745
        %v2897 = vunpack.c.l.b16 %v2746
        %v2898 = vunpack.c.l.b16 %v2747
        %v2899 = vunpack.c.l.b16 %v2748
        %v2900 = vunpack.c.l.b16 %v2749
        %v2901 = vunpack.c.l.b16 %v2750
        %v2902 = vunpack.c.l.b16 %v2751
        %v2903 = vunpack.c.l.b16 %v2752
        %v2904 = vunpack.c.l.b16 %v2753
        %v2905 = vunpack.c.l.b16 %v2754
        %v2906 = vunpack.c.l.b16 %v2755
        %v2907 = vunpack.c.l.b16 %v2756
        %v2908 = vunpack.c.l.b16 %v2757
        %v2909 = vunpack.c.l.b16 %v2758
        %v2910 = vunpack.c.l.b16 %v2759
        %v2911 = vunpack.c.l.b16 %v2760
        %v2912 = vunpack.c.l.b16 %v2761
        %v2913 = vunpack.c.l.b16 %v2762
        %v2914 = vunpack.c.l.b16 %v2763
        %v2915 = vunpack.c.l.b16 %v2764
        %v2916 = vunpack.c.l.b16 %v2765
        %v2917 = vunpack.c.l.b16 %v2766
        %v2918 = vunpack.c.l.b16 %v2767
        %v2919 = vunpack.c.l.b16 %v2768
        %v2920 = vunpack.c.l.b16 %v2769
        %v2921 = vunpack.c.l.b16 %v2770
        %v2922 = vunpack.c.l.b16 %v2771
        %v2923 = vunpack.c.l.b16 %v2772
        %v2924 = vunpack.c.l.b16 %v2773
        %v2925 = vunpack.c.l.b16 %v2774
        %v2926 = vunpack.c.l.b16 %v2775
        %v2927 = vunpack.c.l.b16 %v2776
        %v2928 = vunpack.c.l.b16 %v2777
        %v2929 = vunpack.c.l.b16 %v2778
        %v2930 = vunpack.c.l.b16 %v2779
        %v2931 = vunpack.c.l.b16 %v2780
        %v2932 = vunpack.c.l.b16 %v2781
        %v2933 = vunpack.c.l.b16 %v2782
        %v2934 = vunpack.c.l.b16 %v2783
        %v2935 = vunpack.c.l.b16 %v2784
        %v2936 = vunpack.c.l.b16 %v2785
        %v2937 = vunpack.c.l.b16 %v2786
        %v2938 = vunpack.c.l.b16 %v2787
        %v2939 = vunpack.c.l.b16 %v2788
        %v2940 = vunpack.c.l.b16 %v2789
        %v2941 = vunpack.c.l.b16 %v2790
        %v2942 = vunpack.c.l.b16 %v2791
        %v2943 = vunpack.c.l.b16 %v2792
        %v2944 = vunpack.c.l.b16 %v2793
        %v2945 = vunpack.c.l.b16 %v2794
        %v2946 = vunpack.c.l.b16 %v2795
        %v2947 = vunpack.c.l.b16 %v2796
        %v2948 = vunpack.c.l.b16 %v2797
        %v2949 = vunpack.c.l.b16 %v2798
        %v2950 = vunpack.c.l.b16 %v2799
        %v2951 = vunpack.c.l.b16 %v2800
        %v2952 = vunpack.c.l.b16 %v2801
        %v2953 = vunpack.c.l.b16 %v2802
        %v2954 = vunpack.c.l.b16 %v2803
        %v2955 = vunpack.c.l.b16 %v2804
        %v2956 = vunpack.c.l.b16 %v2805
        %v2957 = vunpack.c.l.b16 %v2806
        %v2958 = vunpack.c.l.b16 %v2807
        %v2959 = vunpack.c.l.b16 %v2808
        %v2960 = vunpack.c.l.b16 %v2809
        %v2961 = vunpack.c.l.b16 %v2810
        %v2962 = vpack.c.b16 %v2891, %v2890
        %v2963 = vpack.c.b16 %v2893, %v2892
        %v2964 = vpack.c.b16 %v2895, %v2894
        %v2965 = vpack.c.b16 %v2897, %v2896
        %v2966 = vpack.c.b16 %v2899, %v2898
        %v2967 = vpack.c.b16 %v2901, %v2900
        %v2968 = vpack.c.b16 %v2903, %v2902
        %v2969 = vpack.c.b16 %v2905, %v2904
        %v2970 = vpack.c.b16 %v2907, %v2906
        %v2971 = vpack.c.b16 %v2909, %v2908
        %v2972 = vpack.c.b16 %v2911, %v2910
        %v2973 = vpack.c.b16 %v2913, %v2912
        %v2974 = vpack.c.b16 %v2915, %v2914
        %v2975 = vpack.c.b16 %v2917, %v2916
        %v2976 = vpack.c.b16 %v2919, %v2918
        %v2977 = vpack.c.b16 %v2921, %v2920
        %v2978 = vpack.c.b16 %v2923, %v2922
        %v2979 = vpack.c.b16 %v2925, %v2924
        %v2980 = vpack.c.b16 %v2927, %v2926
        %v2981 = vpack.c.b16 %v2929, %v2928
        %v2982 = vpack.c.b16 %v2931, %v2930
        %v2983 = vpack.c.b16 %v2933, %v2932
        %v2984 = vpack.c.b16 %v2935, %v2934
        %v2985 = vpack.c.b16 %v2937, %v2936
        %v2986 = vpack.c.b16 %v2939, %v2938
        %v2987 = vpack.c.b16 %v2941, %v2940
        %v2988 = vpack.c.b16 %v2943, %v2942
        %v2989 = vpack.c.b16 %v2945, %v2944
        %v2990 = vpack.c.b16 %v2947, %v2946
        %v2991 = vpack.c.b16 %v2949, %v2948
        %v2992 = vpack.c.b16 %v2951, %v2950
        %v2993 = vpack.c.b16 %v2953, %v2952
        %v2994 = vpack.c.b16 %v2955, %v2954
        %v2995 = vpack.c.b16 %v2957, %v2956
        %v2996 = vpack.c.b16 %v2959, %v2958
        %v2997 = vpack.c.b16 %v2961, %v2960
        %v3035 = vsel %vm1241, %v2703, 0
        %v3038 = vsel %vm1241, %v2708, 0
        %v3041 = vsel %vm1241, %v2713, 0
        %v3044 = vsel %vm1241, %v2718, 0
        %v3047 = vsel %vm1241, %v2723, 0
        %v3050 = vsel %vm1241, %v2728, 0
        %v3053 = vsel %vm1241, %v2733, 0
        %v3056 = vsel %vm1241, %v2738, 0
        %3058 = vmatprep.subr.bf16.mxu0 0
        %3059 = vmatpush1.bf16.msra.mxu0 %v2962
        %3060 = vmatprep.subr.bf16.mxu0 0
        %3061 = vmatpush1.bf16.msra.mxu0 %v2963
        %3062 = vmatprep.subr.bf16.mxu0 0
        %3063 = vmatpush1.bf16.msra.mxu0 %v2964
        %3064 = vmatprep.subr.bf16.mxu0 0
        %3065 = vmatpush1.bf16.msra.mxu0 %v2965
        %3066 = vmatprep.subr.bf16.mxu0 0
        %3067 = vmatpush1.bf16.msra.mxu0 %v2966
        %3068 = vmatprep.subr.bf16.mxu0 0
        %3069 = vmatpush1.bf16.msra.mxu0 %v2967
        %3070 = vmatprep.subr.bf16.mxu0 0
        %3071 = vmatpush1.bf16.msra.mxu0 %v2968
        %3072 = vmatprep.subr.bf16.mxu0 0
        %3073 = vmatpush1.bf16.msra.mxu0 %v2969
        %3074 = vmatprep.subr.bf16.mxu0 0
        %3075 = vmatpush1.bf16.msra.mxu0 %v2970
        %3076 = vmatprep.subr.bf16.mxu0 0
        %3077 = vmatpush1.bf16.msra.mxu0 %v2971
        %3078 = vmatprep.subr.bf16.mxu0 0
        %3079 = vmatpush1.bf16.msra.mxu0 %v2972
        %3080 = vmatprep.subr.bf16.mxu0 0
        %3081 = vmatpush1.bf16.msra.mxu0 %v2973
        %3082 = vmatprep.subr.bf16.mxu0 0
        %3083 = vmatpush1.bf16.msra.mxu0 %v2974
        %3084 = vmatprep.subr.bf16.mxu0 0
        %3085 = vmatpush1.bf16.msra.mxu0 %v2975
        %3086 = vmatprep.subr.bf16.mxu0 0
        %3087 = vmatpush1.bf16.msra.mxu0 %v2976
        %3088 = vmatprep.subr.bf16.mxu0 0
        %3089 = vmatpush1.bf16.msra.mxu0 %v2977
        %3090 = vmatprep.mubr.bf16.mxu0 %v2700
        %3091 = vmatmul.mubr.bf16.gmra.mrb[0].mxu0 %v2699
        %v3092 = vpop.f32.mrb[0].mxu0
        %v3093 = vadd.f32 %v2816, %v3092
        %v3094 = vpop.f32.mrb[0].mxu0
        %v3095 = vpop.f32.mrb[0].mxu0
        %v3096 = vadd.f32 %v2816, %v3095
        %v3097 = vpop.f32.mrb[0].mxu0
        %3098 = vmatprep.mubr.bf16.mxu0 %v2705
        %3099 = vmatmul.mubr.bf16.gmra.mrb[0].mxu0 %v2704
        %v3100 = vpop.f32.mrb[0].mxu0
        %v3101 = vadd.f32 %v2816, %v3100
        %v3102 = vpop.f32.mrb[0].mxu0
        %v3103 = vpop.f32.mrb[0].mxu0
        %v3104 = vadd.f32 %v2816, %v3103
        %v3105 = vpop.f32.mrb[0].mxu0
        %3106 = vmatprep.mubr.bf16.mxu0 %v2710
        %3107 = vmatmul.mubr.bf16.gmra.mrb[0].mxu0 %v2709
        %v3108 = vpop.f32.mrb[0].mxu0
        %v3109 = vadd.f32 %v2816, %v3108
        %v3110 = vpop.f32.mrb[0].mxu0
        %v3111 = vpop.f32.mrb[0].mxu0
        %v3112 = vadd.f32 %v2816, %v3111
        %v3113 = vpop.f32.mrb[0].mxu0
        %3114 = vmatprep.mubr.bf16.mxu0 %v2715
        %3115 = vmatmul.mubr.bf16.gmra.mrb[0].mxu0 %v2714
        %v3116 = vpop.f32.mrb[0].mxu0
        %v3117 = vadd.f32 %v2816, %v3116
        %v3118 = vpop.f32.mrb[0].mxu0
        %v3119 = vpop.f32.mrb[0].mxu0
        %v3120 = vadd.f32 %v2816, %v3119
        %v3121 = vpop.f32.mrb[0].mxu0
        %3122 = vmatprep.mubr.bf16.mxu0 %v2720
        %3123 = vmatmul.mubr.bf16.gmra.mrb[0].mxu0 %v2719
        %v3124 = vpop.f32.mrb[0].mxu0
        %v3125 = vadd.f32 %v2816, %v3124
        %v3126 = vpop.f32.mrb[0].mxu0
        %v3127 = vpop.f32.mrb[0].mxu0
        %v3128 = vadd.f32 %v2816, %v3127
        %v3129 = vpop.f32.mrb[0].mxu0
        %3130 = vmatprep.mubr.bf16.mxu0 %v2725
        %3131 = vmatmul.mubr.bf16.gmra.mrb[0].mxu0 %v2724
        %v3132 = vpop.f32.mrb[0].mxu0
        %v3133 = vadd.f32 %v2816, %v3132
        %v3134 = vpop.f32.mrb[0].mxu0
        %v3135 = vpop.f32.mrb[0].mxu0
        %v3136 = vadd.f32 %v2816, %v3135
        %v3137 = vpop.f32.mrb[0].mxu0
        %3138 = vmatprep.mubr.bf16.mxu0 %v2730
        %3139 = vmatmul.mubr.bf16.gmra.mrb[0].mxu0 %v2729
        %v3140 = vpop.f32.mrb[0].mxu0
        %v3141 = vadd.f32 %v2816, %v3140
        %v3142 = vpop.f32.mrb[0].mxu0
        %v3143 = vpop.f32.mrb[0].mxu0
        %v3144 = vadd.f32 %v2816, %v3143
        %v3145 = vpop.f32.mrb[0].mxu0
        %3146 = vmatprep.mubr.bf16.mxu0 %v2735
        %3147 = vmatmul.mubr.bf16.gmra.mrb[0].mxu0 %v2734
        %v3148 = vpop.f32.mrb[0].mxu0
        %v3149 = vadd.f32 %v2816, %v3148
        %v3150 = vpop.f32.mrb[0].mxu0
        %v3151 = vpop.f32.mrb[0].mxu0
        %v3152 = vadd.f32 %v2816, %v3151
        %v3153 = vpop.f32.mrb[0].mxu0
        %3154 = vdwg.mxu0
        %3155 = vmatprep.subr.bf16.mxu0 0
        %3156 = vmatpush1.bf16.msra.mxu0 %v2978
        %3157 = vmatprep.subr.bf16.mxu0 0
        %3158 = vmatpush1.bf16.msra.mxu0 %v2979
        %3159 = vmatprep.subr.bf16.mxu0 0
        %3160 = vmatpush1.bf16.msra.mxu0 %v2980
        %3161 = vmatprep.subr.bf16.mxu0 0
        %3162 = vmatpush1.bf16.msra.mxu0 %v2981
        %3163 = vmatprep.subr.bf16.mxu0 0
        %3164 = vmatpush1.bf16.msra.mxu0 %v2982
        %3165 = vmatprep.subr.bf16.mxu0 0
        %3166 = vmatpush1.bf16.msra.mxu0 %v2983
        %3167 = vmatprep.subr.bf16.mxu0 0
        %3168 = vmatpush1.bf16.msra.mxu0 %v2984
        %3169 = vmatprep.subr.bf16.mxu0 0
        %3170 = vmatpush1.bf16.msra.mxu0 %v2985
        %3171 = vmatprep.subr.bf16.mxu0 0
        %3172 = vmatpush1.bf16.msra.mxu0 %v2986
        %3173 = vmatprep.subr.bf16.mxu0 0
        %3174 = vmatpush1.bf16.msra.mxu0 %v2987
        %3175 = vmatprep.subr.bf16.mxu0 0
        %3176 = vmatpush1.bf16.msra.mxu0 %v2988
        %3177 = vmatprep.subr.bf16.mxu0 0
        %3178 = vmatpush1.bf16.msra.mxu0 %v2989
        %3179 = vmatprep.subr.bf16.mxu0 0
        %3180 = vmatpush1.bf16.msra.mxu0 %v2990
        %3181 = vmatprep.subr.bf16.mxu0 0
        %3182 = vmatpush1.bf16.msra.mxu0 %v2991
        %3183 = vmatprep.subr.bf16.mxu0 0
        %3184 = vmatpush1.bf16.msra.mxu0 %v2992
        %3185 = vmatprep.subr.bf16.mxu0 0
        %3186 = vmatpush1.bf16.msra.mxu0 %v2993
        %3187 = vmatprep.mubr.bf16.mxu0 %v2702
        %3188 = vmatmul.mubr.bf16.gmra.mrb[0].mxu0 %v2701
        %v3189 = vpop.f32.mrb[0].mxu0
        %v3190 = vadd.f32 %v3093, %v3189
        %v3191 = vpop.f32.mrb[0].mxu0
        %v3192 = vpop.f32.mrb[0].mxu0
        %v3193 = vadd.f32 %v3096, %v3192
        %v3194 = vpop.f32.mrb[0].mxu0
        %3195 = vmatprep.mubr.bf16.mxu0 %v2707
        %3196 = vmatmul.mubr.bf16.gmra.mrb[0].mxu0 %v2706
        %v3197 = vpop.f32.mrb[0].mxu0
        %v3198 = vadd.f32 %v3101, %v3197
        %v3199 = vpop.f32.mrb[0].mxu0
        %v3200 = vpop.f32.mrb[0].mxu0
        %v3201 = vadd.f32 %v3104, %v3200
        %v3202 = vpop.f32.mrb[0].mxu0
        %3203 = vmatprep.mubr.bf16.mxu0 %v2712
        %3204 = vmatmul.mubr.bf16.gmra.mrb[0].mxu0 %v2711
        %v3205 = vpop.f32.mrb[0].mxu0
        %v3206 = vadd.f32 %v3109, %v3205
        %v3207 = vpop.f32.mrb[0].mxu0
        %v3208 = vpop.f32.mrb[0].mxu0
        %v3209 = vadd.f32 %v3112, %v3208
        %v3210 = vpop.f32.mrb[0].mxu0
        %3211 = vmatprep.mubr.bf16.mxu0 %v2717
        %3212 = vmatmul.mubr.bf16.gmra.mrb[0].mxu0 %v2716
        %v3213 = vpop.f32.mrb[0].mxu0
        %v3214 = vadd.f32 %v3117, %v3213
        %v3215 = vpop.f32.mrb[0].mxu0
        %v3216 = vpop.f32.mrb[0].mxu0
        %v3217 = vadd.f32 %v3120, %v3216
        %v3218 = vpop.f32.mrb[0].mxu0
        %3219 = vmatprep.mubr.bf16.mxu0 %v2722
        %3220 = vmatmul.mubr.bf16.gmra.mrb[0].mxu0 %v2721
        %v3221 = vpop.f32.mrb[0].mxu0
        %v3222 = vadd.f32 %v3125, %v3221
        %v3223 = vpop.f32.mrb[0].mxu0
        %v3224 = vpop.f32.mrb[0].mxu0
        %v3225 = vadd.f32 %v3128, %v3224
        %v3226 = vpop.f32.mrb[0].mxu0
        %3227 = vmatprep.mubr.bf16.mxu0 %v2727
        %3228 = vmatmul.mubr.bf16.gmra.mrb[0].mxu0 %v2726
        %v3229 = vpop.f32.mrb[0].mxu0
        %v3230 = vadd.f32 %v3133, %v3229
        %v3231 = vpop.f32.mrb[0].mxu0
        %v3232 = vpop.f32.mrb[0].mxu0
        %v3233 = vadd.f32 %v3136, %v3232
        %v3234 = vpop.f32.mrb[0].mxu0
        %3235 = vmatprep.mubr.bf16.mxu0 %v2732
        %3236 = vmatmul.mubr.bf16.gmra.mrb[0].mxu0 %v2731
        %v3237 = vpop.f32.mrb[0].mxu0
        %v3238 = vadd.f32 %v3141, %v3237
        %v3239 = vpop.f32.mrb[0].mxu0
        %v3240 = vpop.f32.mrb[0].mxu0
        %v3241 = vadd.f32 %v3144, %v3240
        %v3242 = vpop.f32.mrb[0].mxu0
        %3243 = vmatprep.mubr.bf16.mxu0 %v2737
        %3244 = vmatmul.mubr.bf16.gmra.mrb[0].mxu0 %v2736
        %v3245 = vpop.f32.mrb[0].mxu0
        %v3246 = vadd.f32 %v3149, %v3245
        %v3247 = vpop.f32.mrb[0].mxu0
        %v3248 = vpop.f32.mrb[0].mxu0
        %v3249 = vadd.f32 %v3152, %v3248
        %v3250 = vpop.f32.mrb[0].mxu0
        %3251 = vdwg.mxu0
        %3252 = vmatprep.subr.bf16.mxu0 0
        %3253 = vmatpush1.bf16.msra.mxu0 %v2994
        %3254 = vmatprep.subr.bf16.mxu0 0
        %3255 = vmatpush1.bf16.msra.mxu0 %v2995
        %3256 = vmatprep.subr.bf16.mxu0 0
        %3257 = vmatpush1.bf16.msra.mxu0 %v2996
        %3258 = vmatprep.subr.bf16.mxu0 0
        %3259 = vmatpush1.bf16.msra.mxu0 %v2997
        %3260 = vmatprep.subr.bf16.mxu0 0
        %3261 = vmatpush1.bf16.msra.mxu0 0
        %3262 = vmatprep.subr.bf16.mxu0 0
        %3263 = vmatpush1.bf16.msra.mxu0 0
        %3264 = vmatprep.subr.bf16.mxu0 0
        %3265 = vmatpush1.bf16.msra.mxu0 0
        %3266 = vmatprep.subr.bf16.mxu0 0
        %3267 = vmatpush1.bf16.msra.mxu0 0
        %3268 = vmatprep.subr.bf16.mxu0 0
        %3269 = vmatpush1.bf16.msra.mxu0 0
        %3270 = vmatprep.subr.bf16.mxu0 0
        %3271 = vmatpush1.bf16.msra.mxu0 0
        %3272 = vmatprep.subr.bf16.mxu0 0
        %3273 = vmatpush1.bf16.msra.mxu0 0
        %3274 = vmatprep.subr.bf16.mxu0 0
        %3275 = vmatpush1.bf16.msra.mxu0 0
        %3276 = vmatprep.subr.bf16.mxu0 0
        %3277 = vmatpush1.bf16.msra.mxu0 0
        %3278 = vmatprep.subr.bf16.mxu0 0
        %3279 = vmatpush1.bf16.msra.mxu0 0
        %3280 = vmatprep.subr.bf16.mxu0 0
        %3281 = vmatpush1.bf16.msra.mxu0 0
        %3282 = vmatprep.subr.bf16.mxu0 0
        %3283 = vmatpush1.bf16.msra.mxu0 0
        %3284 = vmatprep.mubr.bf16.mxu0 0
        %3285 = vmatmul.mubr.bf16.gmra.mrb[0].mxu0 %v3035
        %v3286 = vpop.f32.mrb[0].mxu0
        %v3287 = vadd.f32 %v3190, %v3286
        %v3288 = vpop.f32.mrb[0].mxu0
        %v3289 = vpop.f32.mrb[0].mxu0
        %v3290 = vadd.f32 %v3193, %v3289
        %v3291 = vpop.f32.mrb[0].mxu0
        %3292 = vmatprep.mubr.bf16.mxu0 0
        %3293 = vmatmul.mubr.bf16.gmra.mrb[0].mxu0 %v3038
        %v3294 = vpop.f32.mrb[0].mxu0
        %v3295 = vadd.f32 %v3198, %v3294
        %v3296 = vpop.f32.mrb[0].mxu0
        %v3297 = vpop.f32.mrb[0].mxu0
        %v3298 = vadd.f32 %v3201, %v3297
        %v3299 = vpop.f32.mrb[0].mxu0
        %3300 = vmatprep.mubr.bf16.mxu0 0
        %3301 = vmatmul.mubr.bf16.gmra.mrb[0].mxu0 %v3041
        %v3302 = vpop.f32.mrb[0].mxu0
        %v3303 = vadd.f32 %v3206, %v3302
        %v3304 = vpop.f32.mrb[0].mxu0
        %v3305 = vpop.f32.mrb[0].mxu0
        %v3306 = vadd.f32 %v3209, %v3305
        %v3307 = vpop.f32.mrb[0].mxu0
        %3308 = vmatprep.mubr.bf16.mxu0 0
        %3309 = vmatmul.mubr.bf16.gmra.mrb[0].mxu0 %v3044
        %v3310 = vpop.f32.mrb[0].mxu0
        %v3311 = vadd.f32 %v3214, %v3310
        %v3312 = vpop.f32.mrb[0].mxu0
        %v3313 = vpop.f32.mrb[0].mxu0
        %v3314 = vadd.f32 %v3217, %v3313
        %v3315 = vpop.f32.mrb[0].mxu0
        %3316 = vmatprep.mubr.bf16.mxu0 0
        %3317 = vmatmul.mubr.bf16.gmra.mrb[0].mxu0 %v3047
        %v3318 = vpop.f32.mrb[0].mxu0
        %v3319 = vadd.f32 %v3222, %v3318
        %v3320 = vpop.f32.mrb[0].mxu0
        %v3321 = vpop.f32.mrb[0].mxu0
        %v3322 = vadd.f32 %v3225, %v3321
        %v3323 = vpop.f32.mrb[0].mxu0
        %3324 = vmatprep.mubr.bf16.mxu0 0
        %3325 = vmatmul.mubr.bf16.gmra.mrb[0].mxu0 %v3050
        %v3326 = vpop.f32.mrb[0].mxu0
        %v3327 = vadd.f32 %v3230, %v3326
        %v3328 = vpop.f32.mrb[0].mxu0
        %v3329 = vpop.f32.mrb[0].mxu0
        %v3330 = vadd.f32 %v3233, %v3329
        %v3331 = vpop.f32.mrb[0].mxu0
        %3332 = vmatprep.mubr.bf16.mxu0 0
        %3333 = vmatmul.mubr.bf16.gmra.mrb[0].mxu0 %v3053
        %v3334 = vpop.f32.mrb[0].mxu0
        %v3335 = vadd.f32 %v3238, %v3334
        %v3336 = vpop.f32.mrb[0].mxu0
        %v3337 = vpop.f32.mrb[0].mxu0
        %v3338 = vadd.f32 %v3241, %v3337
        %v3339 = vpop.f32.mrb[0].mxu0
        %3340 = vmatprep.mubr.bf16.mxu0 0
        %3341 = vmatmul.mubr.bf16.gmra.mrb[0].mxu0 %v3056
        %v3342 = vpop.f32.mrb[0].mxu0
        %v3343 = vadd.f32 %v3246, %v3342
        %v3344 = vpop.f32.mrb[0].mxu0
        %v3345 = vpop.f32.mrb[0].mxu0
        %v3346 = vadd.f32 %v3249, %v3345
        %v3347 = vpop.f32.mrb[0].mxu0
        %3348 = vdwg.mxu0
        %v3349 = vsub.f32 %v3287, %v3319
        %v3350 = vsub.f32 %v3290, %v3322
        %v3351 = vsub.f32 %v3295, %v3327
        %v3352 = vsub.f32 %v3298, %v3330
        %v3353 = vsub.f32 %v3303, %v3335
        %v3354 = vsub.f32 %v3306, %v3338
        %v3355 = vsub.f32 %v3311, %v3343
        %v3356 = vsub.f32 %v3314, %v3346
        %v3357 = vand.u32 2147483647, %v3349
        %v3358 = vand.u32 2147483647, %v3350
        %v3359 = vand.u32 2147483647, %v3351
        %v3360 = vand.u32 2147483647, %v3352
        %v3361 = vand.u32 2147483647, %v3353
        %v3362 = vand.u32 2147483647, %v3354
        %v3363 = vand.u32 2147483647, %v3355
        %v3364 = vand.u32 2147483647, %v3356
        %v3365 = vsel %vm1241, %v3357, 0.0
        %v3366 = vsel %vm1241, %v3358, 0.0
        %v3367 = vadd.f32 %v3365, %v3366
        %v3368 = vsel %vm1241, %v3359, 0.0
        %v3369 = vadd.f32 %v3367, %v3368
        %v3370 = vsel %vm1241, %v3360, 0.0
        %v3371 = vadd.f32 %v3369, %v3370
        %v3372 = vsel %vm1241, %v3361, 0.0
        %v3373 = vadd.f32 %v3371, %v3372
        %v3374 = vsel %vm1241, %v3362, 0.0
        %v3375 = vadd.f32 %v3373, %v3374
        %v3376 = vsel %vm1241, %v3363, 0.0
        %v3377 = vadd.f32 %v3375, %v3376
        %v3378 = vsel %vm1241, %v3364, 0.0
        %v3379 = vadd.f32 %v3377, %v3378
        %3380 = vadd.xlane.f32.xlu0 %v3379
        %v3381 = vpop.xlane.xlu0 %3380
        %v3382 = vrot.slane %v3381, 4
        %v3383 = vadd.f32 %v3381, %v3382
        %v3384 = vrot.slane %v3383, 2
        %v3385 = vadd.f32 %v3383, %v3384
        %v3386 = vrot.slane %v3385, 1
        %v3387 = vadd.f32 %v3385, %v3386
        %s3388 = vtos %v3387
        %v3389 = vstv %s3388
        %3390 = vst [vmem:[%s707] sm:$0x1] %v3389
        %v3391 = vmax.f32 %v3287, 0.0
        %v3392 = vmax.f32 %v3290, 0.0
        %v3393 = vmax.f32 %v3295, 0.0
        %v3394 = vmax.f32 %v3298, 0.0
        %v3395 = vmax.f32 %v3303, 0.0
        %v3396 = vmax.f32 %v3306, 0.0
        %v3397 = vmax.f32 %v3311, 0.0
        %v3398 = vmax.f32 %v3314, 0.0
        %v3399 = vmax.f32 %v3319, 0.0
        %v3400 = vmax.f32 %v3322, 0.0
        %v3401 = vmax.f32 %v3327, 0.0
        %v3402 = vmax.f32 %v3330, 0.0
        %v3403 = vmax.f32 %v3335, 0.0
        %v3404 = vmax.f32 %v3338, 0.0
        %v3405 = vmax.f32 %v3343, 0.0
        %v3406 = vmax.f32 %v3346, 0.0
        %v3407 = vpack.c.bf16 %v3392, %v3391
        %v3408 = vpack.c.bf16 %v3394, %v3393
        %v3409 = vpack.c.bf16 %v3396, %v3395
        %v3410 = vpack.c.bf16 %v3398, %v3397
        %v3415 = vunpack.c.l.b16 %v3407
        %v3416 = vunpack.c.h.b16 %v3407
        %v3417 = vunpack.c.l.b16 %v3408
        %v3418 = vunpack.c.h.b16 %v3408
        %v3419 = vunpack.c.l.b16 %v3409
        %v3420 = vunpack.c.h.b16 %v3409
        %v3421 = vunpack.c.l.b16 %v3410
        %v3422 = vunpack.c.h.b16 %v3410
        %v3423 = vpack.c.b16 %v3415, %v3415
        %v3424 = vpack.c.b16 %v3416, %v3416
        %v3425 = vpack.c.b16 %v3417, %v3417
        %v3426 = vpack.c.b16 %v3418, %v3418
        %v3427 = vpack.c.b16 %v3419, %v3419
        %v3428 = vpack.c.b16 %v3420, %v3420
        %v3429 = vpack.c.b16 %v3421, %v3421
        %v3430 = vpack.c.b16 %v3422, %v3422
        %3439 = vst.msk [vmem:[%s694] sm:$0xf] %vm902, %v3423
        %3440 = vst.msk [vmem:[%s694 + $0x4] sm:$0xf] %vm902, %v3424
        %3441 = vst.msk [vmem:[%s694 + $0x8] sm:$0xf] %vm902, %v3425
        %3442 = vst.msk [vmem:[%s694 + $0xc] sm:$0xf] %vm902, %v3426
        %3443 = vst.msk [vmem:[%s694 + $0x10] sm:$0xf] %vm902, %v3427
        %3444 = vst.msk [vmem:[%s694 + $0x14] sm:$0xf] %vm902, %v3428
        %3445 = vst.msk [vmem:[%s694 + $0x18] sm:$0xf] %vm902, %v3429
        %3446 = vst.msk [vmem:[%s694 + $0x1c] sm:$0xf] %vm902, %v3430
        %v3447 = vpack.c.bf16 %v3400, %v3399
        %v3448 = vpack.c.bf16 %v3402, %v3401
        %v3449 = vpack.c.bf16 %v3404, %v3403
        %v3450 = vpack.c.bf16 %v3406, %v3405
        %v3455 = vunpack.c.l.b16 %v3447
        %v3456 = vunpack.c.h.b16 %v3447
        %v3457 = vunpack.c.l.b16 %v3448
        %v3458 = vunpack.c.h.b16 %v3448
        %v3459 = vunpack.c.l.b16 %v3449
        %v3460 = vunpack.c.h.b16 %v3449
        %v3461 = vunpack.c.l.b16 %v3450
        %v3462 = vunpack.c.h.b16 %v3450
        %v3463 = vpack.c.b16 %v3455, %v3455
        %v3464 = vpack.c.b16 %v3456, %v3456
        %v3465 = vpack.c.b16 %v3457, %v3457
        %v3466 = vpack.c.b16 %v3458, %v3458
        %v3467 = vpack.c.b16 %v3459, %v3459
        %v3468 = vpack.c.b16 %v3460, %v3460
        %v3469 = vpack.c.b16 %v3461, %v3461
        %v3470 = vpack.c.b16 %v3462, %v3462
        %3479 = vst.msk [vmem:[%s701] sm:$0xf] %vm902, %v3463
        %3480 = vst.msk [vmem:[%s701 + $0x4] sm:$0xf] %vm902, %v3464
        %3481 = vst.msk [vmem:[%s701 + $0x8] sm:$0xf] %vm902, %v3465
        %3482 = vst.msk [vmem:[%s701 + $0xc] sm:$0xf] %vm902, %v3466
        %3483 = vst.msk [vmem:[%s701 + $0x10] sm:$0xf] %vm902, %v3467
        %3484 = vst.msk [vmem:[%s701 + $0x14] sm:$0xf] %vm902, %v3468
        %3485 = vst.msk [vmem:[%s701 + $0x18] sm:$0xf] %vm902, %v3469
        %3486 = vst.msk [vmem:[%s701 + $0x1c] sm:$0xf] %vm902, %v3470
        %s3487 = sand.u32 %s305, 1
        %s3488 = scalar_lea.sflag [#allocation7], %s3487
        %s3489 = sand.u32 %s305, 1
        %s3490 = smul.addr %s3489, 32
        %s3491 = scalar_lea.vmem [#allocation19], %s3490
        %s3492 = sand.u32 %s41, 1
        %s3493 = scalar_lea.sflag [#allocation21], %s3492
        %s3494 = sand.u32 %s333, 1
        %s3495 = smul.addr %s3494, 32
        %s3496 = scalar_lea.vmem [#allocation20], %s3495
        %s3497 = sand.u32 %s41, 1
        %s3498 = scalar_lea.sflag [#allocation21], %s3497
        %s3499 = sand.u32 %s361, 1
        %s3500 = scalar_lea.vmem [#allocation22], %s3499
        // Predicated region
        $region101: #{conv3x3_pair.1} parent=51 // pred_check
          %p3501 = pneg %p315
        $region102: #{conv3x3_pair.1} parent=51 // pred_check_branch
          %3503 = sbr.rel (%p3501) target = $region104
        $region103: #{conv3x3_pair.1} parent=51 // pred_region
          %s3504 = smul.u32 4, %s46
          %s3506 = ssub.s32 512, 512
          %3507 = vsyncadd %s3488, %s3506
          %s3508 = smul.addr %s3504, 2
          %s3509 = smul.addr %s45, 32
          %s3510 = sadd.s32 %s3508, %s3509
          %s3511 = smul.addr %s3510, 64
          %s3512 = scalar_lea.hbm %s8, %s3511
          %s3513 = sshll.u32 %s3491, 4
          %s3514 = int_to_ptr.vmem [resolvable:$true] %s3513
          %3519 = dma.vmem_to_hbm [thread:$0]  %s3514, 512, %s3512, %s3488, 64, 64, 4
        $region104: #{conv3x3_pair.1} parent=51 // pred_fallthru
          _
        // Predicated region
        $region105: #{conv3x3_pair.1} parent=51 // pred_check
          %p3520 = pneg %p343
        $region106: #{conv3x3_pair.1} parent=51 // pred_check_branch
          %3522 = sbr.rel (%p3520) target = $region108
        $region107: #{conv3x3_pair.1} parent=51 // pred_region
          %s3523 = smul.u32 4, %s46
          %s3525 = ssub.s32 512, 512
          %3526 = vsyncadd %s3493, %s3525
          %s3527 = smul.addr %s3523, 2
          %s3528 = smul.addr %s45, 32
          %s3529 = sadd.s32 %s3527, %s3528
          %s3530 = smul.addr %s3529, 64
          %s3531 = scalar_lea.hbm %s9, %s3530
          %s3532 = sshll.u32 %s3496, 4
          %s3533 = int_to_ptr.vmem [resolvable:$true] %s3532
          %3538 = dma.vmem_to_hbm [thread:$0]  %s3533, 512, %s3531, %s3493, 64, 64, 4
        $region108: #{conv3x3_pair.1} parent=51 // pred_fallthru
          _
        // Predicated region
        $region109: #{conv3x3_pair.1} parent=51 // pred_check
          %p3539 = pneg %p371
        $region110: #{conv3x3_pair.1} parent=51 // pred_check_branch
          %3541 = sbr.rel (%p3539) target = $region112
        $region111: #{conv3x3_pair.1} parent=51 // pred_region
          %s3543 = ssub.s32 16, 16
          %3544 = vsyncadd %s3498, %s3543
          %s3545 = smul.addr %s45, 4
          %s3546 = sadd.s32 %s46, %s3545
          %s3547 = smul.addr %s3546, 16
          %s3548 = scalar_lea.hbm %s10, %s3547
          %s3550 = sshll.u32 %s3500, 4
          %s3551 = int_to_ptr.vmem [resolvable:$true] %s3550
          %3553 = dma.vmem_to_hbm [thread:$0]  %s3551, 16, %s3548, %s3498
        $region112: #{conv3x3_pair.1} parent=51 // pred_fallthru
          _
      $region52: #{conv3x3_pair.1} parent=5 // pred_fallthru
        _
      %p3554 = scmp.le.s32.totalorder 2, %s36
      // Predicated region
      $region113: #{conv3x3_pair.1} parent=5 // pred_check
        %p3555 = pneg %p3554
      $region114: #{conv3x3_pair.1} parent=5 // pred_check_branch
        %3557 = sbr.rel (%p3555) target = $region116
      $region115: #{conv3x3_pair.1} parent=5 // pred_region
        %s3558 = ssub.s32 %s36, 2
        // Predicated region
        $region117: #{conv3x3_pair.1} parent=115 // pred_check
          %p3559 = pneg %p321
        $region118: #{conv3x3_pair.1} parent=115 // pred_check_branch
          %3561 = sbr.rel (%p3559) target = $region120
        $region119: #{conv3x3_pair.1} parent=115 // pred_region
          %s3562 = sand.u32 %s306, 1
          %s3563 = scalar_lea.sflag [#allocation7], %s3562
          %s3564 = sand.u32 %s306, 1
          %s3565 = smul.addr %s3564, 32
          %s3566 = scalar_lea.vmem [#allocation19], %s3565
          %3567 = dma.done %s3563, 512
        $region120: #{conv3x3_pair.1} parent=115 // pred_fallthru
          _
        // Predicated region
        $region121: #{conv3x3_pair.1} parent=115 // pred_check
          %p3568 = pneg %p349
        $region122: #{conv3x3_pair.1} parent=115 // pred_check_branch
          %3570 = sbr.rel (%p3568) target = $region124
        $region123: #{conv3x3_pair.1} parent=115 // pred_region
          %s3571 = sand.u32 %s42, 1
          %s3572 = scalar_lea.sflag [#allocation21], %s3571
          %s3573 = sand.u32 %s334, 1
          %s3574 = smul.addr %s3573, 32
          %s3575 = scalar_lea.vmem [#allocation20], %s3574
          %3576 = dma.done %s3572, 512
        $region124: #{conv3x3_pair.1} parent=115 // pred_fallthru
          _
        // Predicated region
        $region125: #{conv3x3_pair.1} parent=115 // pred_check
          %p3577 = pneg %p377
        $region126: #{conv3x3_pair.1} parent=115 // pred_check_branch
          %3579 = sbr.rel (%p3577) target = $region128
        $region127: #{conv3x3_pair.1} parent=115 // pred_region
          %s3580 = sand.u32 %s42, 1
          %s3581 = scalar_lea.sflag [#allocation21], %s3580
          %s3582 = sand.u32 %s362, 1
          %s3583 = scalar_lea.vmem [#allocation22], %s3582
          %3584 = dma.done %s3581, 16
        $region128: #{conv3x3_pair.1} parent=115 // pred_fallthru
          _
      $region116: #{conv3x3_pair.1} parent=5 // pred_fallthru
        _
    $region6: #{conv3x3_pair.1} parent=1 // loop_footer
      %s40 = sadd.s32 1, %s36
    $region7: #{conv3x3_pair.1} parent=1 // loop_footer_branch
      %35 = sbr.rel target = $region3
    $region8: #{conv3x3_pair.1} parent=1 // loop_exit
      _
    %3585 = vsyncpa [#allocation6], 1
    %s3586 = scalar_lea.sflag [#allocation6], 1
    %3587 = vsyncpa %s3586, 1
    %3588 = vsyncpa [#allocation9], 1
    %s3589 = scalar_lea.sflag [#allocation9], 1
    %3590 = vsyncpa %s3589, 1
    %3591 = vsyncpa [#allocation12], 1
    %s3592 = scalar_lea.sflag [#allocation12], 1
    %3593 = vsyncpa %s3592, 1
    %3594 = vsyncpa [#allocation15], 1
    %s3595 = scalar_lea.sflag [#allocation15], 1
    %3596 = vsyncpa %s3595, 1
    %3597 = vsyncpa [#allocation18], 1
    %3598 = vsyncpa [#allocation7], 1
    %s3599 = scalar_lea.sflag [#allocation7], 1
    %3600 = vsyncpa %s3599, 1
    %3601 = vsyncpa [#allocation21], 1
    %s3602 = scalar_lea.sflag [#allocation21], 1
    %3603 = vsyncpa %s3602, 1

</llo_original>
